<compile_context>
chip_gen: v7x
topology: tpu7x:2x2x1
jax: 0.10.0
libtpu: 0.0.40
codegen_flags: <defaults>
</compile_context>

<pallas_src>
import functools

import jax
import jax.numpy as jnp
from jax.experimental import pallas as pl
from jax.experimental.pallas import tpu as pltpu


CFG = dict(vocab=100, max_pos=16, hidden=32, n_layers=2, n_heads=4, ffn=64,
           num_categories=5)
CLS_PAD = 128  # lane-dense classifier output width (sliced to num_categories)


# ------------------------------ fused kernel --------------------------------

def _layernorm(x, g, b):
    # x: (R, H) f32, g/b: (1, H) f32
    mean = jnp.mean(x, axis=-1, keepdims=True)
    var = jnp.mean(jnp.square(x - mean), axis=-1, keepdims=True)
    return (x - mean) * jax.lax.rsqrt(var + 1e-12) * g + b


def _newsnet_kernel(
    x_ref,        # (R, H)          f32   word+pos embeddings, R = B*S
    amask_ref,    # (R, R)          f32   additive block-diagonal attn mask
    emb_g_ref,    # (1, H)          f32
    emb_b_ref,    # (1, H)          f32
    wq_ref,       # (L, NH, H, Dh)  bf16  per-head Q weights
    wk_ref,       # (L, NH, H, Dh)  bf16
    wv_ref,       # (L, NH, H, Dh)  bf16
    bq_ref,       # (L, NH, 1, Dh)  f32
    bk_ref,       # (L, NH, 1, Dh)  f32
    bv_ref,       # (L, NH, 1, Dh)  f32
    wo_ref,       # (L, NH, Dh, H)  bf16  per-head output-projection weights
    bo_ref,       # (L, 1, H)       f32
    ln1g_ref,     # (L, 1, H)       f32
    ln1b_ref,     # (L, 1, H)       f32
    w1_ref,       # (L, H, F)       bf16
    b1_ref,       # (L, 1, F)       f32
    w2_ref,       # (L, F, H)       bf16
    b2_ref,       # (L, 1, H)       f32
    ln2g_ref,     # (L, 1, H)       f32
    ln2b_ref,     # (L, 1, H)       f32
    wc_ref,       # (H, CLS_PAD)    bf16  (padded classifier weights)
    bc_ref,       # (1, CLS_PAD)    f32
    hid_ref,      # out: (R, H)        f32   last_hidden_state (flattened rows)
    logits_ref,   # out: (B, CLS_PAD)  f32   padded logits
    *, n_layers, n_heads, batch, seq,
):
    R, H = x_ref.shape
    Dh = H // n_heads
    scale = 1.0 / (Dh ** 0.5)

    amask = amask_ref[...]                           # (R, R) additive mask

    # embedding LayerNorm (f32)
    x = _layernorm(x_ref[...], emb_g_ref[...], emb_b_ref[...])

    # TODO(synk): at real DistilBERT dims (H=768, F=3072, L=6) the Python
    # unroll + whole-model weight residency must become a layer grid axis with
    # streamed weights (index_map lambda l: (l, ...)), residual carried in VMEM
    # scratch, lax.fori_loop over heads, and vmem_limit_bytes set explicitly.
    for l in range(n_layers):
        xb = x.astype(jnp.bfloat16)

        attn = jnp.zeros((R, H), jnp.float32)
        for h in range(n_heads):
            # Per-head projections via pre-split weight slices: results are
            # lane-0-aligned (R, Dh) tiles — no activation lane slicing.
            q = jnp.dot(xb, wq_ref[l, h],
                        preferred_element_type=jnp.float32) + bq_ref[l, h]
            k = jnp.dot(xb, wk_ref[l, h],
                        preferred_element_type=jnp.float32) + bk_ref[l, h]
            v = jnp.dot(xb, wv_ref[l, h],
                        preferred_element_type=jnp.float32) + bv_ref[l, h]

            s = jnp.einsum("qd,kd->qk", q.astype(jnp.bfloat16),
                           k.astype(jnp.bfloat16),
                           preferred_element_type=jnp.float32) * scale + amask
            s = s - jnp.max(s, axis=-1, keepdims=True)
            p = jnp.exp(s)
            # exact division: denominator >= 1 after max subtraction
            p = p / jnp.sum(p, axis=-1, keepdims=True)

            ctx = jnp.dot(p.astype(jnp.bfloat16), v.astype(jnp.bfloat16),
                          preferred_element_type=jnp.float32)        # (R, Dh)
            # merge heads directly into the output projection (no concat)
            attn = attn + jnp.dot(ctx.astype(jnp.bfloat16), wo_ref[l, h],
                                  preferred_element_type=jnp.float32)
        attn = attn + bo_ref[l]
        x = _layernorm(attn + x, ln1g_ref[l], ln1b_ref[l])

        # FFN
        hff = jnp.dot(x.astype(jnp.bfloat16), w1_ref[l],
                      preferred_element_type=jnp.float32) + b1_ref[l]
        # TODO(synk): HF DistilBERT uses exact (erf) GELU; tanh-approx GELU is
        # used here (kept for guaranteed Mosaic lowering) — small deviation.
        hff = jax.nn.gelu(hff, approximate=True)
        ffn = jnp.dot(hff.astype(jnp.bfloat16), w2_ref[l],
                      preferred_element_type=jnp.float32) + b2_ref[l]
        x = _layernorm(ffn + x, ln2g_ref[l], ln2b_ref[l])

    hid_ref[...] = x                                  # last_hidden_state rows

    # classifier on the [CLS] (position 0) row of each sequence:
    # a single B-row matmul with a lane-dense (128-wide) padded output.
    cls = jnp.concatenate(
        [x[b * seq:b * seq + 1, :] for b in range(batch)], axis=0)   # (B, H)
    logits_ref[...] = jnp.dot(cls.astype(jnp.bfloat16), wc_ref[...],
                              preferred_element_type=jnp.float32) + bc_ref[...]


# ------------------------------ parameters ----------------------------------

def init_params(key, cfg):
    H, F, L = cfg["hidden"], cfg["ffn"], cfg["n_layers"]
    NH = cfg["n_heads"]
    Dh = H // NH
    C = cfg["num_categories"]
    std = 0.02
    ks = iter(jax.random.split(key, 16))

    def nrm(shape):
        return jax.random.normal(next(ks), shape, jnp.float32) * std

    def split_heads_out(w):   # (L, H, H_out) -> (L, NH, H, Dh): split out-channels
        return w.reshape(L, H, NH, Dh).transpose(0, 2, 1, 3)

    cls_w = jnp.zeros((H, CLS_PAD), jnp.float32).at[:, :C].set(nrm((H, C)))

    return dict(
        word_emb=nrm((cfg["vocab"], H)),
        pos_emb=nrm((cfg["max_pos"], H)),
        emb_ln_g=jnp.ones((1, H), jnp.float32),
        emb_ln_b=jnp.zeros((1, H), jnp.float32),
        # attention weights pre-split per head (kernel layout), bf16 for MXU
        w_q=split_heads_out(nrm((L, H, H))).astype(jnp.bfloat16),
        w_k=split_heads_out(nrm((L, H, H))).astype(jnp.bfloat16),
        w_v=split_heads_out(nrm((L, H, H))).astype(jnp.bfloat16),
        b_q=jnp.zeros((L, NH, 1, Dh), jnp.float32),
        b_k=jnp.zeros((L, NH, 1, Dh), jnp.float32),
        b_v=jnp.zeros((L, NH, 1, Dh), jnp.float32),
        # output projection split along its INPUT channels (heads)
        w_o=nrm((L, H, H)).reshape(L, NH, Dh, H).astype(jnp.bfloat16),
        b_o=jnp.zeros((L, 1, H), jnp.float32),
        ln1_g=jnp.ones((L, 1, H), jnp.float32),
        ln1_b=jnp.zeros((L, 1, H), jnp.float32),
        w_1=nrm((L, H, F)).astype(jnp.bfloat16),
        b_1=jnp.zeros((L, 1, F), jnp.float32),
        w_2=nrm((L, F, H)).astype(jnp.bfloat16),
        b_2=jnp.zeros((L, 1, H), jnp.float32),
        ln2_g=jnp.ones((L, 1, H), jnp.float32),
        ln2_b=jnp.zeros((L, 1, H), jnp.float32),
        cls_w=cls_w.astype(jnp.bfloat16),
        cls_b=jnp.zeros((1, CLS_PAD), jnp.float32),
    )


# ------------------------------ forward (wrapper) ----------------------------

def newsnet_forward(params, input_ids, attention_mask, cfg):
    B, S = input_ids.shape
    H, L = cfg["hidden"], cfg["n_layers"]
    C = cfg["num_categories"]
    R = B * S

    # embedding gather + position add stays as tiny XLA glue.
    # TODO(synk): could be moved in-kernel via scalar-prefetched ids + DMA gather.
    x = params["word_emb"][input_ids] + params["pos_emb"][jnp.arange(S)][None]
    x = x.reshape(R, H).astype(jnp.float32)

    # Block-diagonal additive attention mask for the folded (B*S)-row batch:
    # a query row may only attend to keys of its own sequence that are unmasked.
    seq_id = jnp.arange(R, dtype=jnp.int32) // S
    same_seq = seq_id[:, None] == seq_id[None, :]
    key_keep = attention_mask.reshape(R).astype(jnp.bool_)[None, :]
    amask = jnp.where(same_seq & key_keep, 0.0, -1e9).astype(jnp.float32)

    kernel = functools.partial(_newsnet_kernel, n_layers=L,
                               n_heads=cfg["n_heads"], batch=B, seq=S)

    weight_args = (
        params["emb_ln_g"], params["emb_ln_b"],
        params["w_q"], params["w_k"], params["w_v"],
        params["b_q"], params["b_k"], params["b_v"],
        params["w_o"], params["b_o"],
        params["ln1_g"], params["ln1_b"],
        params["w_1"], params["b_1"],
        params["w_2"], params["b_2"],
        params["ln2_g"], params["ln2_b"],
        params["cls_w"], params["cls_b"],
    )

    # Single grid step: every array is one full block resident in VMEM
    # (weights are DMA'd exactly once — no double-buffered replication).
    vmem = pl.BlockSpec(memory_space=pltpu.MemorySpace.VMEM)
    hid_flat, logits_pad = pl.pallas_call(
        kernel,
        out_shape=(jax.ShapeDtypeStruct((R, H), jnp.float32),
                   jax.ShapeDtypeStruct((B, CLS_PAD), jnp.float32)),
        in_specs=[vmem] * (2 + len(weight_args)),
        out_specs=(vmem, vmem),
    )(x, amask, *weight_args)

    logits = logits_pad[:, :C]
    last_hidden_state = hid_flat.reshape(B, S, H)
    # TODO(synk): loss_function is an injected nn.Module (None by default); not modeled.
    return dict(logits=logits, last_hidden_state=last_hidden_state)


# --------------------------------- main --------------------------------------

if __name__ == "__main__":
    key = jax.random.PRNGKey(0)
    k_param, k_ids = jax.random.split(key)

    params = init_params(k_param, CFG)

    B, S = 2, 8
    input_ids = jax.random.randint(k_ids, (B, S), 0, CFG["vocab"], dtype=jnp.int32)
    attention_mask = jnp.ones((B, S), jnp.int32).at[1, -2:].set(0)

    fwd = jax.jit(functools.partial(newsnet_forward, cfg=CFG))
    out = fwd(params, input_ids, attention_mask)

    jax.block_until_ready(out["logits"])
    jax.block_until_ready(out["last_hidden_state"])
    assert out["logits"].shape == (B, CFG["num_categories"])
    assert out["last_hidden_state"].shape == (B, S, CFG["hidden"])
    print("KERNEL_OK")
</pallas_src>

<mosaic_0001>
module attributes {stable_mosaic.version = 11 : i64} {
  func.func @_newsnet_kernel(%arg0: memref<16x32xf32, #tpu.memory_space<vmem>>, %arg1: memref<16x16xf32, #tpu.memory_space<vmem>>, %arg2: memref<1x32xf32, #tpu.memory_space<vmem>>, %arg3: memref<1x32xf32, #tpu.memory_space<vmem>>, %arg4: memref<2x4x32x8xbf16, #tpu.memory_space<vmem>>, %arg5: memref<2x4x32x8xbf16, #tpu.memory_space<vmem>>, %arg6: memref<2x4x32x8xbf16, #tpu.memory_space<vmem>>, %arg7: memref<2x4x1x8xf32, #tpu.memory_space<vmem>>, %arg8: memref<2x4x1x8xf32, #tpu.memory_space<vmem>>, %arg9: memref<2x4x1x8xf32, #tpu.memory_space<vmem>>, %arg10: memref<2x4x8x32xbf16, #tpu.memory_space<vmem>>, %arg11: memref<2x1x32xf32, #tpu.memory_space<vmem>>, %arg12: memref<2x1x32xf32, #tpu.memory_space<vmem>>, %arg13: memref<2x1x32xf32, #tpu.memory_space<vmem>>, %arg14: memref<2x32x64xbf16, #tpu.memory_space<vmem>>, %arg15: memref<2x1x64xf32, #tpu.memory_space<vmem>>, %arg16: memref<2x64x32xbf16, #tpu.memory_space<vmem>>, %arg17: memref<2x1x32xf32, #tpu.memory_space<vmem>>, %arg18: memref<2x1x32xf32, #tpu.memory_space<vmem>>, %arg19: memref<2x1x32xf32, #tpu.memory_space<vmem>>, %arg20: memref<32x128xbf16, #tpu.memory_space<vmem>>, %arg21: memref<1x128xf32, #tpu.memory_space<vmem>>, %arg22: memref<16x32xf32, #tpu.memory_space<vmem>>, %arg23: memref<2x128xf32, #tpu.memory_space<vmem>>) attributes {dimension_semantics = [], scalar_prefetch = 0 : i64, scratch_operands = 0 : i64, tpu.core_type = #tpu.core_type<tc>} {
    %c0 = arith.constant 0 : index
    %c0_0 = arith.constant 0 : index
    %0 = vector.load %arg1[%c0, %c0_0] : memref<16x16xf32, #tpu.memory_space<vmem>>, vector<16x16xf32>
    %c0_1 = arith.constant 0 : index
    %c0_2 = arith.constant 0 : index
    %1 = vector.load %arg0[%c0_1, %c0_2] : memref<16x32xf32, #tpu.memory_space<vmem>>, vector<16x32xf32>
    %c0_3 = arith.constant 0 : index
    %c0_4 = arith.constant 0 : index
    %2 = vector.load %arg2[%c0_3, %c0_4] : memref<1x32xf32, #tpu.memory_space<vmem>>, vector<1x32xf32>
    %c0_5 = arith.constant 0 : index
    %c0_6 = arith.constant 0 : index
    %3 = vector.load %arg3[%c0_5, %c0_6] : memref<1x32xf32, #tpu.memory_space<vmem>>, vector<1x32xf32>
    %cst = arith.constant dense<0.000000e+00> : vector<16xf32>
    %4 = vector.multi_reduction <add>, %1, %cst [1] : vector<16x32xf32> to vector<16xf32>
    %5 = vector.shape_cast %4 : vector<16xf32> to vector<16x1xf32>
    %cst_7 = arith.constant 3.200000e+01 : f32
    %6 = vector.broadcast %cst_7 : f32 to vector<16x1xf32>
    %7 = arith.divf %5, %6 : vector<16x1xf32>
    %8 = vector.broadcast %7 : vector<16x1xf32> to vector<16x32xf32>
    %9 = arith.subf %1, %8 : vector<16x32xf32>
    %10 = arith.mulf %9, %9 : vector<16x32xf32>
    %cst_8 = arith.constant dense<0.000000e+00> : vector<16xf32>
    %11 = vector.multi_reduction <add>, %10, %cst_8 [1] : vector<16x32xf32> to vector<16xf32>
    %12 = vector.shape_cast %11 : vector<16xf32> to vector<16x1xf32>
    %cst_9 = arith.constant 3.200000e+01 : f32
    %13 = vector.broadcast %cst_9 : f32 to vector<16x1xf32>
    %14 = arith.divf %12, %13 : vector<16x1xf32>
    %15 = vector.broadcast %7 : vector<16x1xf32> to vector<16x32xf32>
    %16 = arith.subf %1, %15 : vector<16x32xf32>
    %cst_10 = arith.constant 9.99999996E-13 : f32
    %17 = vector.broadcast %cst_10 : f32 to vector<16x1xf32>
    %18 = arith.addf %14, %17 : vector<16x1xf32>
    %19 = math.rsqrt %18 : vector<16x1xf32>
    %20 = vector.broadcast %19 : vector<16x1xf32> to vector<16x32xf32>
    %21 = arith.mulf %16, %20 : vector<16x32xf32>
    %22 = vector.broadcast %2 : vector<1x32xf32> to vector<16x32xf32>
    %23 = arith.mulf %21, %22 : vector<16x32xf32>
    %24 = vector.broadcast %3 : vector<1x32xf32> to vector<16x32xf32>
    %25 = arith.addf %23, %24 : vector<16x32xf32>
    %26 = arith.truncf %25 : vector<16x32xf32> to vector<16x32xbf16>
    %cst_11 = arith.constant 0.000000e+00 : f32
    %27 = vector.broadcast %cst_11 : f32 to vector<16x32xf32>
    %c0_12 = arith.constant 0 : index
    %c0_13 = arith.constant 0 : index
    %c0_14 = arith.constant 0 : index
    %c0_15 = arith.constant 0 : index
    %28 = vector.load %arg4[%c0_12, %c0_13, %c0_14, %c0_15] : memref<2x4x32x8xbf16, #tpu.memory_space<vmem>>, vector<1x1x32x8xbf16>
    %29 = vector.shape_cast %28 : vector<1x1x32x8xbf16> to vector<32x8xbf16>
    %cst_16 = arith.constant dense<0.000000e+00> : vector<16x8xf32>
    %30 = tpu.matmul %26, %29, %cst_16 {dimension_numbers = #tpu.dot_dimension_numbers<[1], [0], [0], [1], [0, 0, 1, 1], [], []>} : vector<16x32xbf16>, vector<32x8xbf16>, vector<16x8xf32> -> vector<16x8xf32>
    %c0_17 = arith.constant 0 : index
    %c0_18 = arith.constant 0 : index
    %c0_19 = arith.constant 0 : index
    %c0_20 = arith.constant 0 : index
    %31 = vector.load %arg7[%c0_17, %c0_18, %c0_19, %c0_20] : memref<2x4x1x8xf32, #tpu.memory_space<vmem>>, vector<1x1x1x8xf32>
    %32 = vector.shape_cast %31 : vector<1x1x1x8xf32> to vector<1x8xf32>
    %33 = vector.broadcast %32 : vector<1x8xf32> to vector<16x8xf32>
    %34 = arith.addf %30, %33 : vector<16x8xf32>
    %c0_21 = arith.constant 0 : index
    %c0_22 = arith.constant 0 : index
    %c0_23 = arith.constant 0 : index
    %c0_24 = arith.constant 0 : index
    %35 = vector.load %arg5[%c0_21, %c0_22, %c0_23, %c0_24] : memref<2x4x32x8xbf16, #tpu.memory_space<vmem>>, vector<1x1x32x8xbf16>
    %36 = vector.shape_cast %35 : vector<1x1x32x8xbf16> to vector<32x8xbf16>
    %cst_25 = arith.constant dense<0.000000e+00> : vector<16x8xf32>
    %37 = tpu.matmul %26, %36, %cst_25 {dimension_numbers = #tpu.dot_dimension_numbers<[1], [0], [0], [1], [0, 0, 1, 1], [], []>} : vector<16x32xbf16>, vector<32x8xbf16>, vector<16x8xf32> -> vector<16x8xf32>
    %c0_26 = arith.constant 0 : index
    %c0_27 = arith.constant 0 : index
    %c0_28 = arith.constant 0 : index
    %c0_29 = arith.constant 0 : index
    %38 = vector.load %arg8[%c0_26, %c0_27, %c0_28, %c0_29] : memref<2x4x1x8xf32, #tpu.memory_space<vmem>>, vector<1x1x1x8xf32>
    %39 = vector.shape_cast %38 : vector<1x1x1x8xf32> to vector<1x8xf32>
    %40 = vector.broadcast %39 : vector<1x8xf32> to vector<16x8xf32>
    %41 = arith.addf %37, %40 : vector<16x8xf32>
    %c0_30 = arith.constant 0 : index
    %c0_31 = arith.constant 0 : index
    %c0_32 = arith.constant 0 : index
    %c0_33 = arith.constant 0 : index
    %42 = vector.load %arg6[%c0_30, %c0_31, %c0_32, %c0_33] : memref<2x4x32x8xbf16, #tpu.memory_space<vmem>>, vector<1x1x32x8xbf16>
    %43 = vector.shape_cast %42 : vector<1x1x32x8xbf16> to vector<32x8xbf16>
    %cst_34 = arith.constant dense<0.000000e+00> : vector<16x8xf32>
    %44 = tpu.matmul %26, %43, %cst_34 {dimension_numbers = #tpu.dot_dimension_numbers<[1], [0], [0], [1], [0, 0, 1, 1], [], []>} : vector<16x32xbf16>, vector<32x8xbf16>, vector<16x8xf32> -> vector<16x8xf32>
    %c0_35 = arith.constant 0 : index
    %c0_36 = arith.constant 0 : index
    %c0_37 = arith.constant 0 : index
    %c0_38 = arith.constant 0 : index
    %45 = vector.load %arg9[%c0_35, %c0_36, %c0_37, %c0_38] : memref<2x4x1x8xf32, #tpu.memory_space<vmem>>, vector<1x1x1x8xf32>
    %46 = vector.shape_cast %45 : vector<1x1x1x8xf32> to vector<1x8xf32>
    %47 = vector.broadcast %46 : vector<1x8xf32> to vector<16x8xf32>
    %48 = arith.addf %44, %47 : vector<16x8xf32>
    %49 = arith.truncf %34 : vector<16x8xf32> to vector<16x8xbf16>
    %50 = arith.truncf %41 : vector<16x8xf32> to vector<16x8xbf16>
    "tpu.trace_start"() <{level = 10 : i32, message = "qd,kd->qk"}> : () -> ()
    %cst_39 = arith.constant dense<0.000000e+00> : vector<16x16xf32>
    %51 = tpu.matmul %49, %50, %cst_39 {dimension_numbers = #tpu.dot_dimension_numbers<[1], [1], [0], [0], [0, 0, 1, 0], [], []>} : vector<16x8xbf16>, vector<16x8xbf16>, vector<16x16xf32> -> vector<16x16xf32>
    "tpu.trace_stop"() : () -> ()
    %cst_40 = arith.constant 0.353553385 : f32
    %52 = vector.broadcast %cst_40 : f32 to vector<16x16xf32>
    %53 = arith.mulf %51, %52 : vector<16x16xf32>
    %54 = arith.addf %53, %0 : vector<16x16xf32>
    %cst_41 = arith.constant dense<0xFF800000> : vector<16xf32>
    %55 = vector.multi_reduction <maximumf>, %54, %cst_41 [1] : vector<16x16xf32> to vector<16xf32>
    %56 = vector.shape_cast %55 : vector<16xf32> to vector<16x1xf32>
    %57 = vector.broadcast %56 : vector<16x1xf32> to vector<16x16xf32>
    %58 = arith.subf %54, %57 : vector<16x16xf32>
    %59 = math.exp %58 : vector<16x16xf32>
    %cst_42 = arith.constant dense<0.000000e+00> : vector<16xf32>
    %60 = vector.multi_reduction <add>, %59, %cst_42 [1] : vector<16x16xf32> to vector<16xf32>
    %61 = vector.shape_cast %60 : vector<16xf32> to vector<16x1xf32>
    %62 = vector.broadcast %61 : vector<16x1xf32> to vector<16x16xf32>
    %63 = arith.divf %59, %62 : vector<16x16xf32>
    %64 = arith.truncf %63 : vector<16x16xf32> to vector<16x16xbf16>
    %65 = arith.truncf %48 : vector<16x8xf32> to vector<16x8xbf16>
    %cst_43 = arith.constant dense<0.000000e+00> : vector<16x8xf32>
    %66 = tpu.matmul %64, %65, %cst_43 {dimension_numbers = #tpu.dot_dimension_numbers<[1], [0], [0], [1], [0, 0, 1, 1], [], []>} : vector<16x16xbf16>, vector<16x8xbf16>, vector<16x8xf32> -> vector<16x8xf32>
    %67 = arith.truncf %66 : vector<16x8xf32> to vector<16x8xbf16>
    %c0_44 = arith.constant 0 : index
    %c0_45 = arith.constant 0 : index
    %c0_46 = arith.constant 0 : index
    %c0_47 = arith.constant 0 : index
    %68 = vector.load %arg10[%c0_44, %c0_45, %c0_46, %c0_47] : memref<2x4x8x32xbf16, #tpu.memory_space<vmem>>, vector<1x1x8x32xbf16>
    %69 = vector.shape_cast %68 : vector<1x1x8x32xbf16> to vector<8x32xbf16>
    %cst_48 = arith.constant dense<0.000000e+00> : vector<16x32xf32>
    %70 = tpu.matmul %67, %69, %cst_48 {dimension_numbers = #tpu.dot_dimension_numbers<[1], [0], [0], [1], [0, 0, 1, 1], [], []>} : vector<16x8xbf16>, vector<8x32xbf16>, vector<16x32xf32> -> vector<16x32xf32>
    %71 = arith.addf %27, %70 : vector<16x32xf32>
    %c0_49 = arith.constant 0 : index
    %c1 = arith.constant 1 : index
    %c0_50 = arith.constant 0 : index
    %c0_51 = arith.constant 0 : index
    %72 = vector.load %arg4[%c0_49, %c1, %c0_50, %c0_51] : memref<2x4x32x8xbf16, #tpu.memory_space<vmem>>, vector<1x1x32x8xbf16>
    %73 = vector.shape_cast %72 : vector<1x1x32x8xbf16> to vector<32x8xbf16>
    %cst_52 = arith.constant dense<0.000000e+00> : vector<16x8xf32>
    %74 = tpu.matmul %26, %73, %cst_52 {dimension_numbers = #tpu.dot_dimension_numbers<[1], [0], [0], [1], [0, 0, 1, 1], [], []>} : vector<16x32xbf16>, vector<32x8xbf16>, vector<16x8xf32> -> vector<16x8xf32>
    %c0_53 = arith.constant 0 : index
    %c1_54 = arith.constant 1 : index
    %c0_55 = arith.constant 0 : index
    %c0_56 = arith.constant 0 : index
    %75 = vector.load %arg7[%c0_53, %c1_54, %c0_55, %c0_56] : memref<2x4x1x8xf32, #tpu.memory_space<vmem>>, vector<1x1x1x8xf32>
    %76 = vector.shape_cast %75 : vector<1x1x1x8xf32> to vector<1x8xf32>
    %77 = vector.broadcast %76 : vector<1x8xf32> to vector<16x8xf32>
    %78 = arith.addf %74, %77 : vector<16x8xf32>
    %c0_57 = arith.constant 0 : index
    %c1_58 = arith.constant 1 : index
    %c0_59 = arith.constant 0 : index
    %c0_60 = arith.constant 0 : index
    %79 = vector.load %arg5[%c0_57, %c1_58, %c0_59, %c0_60] : memref<2x4x32x8xbf16, #tpu.memory_space<vmem>>, vector<1x1x32x8xbf16>
    %80 = vector.shape_cast %79 : vector<1x1x32x8xbf16> to vector<32x8xbf16>
    %cst_61 = arith.constant dense<0.000000e+00> : vector<16x8xf32>
    %81 = tpu.matmul %26, %80, %cst_61 {dimension_numbers = #tpu.dot_dimension_numbers<[1], [0], [0], [1], [0, 0, 1, 1], [], []>} : vector<16x32xbf16>, vector<32x8xbf16>, vector<16x8xf32> -> vector<16x8xf32>
    %c0_62 = arith.constant 0 : index
    %c1_63 = arith.constant 1 : index
    %c0_64 = arith.constant 0 : index
    %c0_65 = arith.constant 0 : index
    %82 = vector.load %arg8[%c0_62, %c1_63, %c0_64, %c0_65] : memref<2x4x1x8xf32, #tpu.memory_space<vmem>>, vector<1x1x1x8xf32>
    %83 = vector.shape_cast %82 : vector<1x1x1x8xf32> to vector<1x8xf32>
    %84 = vector.broadcast %83 : vector<1x8xf32> to vector<16x8xf32>
    %85 = arith.addf %81, %84 : vector<16x8xf32>
    %c0_66 = arith.constant 0 : index
    %c1_67 = arith.constant 1 : index
    %c0_68 = arith.constant 0 : index
    %c0_69 = arith.constant 0 : index
    %86 = vector.load %arg6[%c0_66, %c1_67, %c0_68, %c0_69] : memref<2x4x32x8xbf16, #tpu.memory_space<vmem>>, vector<1x1x32x8xbf16>
    %87 = vector.shape_cast %86 : vector<1x1x32x8xbf16> to vector<32x8xbf16>
    %cst_70 = arith.constant dense<0.000000e+00> : vector<16x8xf32>
    %88 = tpu.matmul %26, %87, %cst_70 {dimension_numbers = #tpu.dot_dimension_numbers<[1], [0], [0], [1], [0, 0, 1, 1], [], []>} : vector<16x32xbf16>, vector<32x8xbf16>, vector<16x8xf32> -> vector<16x8xf32>
    %c0_71 = arith.constant 0 : index
    %c1_72 = arith.constant 1 : index
    %c0_73 = arith.constant 0 : index
    %c0_74 = arith.constant 0 : index
    %89 = vector.load %arg9[%c0_71, %c1_72, %c0_73, %c0_74] : memref<2x4x1x8xf32, #tpu.memory_space<vmem>>, vector<1x1x1x8xf32>
    %90 = vector.shape_cast %89 : vector<1x1x1x8xf32> to vector<1x8xf32>
    %91 = vector.broadcast %90 : vector<1x8xf32> to vector<16x8xf32>
    %92 = arith.addf %88, %91 : vector<16x8xf32>
    %93 = arith.truncf %78 : vector<16x8xf32> to vector<16x8xbf16>
    %94 = arith.truncf %85 : vector<16x8xf32> to vector<16x8xbf16>
    "tpu.trace_start"() <{level = 10 : i32, message = "qd,kd->qk"}> : () -> ()
    %cst_75 = arith.constant dense<0.000000e+00> : vector<16x16xf32>
    %95 = tpu.matmul %93, %94, %cst_75 {dimension_numbers = #tpu.dot_dimension_numbers<[1], [1], [0], [0], [0, 0, 1, 0], [], []>} : vector<16x8xbf16>, vector<16x8xbf16>, vector<16x16xf32> -> vector<16x16xf32>
    "tpu.trace_stop"() : () -> ()
    %cst_76 = arith.constant 0.353553385 : f32
    %96 = vector.broadcast %cst_76 : f32 to vector<16x16xf32>
    %97 = arith.mulf %95, %96 : vector<16x16xf32>
    %98 = arith.addf %97, %0 : vector<16x16xf32>
    %cst_77 = arith.constant dense<0xFF800000> : vector<16xf32>
    %99 = vector.multi_reduction <maximumf>, %98, %cst_77 [1] : vector<16x16xf32> to vector<16xf32>
    %100 = vector.shape_cast %99 : vector<16xf32> to vector<16x1xf32>
    %101 = vector.broadcast %100 : vector<16x1xf32> to vector<16x16xf32>
    %102 = arith.subf %98, %101 : vector<16x16xf32>
    %103 = math.exp %102 : vector<16x16xf32>
    %cst_78 = arith.constant dense<0.000000e+00> : vector<16xf32>
    %104 = vector.multi_reduction <add>, %103, %cst_78 [1] : vector<16x16xf32> to vector<16xf32>
    %105 = vector.shape_cast %104 : vector<16xf32> to vector<16x1xf32>
    %106 = vector.broadcast %105 : vector<16x1xf32> to vector<16x16xf32>
    %107 = arith.divf %103, %106 : vector<16x16xf32>
    %108 = arith.truncf %107 : vector<16x16xf32> to vector<16x16xbf16>
    %109 = arith.truncf %92 : vector<16x8xf32> to vector<16x8xbf16>
    %cst_79 = arith.constant dense<0.000000e+00> : vector<16x8xf32>
    %110 = tpu.matmul %108, %109, %cst_79 {dimension_numbers = #tpu.dot_dimension_numbers<[1], [0], [0], [1], [0, 0, 1, 1], [], []>} : vector<16x16xbf16>, vector<16x8xbf16>, vector<16x8xf32> -> vector<16x8xf32>
    %111 = arith.truncf %110 : vector<16x8xf32> to vector<16x8xbf16>
    %c0_80 = arith.constant 0 : index
    %c1_81 = arith.constant 1 : index
    %c0_82 = arith.constant 0 : index
    %c0_83 = arith.constant 0 : index
    %112 = vector.load %arg10[%c0_80, %c1_81, %c0_82, %c0_83] : memref<2x4x8x32xbf16, #tpu.memory_space<vmem>>, vector<1x1x8x32xbf16>
    %113 = vector.shape_cast %112 : vector<1x1x8x32xbf16> to vector<8x32xbf16>
    %cst_84 = arith.constant dense<0.000000e+00> : vector<16x32xf32>
    %114 = tpu.matmul %111, %113, %cst_84 {dimension_numbers = #tpu.dot_dimension_numbers<[1], [0], [0], [1], [0, 0, 1, 1], [], []>} : vector<16x8xbf16>, vector<8x32xbf16>, vector<16x32xf32> -> vector<16x32xf32>
    %115 = arith.addf %71, %114 : vector<16x32xf32>
    %c0_85 = arith.constant 0 : index
    %c2 = arith.constant 2 : index
    %c0_86 = arith.constant 0 : index
    %c0_87 = arith.constant 0 : index
    %116 = vector.load %arg4[%c0_85, %c2, %c0_86, %c0_87] : memref<2x4x32x8xbf16, #tpu.memory_space<vmem>>, vector<1x1x32x8xbf16>
    %117 = vector.shape_cast %116 : vector<1x1x32x8xbf16> to vector<32x8xbf16>
    %cst_88 = arith.constant dense<0.000000e+00> : vector<16x8xf32>
    %118 = tpu.matmul %26, %117, %cst_88 {dimension_numbers = #tpu.dot_dimension_numbers<[1], [0], [0], [1], [0, 0, 1, 1], [], []>} : vector<16x32xbf16>, vector<32x8xbf16>, vector<16x8xf32> -> vector<16x8xf32>
    %c0_89 = arith.constant 0 : index
    %c2_90 = arith.constant 2 : index
    %c0_91 = arith.constant 0 : index
    %c0_92 = arith.constant 0 : index
    %119 = vector.load %arg7[%c0_89, %c2_90, %c0_91, %c0_92] : memref<2x4x1x8xf32, #tpu.memory_space<vmem>>, vector<1x1x1x8xf32>
    %120 = vector.shape_cast %119 : vector<1x1x1x8xf32> to vector<1x8xf32>
    %121 = vector.broadcast %120 : vector<1x8xf32> to vector<16x8xf32>
    %122 = arith.addf %118, %121 : vector<16x8xf32>
    %c0_93 = arith.constant 0 : index
    %c2_94 = arith.constant 2 : index
    %c0_95 = arith.constant 0 : index
    %c0_96 = arith.constant 0 : index
    %123 = vector.load %arg5[%c0_93, %c2_94, %c0_95, %c0_96] : memref<2x4x32x8xbf16, #tpu.memory_space<vmem>>, vector<1x1x32x8xbf16>
    %124 = vector.shape_cast %123 : vector<1x1x32x8xbf16> to vector<32x8xbf16>
    %cst_97 = arith.constant dense<0.000000e+00> : vector<16x8xf32>
    %125 = tpu.matmul %26, %124, %cst_97 {dimension_numbers = #tpu.dot_dimension_numbers<[1], [0], [0], [1], [0, 0, 1, 1], [], []>} : vector<16x32xbf16>, vector<32x8xbf16>, vector<16x8xf32> -> vector<16x8xf32>
    %c0_98 = arith.constant 0 : index
    %c2_99 = arith.constant 2 : index
    %c0_100 = arith.constant 0 : index
    %c0_101 = arith.constant 0 : index
    %126 = vector.load %arg8[%c0_98, %c2_99, %c0_100, %c0_101] : memref<2x4x1x8xf32, #tpu.memory_space<vmem>>, vector<1x1x1x8xf32>
    %127 = vector.shape_cast %126 : vector<1x1x1x8xf32> to vector<1x8xf32>
    %128 = vector.broadcast %127 : vector<1x8xf32> to vector<16x8xf32>
    %129 = arith.addf %125, %128 : vector<16x8xf32>
    %c0_102 = arith.constant 0 : index
    %c2_103 = arith.constant 2 : index
    %c0_104 = arith.constant 0 : index
    %c0_105 = arith.constant 0 : index
    %130 = vector.load %arg6[%c0_102, %c2_103, %c0_104, %c0_105] : memref<2x4x32x8xbf16, #tpu.memory_space<vmem>>, vector<1x1x32x8xbf16>
    %131 = vector.shape_cast %130 : vector<1x1x32x8xbf16> to vector<32x8xbf16>
    %cst_106 = arith.constant dense<0.000000e+00> : vector<16x8xf32>
    %132 = tpu.matmul %26, %131, %cst_106 {dimension_numbers = #tpu.dot_dimension_numbers<[1], [0], [0], [1], [0, 0, 1, 1], [], []>} : vector<16x32xbf16>, vector<32x8xbf16>, vector<16x8xf32> -> vector<16x8xf32>
    %c0_107 = arith.constant 0 : index
    %c2_108 = arith.constant 2 : index
    %c0_109 = arith.constant 0 : index
    %c0_110 = arith.constant 0 : index
    %133 = vector.load %arg9[%c0_107, %c2_108, %c0_109, %c0_110] : memref<2x4x1x8xf32, #tpu.memory_space<vmem>>, vector<1x1x1x8xf32>
    %134 = vector.shape_cast %133 : vector<1x1x1x8xf32> to vector<1x8xf32>
    %135 = vector.broadcast %134 : vector<1x8xf32> to vector<16x8xf32>
    %136 = arith.addf %132, %135 : vector<16x8xf32>
    %137 = arith.truncf %122 : vector<16x8xf32> to vector<16x8xbf16>
    %138 = arith.truncf %129 : vector<16x8xf32> to vector<16x8xbf16>
    "tpu.trace_start"() <{level = 10 : i32, message = "qd,kd->qk"}> : () -> ()
    %cst_111 = arith.constant dense<0.000000e+00> : vector<16x16xf32>
    %139 = tpu.matmul %137, %138, %cst_111 {dimension_numbers = #tpu.dot_dimension_numbers<[1], [1], [0], [0], [0, 0, 1, 0], [], []>} : vector<16x8xbf16>, vector<16x8xbf16>, vector<16x16xf32> -> vector<16x16xf32>
    "tpu.trace_stop"() : () -> ()
    %cst_112 = arith.constant 0.353553385 : f32
    %140 = vector.broadcast %cst_112 : f32 to vector<16x16xf32>
    %141 = arith.mulf %139, %140 : vector<16x16xf32>
    %142 = arith.addf %141, %0 : vector<16x16xf32>
    %cst_113 = arith.constant dense<0xFF800000> : vector<16xf32>
    %143 = vector.multi_reduction <maximumf>, %142, %cst_113 [1] : vector<16x16xf32> to vector<16xf32>
    %144 = vector.shape_cast %143 : vector<16xf32> to vector<16x1xf32>
    %145 = vector.broadcast %144 : vector<16x1xf32> to vector<16x16xf32>
    %146 = arith.subf %142, %145 : vector<16x16xf32>
    %147 = math.exp %146 : vector<16x16xf32>
    %cst_114 = arith.constant dense<0.000000e+00> : vector<16xf32>
    %148 = vector.multi_reduction <add>, %147, %cst_114 [1] : vector<16x16xf32> to vector<16xf32>
    %149 = vector.shape_cast %148 : vector<16xf32> to vector<16x1xf32>
    %150 = vector.broadcast %149 : vector<16x1xf32> to vector<16x16xf32>
    %151 = arith.divf %147, %150 : vector<16x16xf32>
    %152 = arith.truncf %151 : vector<16x16xf32> to vector<16x16xbf16>
    %153 = arith.truncf %136 : vector<16x8xf32> to vector<16x8xbf16>
    %cst_115 = arith.constant dense<0.000000e+00> : vector<16x8xf32>
    %154 = tpu.matmul %152, %153, %cst_115 {dimension_numbers = #tpu.dot_dimension_numbers<[1], [0], [0], [1], [0, 0, 1, 1], [], []>} : vector<16x16xbf16>, vector<16x8xbf16>, vector<16x8xf32> -> vector<16x8xf32>
    %155 = arith.truncf %154 : vector<16x8xf32> to vector<16x8xbf16>
    %c0_116 = arith.constant 0 : index
    %c2_117 = arith.constant 2 : index
    %c0_118 = arith.constant 0 : index
    %c0_119 = arith.constant 0 : index
    %156 = vector.load %arg10[%c0_116, %c2_117, %c0_118, %c0_119] : memref<2x4x8x32xbf16, #tpu.memory_space<vmem>>, vector<1x1x8x32xbf16>
    %157 = vector.shape_cast %156 : vector<1x1x8x32xbf16> to vector<8x32xbf16>
    %cst_120 = arith.constant dense<0.000000e+00> : vector<16x32xf32>
    %158 = tpu.matmul %155, %157, %cst_120 {dimension_numbers = #tpu.dot_dimension_numbers<[1], [0], [0], [1], [0, 0, 1, 1], [], []>} : vector<16x8xbf16>, vector<8x32xbf16>, vector<16x32xf32> -> vector<16x32xf32>
    %159 = arith.addf %115, %158 : vector<16x32xf32>
    %c0_121 = arith.constant 0 : index
    %c3 = arith.constant 3 : index
    %c0_122 = arith.constant 0 : index
    %c0_123 = arith.constant 0 : index
    %160 = vector.load %arg4[%c0_121, %c3, %c0_122, %c0_123] : memref<2x4x32x8xbf16, #tpu.memory_space<vmem>>, vector<1x1x32x8xbf16>
    %161 = vector.shape_cast %160 : vector<1x1x32x8xbf16> to vector<32x8xbf16>
    %cst_124 = arith.constant dense<0.000000e+00> : vector<16x8xf32>
    %162 = tpu.matmul %26, %161, %cst_124 {dimension_numbers = #tpu.dot_dimension_numbers<[1], [0], [0], [1], [0, 0, 1, 1], [], []>} : vector<16x32xbf16>, vector<32x8xbf16>, vector<16x8xf32> -> vector<16x8xf32>
    %c0_125 = arith.constant 0 : index
    %c3_126 = arith.constant 3 : index
    %c0_127 = arith.constant 0 : index
    %c0_128 = arith.constant 0 : index
    %163 = vector.load %arg7[%c0_125, %c3_126, %c0_127, %c0_128] : memref<2x4x1x8xf32, #tpu.memory_space<vmem>>, vector<1x1x1x8xf32>
    %164 = vector.shape_cast %163 : vector<1x1x1x8xf32> to vector<1x8xf32>
    %165 = vector.broadcast %164 : vector<1x8xf32> to vector<16x8xf32>
    %166 = arith.addf %162, %165 : vector<16x8xf32>
    %c0_129 = arith.constant 0 : index
    %c3_130 = arith.constant 3 : index
    %c0_131 = arith.constant 0 : index
    %c0_132 = arith.constant 0 : index
    %167 = vector.load %arg5[%c0_129, %c3_130, %c0_131, %c0_132] : memref<2x4x32x8xbf16, #tpu.memory_space<vmem>>, vector<1x1x32x8xbf16>
    %168 = vector.shape_cast %167 : vector<1x1x32x8xbf16> to vector<32x8xbf16>
    %cst_133 = arith.constant dense<0.000000e+00> : vector<16x8xf32>
    %169 = tpu.matmul %26, %168, %cst_133 {dimension_numbers = #tpu.dot_dimension_numbers<[1], [0], [0], [1], [0, 0, 1, 1], [], []>} : vector<16x32xbf16>, vector<32x8xbf16>, vector<16x8xf32> -> vector<16x8xf32>
    %c0_134 = arith.constant 0 : index
    %c3_135 = arith.constant 3 : index
    %c0_136 = arith.constant 0 : index
    %c0_137 = arith.constant 0 : index
    %170 = vector.load %arg8[%c0_134, %c3_135, %c0_136, %c0_137] : memref<2x4x1x8xf32, #tpu.memory_space<vmem>>, vector<1x1x1x8xf32>
    %171 = vector.shape_cast %170 : vector<1x1x1x8xf32> to vector<1x8xf32>
    %172 = vector.broadcast %171 : vector<1x8xf32> to vector<16x8xf32>
    %173 = arith.addf %169, %172 : vector<16x8xf32>
    %c0_138 = arith.constant 0 : index
    %c3_139 = arith.constant 3 : index
    %c0_140 = arith.constant 0 : index
    %c0_141 = arith.constant 0 : index
    %174 = vector.load %arg6[%c0_138, %c3_139, %c0_140, %c0_141] : memref<2x4x32x8xbf16, #tpu.memory_space<vmem>>, vector<1x1x32x8xbf16>
    %175 = vector.shape_cast %174 : vector<1x1x32x8xbf16> to vector<32x8xbf16>
    %cst_142 = arith.constant dense<0.000000e+00> : vector<16x8xf32>
    %176 = tpu.matmul %26, %175, %cst_142 {dimension_numbers = #tpu.dot_dimension_numbers<[1], [0], [0], [1], [0, 0, 1, 1], [], []>} : vector<16x32xbf16>, vector<32x8xbf16>, vector<16x8xf32> -> vector<16x8xf32>
    %c0_143 = arith.constant 0 : index
    %c3_144 = arith.constant 3 : index
    %c0_145 = arith.constant 0 : index
    %c0_146 = arith.constant 0 : index
    %177 = vector.load %arg9[%c0_143, %c3_144, %c0_145, %c0_146] : memref<2x4x1x8xf32, #tpu.memory_space<vmem>>, vector<1x1x1x8xf32>
    %178 = vector.shape_cast %177 : vector<1x1x1x8xf32> to vector<1x8xf32>
    %179 = vector.broadcast %178 : vector<1x8xf32> to vector<16x8xf32>
    %180 = arith.addf %176, %179 : vector<16x8xf32>
    %181 = arith.truncf %166 : vector<16x8xf32> to vector<16x8xbf16>
    %182 = arith.truncf %173 : vector<16x8xf32> to vector<16x8xbf16>
    "tpu.trace_start"() <{level = 10 : i32, message = "qd,kd->qk"}> : () -> ()
    %cst_147 = arith.constant dense<0.000000e+00> : vector<16x16xf32>
    %183 = tpu.matmul %181, %182, %cst_147 {dimension_numbers = #tpu.dot_dimension_numbers<[1], [1], [0], [0], [0, 0, 1, 0], [], []>} : vector<16x8xbf16>, vector<16x8xbf16>, vector<16x16xf32> -> vector<16x16xf32>
    "tpu.trace_stop"() : () -> ()
    %cst_148 = arith.constant 0.353553385 : f32
    %184 = vector.broadcast %cst_148 : f32 to vector<16x16xf32>
    %185 = arith.mulf %183, %184 : vector<16x16xf32>
    %186 = arith.addf %185, %0 : vector<16x16xf32>
    %cst_149 = arith.constant dense<0xFF800000> : vector<16xf32>
    %187 = vector.multi_reduction <maximumf>, %186, %cst_149 [1] : vector<16x16xf32> to vector<16xf32>
    %188 = vector.shape_cast %187 : vector<16xf32> to vector<16x1xf32>
    %189 = vector.broadcast %188 : vector<16x1xf32> to vector<16x16xf32>
    %190 = arith.subf %186, %189 : vector<16x16xf32>
    %191 = math.exp %190 : vector<16x16xf32>
    %cst_150 = arith.constant dense<0.000000e+00> : vector<16xf32>
    %192 = vector.multi_reduction <add>, %191, %cst_150 [1] : vector<16x16xf32> to vector<16xf32>
    %193 = vector.shape_cast %192 : vector<16xf32> to vector<16x1xf32>
    %194 = vector.broadcast %193 : vector<16x1xf32> to vector<16x16xf32>
    %195 = arith.divf %191, %194 : vector<16x16xf32>
    %196 = arith.truncf %195 : vector<16x16xf32> to vector<16x16xbf16>
    %197 = arith.truncf %180 : vector<16x8xf32> to vector<16x8xbf16>
    %cst_151 = arith.constant dense<0.000000e+00> : vector<16x8xf32>
    %198 = tpu.matmul %196, %197, %cst_151 {dimension_numbers = #tpu.dot_dimension_numbers<[1], [0], [0], [1], [0, 0, 1, 1], [], []>} : vector<16x16xbf16>, vector<16x8xbf16>, vector<16x8xf32> -> vector<16x8xf32>
    %199 = arith.truncf %198 : vector<16x8xf32> to vector<16x8xbf16>
    %c0_152 = arith.constant 0 : index
    %c3_153 = arith.constant 3 : index
    %c0_154 = arith.constant 0 : index
    %c0_155 = arith.constant 0 : index
    %200 = vector.load %arg10[%c0_152, %c3_153, %c0_154, %c0_155] : memref<2x4x8x32xbf16, #tpu.memory_space<vmem>>, vector<1x1x8x32xbf16>
    %201 = vector.shape_cast %200 : vector<1x1x8x32xbf16> to vector<8x32xbf16>
    %cst_156 = arith.constant dense<0.000000e+00> : vector<16x32xf32>
    %202 = tpu.matmul %199, %201, %cst_156 {dimension_numbers = #tpu.dot_dimension_numbers<[1], [0], [0], [1], [0, 0, 1, 1], [], []>} : vector<16x8xbf16>, vector<8x32xbf16>, vector<16x32xf32> -> vector<16x32xf32>
    %203 = arith.addf %159, %202 : vector<16x32xf32>
    %c0_157 = arith.constant 0 : index
    %c0_158 = arith.constant 0 : index
    %c0_159 = arith.constant 0 : index
    %204 = vector.load %arg11[%c0_157, %c0_158, %c0_159] : memref<2x1x32xf32, #tpu.memory_space<vmem>>, vector<1x1x32xf32>
    %205 = vector.shape_cast %204 : vector<1x1x32xf32> to vector<1x32xf32>
    %206 = vector.broadcast %205 : vector<1x32xf32> to vector<16x32xf32>
    %207 = arith.addf %203, %206 : vector<16x32xf32>
    %208 = arith.addf %207, %25 : vector<16x32xf32>
    %c0_160 = arith.constant 0 : index
    %c0_161 = arith.constant 0 : index
    %c0_162 = arith.constant 0 : index
    %209 = vector.load %arg12[%c0_160, %c0_161, %c0_162] : memref<2x1x32xf32, #tpu.memory_space<vmem>>, vector<1x1x32xf32>
    %210 = vector.shape_cast %209 : vector<1x1x32xf32> to vector<1x32xf32>
    %c0_163 = arith.constant 0 : index
    %c0_164 = arith.constant 0 : index
    %c0_165 = arith.constant 0 : index
    %211 = vector.load %arg13[%c0_163, %c0_164, %c0_165] : memref<2x1x32xf32, #tpu.memory_space<vmem>>, vector<1x1x32xf32>
    %212 = vector.shape_cast %211 : vector<1x1x32xf32> to vector<1x32xf32>
    %cst_166 = arith.constant dense<0.000000e+00> : vector<16xf32>
    %213 = vector.multi_reduction <add>, %208, %cst_166 [1] : vector<16x32xf32> to vector<16xf32>
    %214 = vector.shape_cast %213 : vector<16xf32> to vector<16x1xf32>
    %cst_167 = arith.constant 3.200000e+01 : f32
    %215 = vector.broadcast %cst_167 : f32 to vector<16x1xf32>
    %216 = arith.divf %214, %215 : vector<16x1xf32>
    %217 = vector.broadcast %216 : vector<16x1xf32> to vector<16x32xf32>
    %218 = arith.subf %208, %217 : vector<16x32xf32>
    %219 = arith.mulf %218, %218 : vector<16x32xf32>
    %cst_168 = arith.constant dense<0.000000e+00> : vector<16xf32>
    %220 = vector.multi_reduction <add>, %219, %cst_168 [1] : vector<16x32xf32> to vector<16xf32>
    %221 = vector.shape_cast %220 : vector<16xf32> to vector<16x1xf32>
    %cst_169 = arith.constant 3.200000e+01 : f32
    %222 = vector.broadcast %cst_169 : f32 to vector<16x1xf32>
    %223 = arith.divf %221, %222 : vector<16x1xf32>
    %224 = vector.broadcast %216 : vector<16x1xf32> to vector<16x32xf32>
    %225 = arith.subf %208, %224 : vector<16x32xf32>
    %cst_170 = arith.constant 9.99999996E-13 : f32
    %226 = vector.broadcast %cst_170 : f32 to vector<16x1xf32>
    %227 = arith.addf %223, %226 : vector<16x1xf32>
    %228 = math.rsqrt %227 : vector<16x1xf32>
    %229 = vector.broadcast %228 : vector<16x1xf32> to vector<16x32xf32>
    %230 = arith.mulf %225, %229 : vector<16x32xf32>
    %231 = vector.broadcast %210 : vector<1x32xf32> to vector<16x32xf32>
    %232 = arith.mulf %230, %231 : vector<16x32xf32>
    %233 = vector.broadcast %212 : vector<1x32xf32> to vector<16x32xf32>
    %234 = arith.addf %232, %233 : vector<16x32xf32>
    %235 = arith.truncf %234 : vector<16x32xf32> to vector<16x32xbf16>
    %c0_171 = arith.constant 0 : index
    %c0_172 = arith.constant 0 : index
    %c0_173 = arith.constant 0 : index
    %236 = vector.load %arg14[%c0_171, %c0_172, %c0_173] : memref<2x32x64xbf16, #tpu.memory_space<vmem>>, vector<1x32x64xbf16>
    %237 = vector.shape_cast %236 : vector<1x32x64xbf16> to vector<32x64xbf16>
    %cst_174 = arith.constant dense<0.000000e+00> : vector<16x64xf32>
    %238 = tpu.matmul %235, %237, %cst_174 {dimension_numbers = #tpu.dot_dimension_numbers<[1], [0], [0], [1], [0, 0, 1, 1], [], []>} : vector<16x32xbf16>, vector<32x64xbf16>, vector<16x64xf32> -> vector<16x64xf32>
    %c0_175 = arith.constant 0 : index
    %c0_176 = arith.constant 0 : index
    %c0_177 = arith.constant 0 : index
    %239 = vector.load %arg15[%c0_175, %c0_176, %c0_177] : memref<2x1x64xf32, #tpu.memory_space<vmem>>, vector<1x1x64xf32>
    %240 = vector.shape_cast %239 : vector<1x1x64xf32> to vector<1x64xf32>
    %241 = vector.broadcast %240 : vector<1x64xf32> to vector<16x64xf32>
    %242 = arith.addf %238, %241 : vector<16x64xf32>
    %243 = arith.mulf %242, %242 : vector<16x64xf32>
    %244 = arith.mulf %242, %243 : vector<16x64xf32>
    %cst_178 = arith.constant 4.471500e-02 : f32
    %245 = vector.broadcast %cst_178 : f32 to vector<16x64xf32>
    %246 = arith.mulf %245, %244 : vector<16x64xf32>
    %247 = arith.addf %242, %246 : vector<16x64xf32>
    %cst_179 = arith.constant 0.797884583 : f32
    %248 = vector.broadcast %cst_179 : f32 to vector<16x64xf32>
    %249 = arith.mulf %248, %247 : vector<16x64xf32>
    %250 = math.tanh %249 : vector<16x64xf32>
    %cst_180 = arith.constant 1.000000e+00 : f32
    %251 = vector.broadcast %cst_180 : f32 to vector<16x64xf32>
    %252 = arith.addf %251, %250 : vector<16x64xf32>
    %cst_181 = arith.constant 5.000000e-01 : f32
    %253 = vector.broadcast %cst_181 : f32 to vector<16x64xf32>
    %254 = arith.mulf %253, %252 : vector<16x64xf32>
    %255 = arith.mulf %242, %254 : vector<16x64xf32>
    %256 = arith.truncf %255 : vector<16x64xf32> to vector<16x64xbf16>
    %c0_182 = arith.constant 0 : index
    %c0_183 = arith.constant 0 : index
    %c0_184 = arith.constant 0 : index
    %257 = vector.load %arg16[%c0_182, %c0_183, %c0_184] : memref<2x64x32xbf16, #tpu.memory_space<vmem>>, vector<1x64x32xbf16>
    %258 = vector.shape_cast %257 : vector<1x64x32xbf16> to vector<64x32xbf16>
    %cst_185 = arith.constant dense<0.000000e+00> : vector<16x32xf32>
    %259 = tpu.matmul %256, %258, %cst_185 {dimension_numbers = #tpu.dot_dimension_numbers<[1], [0], [0], [1], [0, 0, 1, 1], [], []>} : vector<16x64xbf16>, vector<64x32xbf16>, vector<16x32xf32> -> vector<16x32xf32>
    %c0_186 = arith.constant 0 : index
    %c0_187 = arith.constant 0 : index
    %c0_188 = arith.constant 0 : index
    %260 = vector.load %arg17[%c0_186, %c0_187, %c0_188] : memref<2x1x32xf32, #tpu.memory_space<vmem>>, vector<1x1x32xf32>
    %261 = vector.shape_cast %260 : vector<1x1x32xf32> to vector<1x32xf32>
    %262 = vector.broadcast %261 : vector<1x32xf32> to vector<16x32xf32>
    %263 = arith.addf %259, %262 : vector<16x32xf32>
    %264 = arith.addf %263, %234 : vector<16x32xf32>
    %c0_189 = arith.constant 0 : index
    %c0_190 = arith.constant 0 : index
    %c0_191 = arith.constant 0 : index
    %265 = vector.load %arg18[%c0_189, %c0_190, %c0_191] : memref<2x1x32xf32, #tpu.memory_space<vmem>>, vector<1x1x32xf32>
    %266 = vector.shape_cast %265 : vector<1x1x32xf32> to vector<1x32xf32>
    %c0_192 = arith.constant 0 : index
    %c0_193 = arith.constant 0 : index
    %c0_194 = arith.constant 0 : index
    %267 = vector.load %arg19[%c0_192, %c0_193, %c0_194] : memref<2x1x32xf32, #tpu.memory_space<vmem>>, vector<1x1x32xf32>
    %268 = vector.shape_cast %267 : vector<1x1x32xf32> to vector<1x32xf32>
    %cst_195 = arith.constant dense<0.000000e+00> : vector<16xf32>
    %269 = vector.multi_reduction <add>, %264, %cst_195 [1] : vector<16x32xf32> to vector<16xf32>
    %270 = vector.shape_cast %269 : vector<16xf32> to vector<16x1xf32>
    %cst_196 = arith.constant 3.200000e+01 : f32
    %271 = vector.broadcast %cst_196 : f32 to vector<16x1xf32>
    %272 = arith.divf %270, %271 : vector<16x1xf32>
    %273 = vector.broadcast %272 : vector<16x1xf32> to vector<16x32xf32>
    %274 = arith.subf %264, %273 : vector<16x32xf32>
    %275 = arith.mulf %274, %274 : vector<16x32xf32>
    %cst_197 = arith.constant dense<0.000000e+00> : vector<16xf32>
    %276 = vector.multi_reduction <add>, %275, %cst_197 [1] : vector<16x32xf32> to vector<16xf32>
    %277 = vector.shape_cast %276 : vector<16xf32> to vector<16x1xf32>
    %cst_198 = arith.constant 3.200000e+01 : f32
    %278 = vector.broadcast %cst_198 : f32 to vector<16x1xf32>
    %279 = arith.divf %277, %278 : vector<16x1xf32>
    %280 = vector.broadcast %272 : vector<16x1xf32> to vector<16x32xf32>
    %281 = arith.subf %264, %280 : vector<16x32xf32>
    %cst_199 = arith.constant 9.99999996E-13 : f32
    %282 = vector.broadcast %cst_199 : f32 to vector<16x1xf32>
    %283 = arith.addf %279, %282 : vector<16x1xf32>
    %284 = math.rsqrt %283 : vector<16x1xf32>
    %285 = vector.broadcast %284 : vector<16x1xf32> to vector<16x32xf32>
    %286 = arith.mulf %281, %285 : vector<16x32xf32>
    %287 = vector.broadcast %266 : vector<1x32xf32> to vector<16x32xf32>
    %288 = arith.mulf %286, %287 : vector<16x32xf32>
    %289 = vector.broadcast %268 : vector<1x32xf32> to vector<16x32xf32>
    %290 = arith.addf %288, %289 : vector<16x32xf32>
    %291 = arith.truncf %290 : vector<16x32xf32> to vector<16x32xbf16>
    %cst_200 = arith.constant 0.000000e+00 : f32
    %292 = vector.broadcast %cst_200 : f32 to vector<16x32xf32>
    %c1_201 = arith.constant 1 : index
    %c0_202 = arith.constant 0 : index
    %c0_203 = arith.constant 0 : index
    %c0_204 = arith.constant 0 : index
    %293 = vector.load %arg4[%c1_201, %c0_202, %c0_203, %c0_204] : memref<2x4x32x8xbf16, #tpu.memory_space<vmem>>, vector<1x1x32x8xbf16>
    %294 = vector.shape_cast %293 : vector<1x1x32x8xbf16> to vector<32x8xbf16>
    %cst_205 = arith.constant dense<0.000000e+00> : vector<16x8xf32>
    %295 = tpu.matmul %291, %294, %cst_205 {dimension_numbers = #tpu.dot_dimension_numbers<[1], [0], [0], [1], [0, 0, 1, 1], [], []>} : vector<16x32xbf16>, vector<32x8xbf16>, vector<16x8xf32> -> vector<16x8xf32>
    %c1_206 = arith.constant 1 : index
    %c0_207 = arith.constant 0 : index
    %c0_208 = arith.constant 0 : index
    %c0_209 = arith.constant 0 : index
    %296 = vector.load %arg7[%c1_206, %c0_207, %c0_208, %c0_209] : memref<2x4x1x8xf32, #tpu.memory_space<vmem>>, vector<1x1x1x8xf32>
    %297 = vector.shape_cast %296 : vector<1x1x1x8xf32> to vector<1x8xf32>
    %298 = vector.broadcast %297 : vector<1x8xf32> to vector<16x8xf32>
    %299 = arith.addf %295, %298 : vector<16x8xf32>
    %c1_210 = arith.constant 1 : index
    %c0_211 = arith.constant 0 : index
    %c0_212 = arith.constant 0 : index
    %c0_213 = arith.constant 0 : index
    %300 = vector.load %arg5[%c1_210, %c0_211, %c0_212, %c0_213] : memref<2x4x32x8xbf16, #tpu.memory_space<vmem>>, vector<1x1x32x8xbf16>
    %301 = vector.shape_cast %300 : vector<1x1x32x8xbf16> to vector<32x8xbf16>
    %cst_214 = arith.constant dense<0.000000e+00> : vector<16x8xf32>
    %302 = tpu.matmul %291, %301, %cst_214 {dimension_numbers = #tpu.dot_dimension_numbers<[1], [0], [0], [1], [0, 0, 1, 1], [], []>} : vector<16x32xbf16>, vector<32x8xbf16>, vector<16x8xf32> -> vector<16x8xf32>
    %c1_215 = arith.constant 1 : index
    %c0_216 = arith.constant 0 : index
    %c0_217 = arith.constant 0 : index
    %c0_218 = arith.constant 0 : index
    %303 = vector.load %arg8[%c1_215, %c0_216, %c0_217, %c0_218] : memref<2x4x1x8xf32, #tpu.memory_space<vmem>>, vector<1x1x1x8xf32>
    %304 = vector.shape_cast %303 : vector<1x1x1x8xf32> to vector<1x8xf32>
    %305 = vector.broadcast %304 : vector<1x8xf32> to vector<16x8xf32>
    %306 = arith.addf %302, %305 : vector<16x8xf32>
    %c1_219 = arith.constant 1 : index
    %c0_220 = arith.constant 0 : index
    %c0_221 = arith.constant 0 : index
    %c0_222 = arith.constant 0 : index
    %307 = vector.load %arg6[%c1_219, %c0_220, %c0_221, %c0_222] : memref<2x4x32x8xbf16, #tpu.memory_space<vmem>>, vector<1x1x32x8xbf16>
    %308 = vector.shape_cast %307 : vector<1x1x32x8xbf16> to vector<32x8xbf16>
    %cst_223 = arith.constant dense<0.000000e+00> : vector<16x8xf32>
    %309 = tpu.matmul %291, %308, %cst_223 {dimension_numbers = #tpu.dot_dimension_numbers<[1], [0], [0], [1], [0, 0, 1, 1], [], []>} : vector<16x32xbf16>, vector<32x8xbf16>, vector<16x8xf32> -> vector<16x8xf32>
    %c1_224 = arith.constant 1 : index
    %c0_225 = arith.constant 0 : index
    %c0_226 = arith.constant 0 : index
    %c0_227 = arith.constant 0 : index
    %310 = vector.load %arg9[%c1_224, %c0_225, %c0_226, %c0_227] : memref<2x4x1x8xf32, #tpu.memory_space<vmem>>, vector<1x1x1x8xf32>
    %311 = vector.shape_cast %310 : vector<1x1x1x8xf32> to vector<1x8xf32>
    %312 = vector.broadcast %311 : vector<1x8xf32> to vector<16x8xf32>
    %313 = arith.addf %309, %312 : vector<16x8xf32>
    %314 = arith.truncf %299 : vector<16x8xf32> to vector<16x8xbf16>
    %315 = arith.truncf %306 : vector<16x8xf32> to vector<16x8xbf16>
    "tpu.trace_start"() <{level = 10 : i32, message = "qd,kd->qk"}> : () -> ()
    %cst_228 = arith.constant dense<0.000000e+00> : vector<16x16xf32>
    %316 = tpu.matmul %314, %315, %cst_228 {dimension_numbers = #tpu.dot_dimension_numbers<[1], [1], [0], [0], [0, 0, 1, 0], [], []>} : vector<16x8xbf16>, vector<16x8xbf16>, vector<16x16xf32> -> vector<16x16xf32>
    "tpu.trace_stop"() : () -> ()
    %cst_229 = arith.constant 0.353553385 : f32
    %317 = vector.broadcast %cst_229 : f32 to vector<16x16xf32>
    %318 = arith.mulf %316, %317 : vector<16x16xf32>
    %319 = arith.addf %318, %0 : vector<16x16xf32>
    %cst_230 = arith.constant dense<0xFF800000> : vector<16xf32>
    %320 = vector.multi_reduction <maximumf>, %319, %cst_230 [1] : vector<16x16xf32> to vector<16xf32>
    %321 = vector.shape_cast %320 : vector<16xf32> to vector<16x1xf32>
    %322 = vector.broadcast %321 : vector<16x1xf32> to vector<16x16xf32>
    %323 = arith.subf %319, %322 : vector<16x16xf32>
    %324 = math.exp %323 : vector<16x16xf32>
    %cst_231 = arith.constant dense<0.000000e+00> : vector<16xf32>
    %325 = vector.multi_reduction <add>, %324, %cst_231 [1] : vector<16x16xf32> to vector<16xf32>
    %326 = vector.shape_cast %325 : vector<16xf32> to vector<16x1xf32>
    %327 = vector.broadcast %326 : vector<16x1xf32> to vector<16x16xf32>
    %328 = arith.divf %324, %327 : vector<16x16xf32>
    %329 = arith.truncf %328 : vector<16x16xf32> to vector<16x16xbf16>
    %330 = arith.truncf %313 : vector<16x8xf32> to vector<16x8xbf16>
    %cst_232 = arith.constant dense<0.000000e+00> : vector<16x8xf32>
    %331 = tpu.matmul %329, %330, %cst_232 {dimension_numbers = #tpu.dot_dimension_numbers<[1], [0], [0], [1], [0, 0, 1, 1], [], []>} : vector<16x16xbf16>, vector<16x8xbf16>, vector<16x8xf32> -> vector<16x8xf32>
    %332 = arith.truncf %331 : vector<16x8xf32> to vector<16x8xbf16>
    %c1_233 = arith.constant 1 : index
    %c0_234 = arith.constant 0 : index
    %c0_235 = arith.constant 0 : index
    %c0_236 = arith.constant 0 : index
    %333 = vector.load %arg10[%c1_233, %c0_234, %c0_235, %c0_236] : memref<2x4x8x32xbf16, #tpu.memory_space<vmem>>, vector<1x1x8x32xbf16>
    %334 = vector.shape_cast %333 : vector<1x1x8x32xbf16> to vector<8x32xbf16>
    %cst_237 = arith.constant dense<0.000000e+00> : vector<16x32xf32>
    %335 = tpu.matmul %332, %334, %cst_237 {dimension_numbers = #tpu.dot_dimension_numbers<[1], [0], [0], [1], [0, 0, 1, 1], [], []>} : vector<16x8xbf16>, vector<8x32xbf16>, vector<16x32xf32> -> vector<16x32xf32>
    %336 = arith.addf %292, %335 : vector<16x32xf32>
    %c1_238 = arith.constant 1 : index
    %c1_239 = arith.constant 1 : index
    %c0_240 = arith.constant 0 : index
    %c0_241 = arith.constant 0 : index
    %337 = vector.load %arg4[%c1_238, %c1_239, %c0_240, %c0_241] : memref<2x4x32x8xbf16, #tpu.memory_space<vmem>>, vector<1x1x32x8xbf16>
    %338 = vector.shape_cast %337 : vector<1x1x32x8xbf16> to vector<32x8xbf16>
    %cst_242 = arith.constant dense<0.000000e+00> : vector<16x8xf32>
    %339 = tpu.matmul %291, %338, %cst_242 {dimension_numbers = #tpu.dot_dimension_numbers<[1], [0], [0], [1], [0, 0, 1, 1], [], []>} : vector<16x32xbf16>, vector<32x8xbf16>, vector<16x8xf32> -> vector<16x8xf32>
    %c1_243 = arith.constant 1 : index
    %c1_244 = arith.constant 1 : index
    %c0_245 = arith.constant 0 : index
    %c0_246 = arith.constant 0 : index
    %340 = vector.load %arg7[%c1_243, %c1_244, %c0_245, %c0_246] : memref<2x4x1x8xf32, #tpu.memory_space<vmem>>, vector<1x1x1x8xf32>
    %341 = vector.shape_cast %340 : vector<1x1x1x8xf32> to vector<1x8xf32>
    %342 = vector.broadcast %341 : vector<1x8xf32> to vector<16x8xf32>
    %343 = arith.addf %339, %342 : vector<16x8xf32>
    %c1_247 = arith.constant 1 : index
    %c1_248 = arith.constant 1 : index
    %c0_249 = arith.constant 0 : index
    %c0_250 = arith.constant 0 : index
    %344 = vector.load %arg5[%c1_247, %c1_248, %c0_249, %c0_250] : memref<2x4x32x8xbf16, #tpu.memory_space<vmem>>, vector<1x1x32x8xbf16>
    %345 = vector.shape_cast %344 : vector<1x1x32x8xbf16> to vector<32x8xbf16>
    %cst_251 = arith.constant dense<0.000000e+00> : vector<16x8xf32>
    %346 = tpu.matmul %291, %345, %cst_251 {dimension_numbers = #tpu.dot_dimension_numbers<[1], [0], [0], [1], [0, 0, 1, 1], [], []>} : vector<16x32xbf16>, vector<32x8xbf16>, vector<16x8xf32> -> vector<16x8xf32>
    %c1_252 = arith.constant 1 : index
    %c1_253 = arith.constant 1 : index
    %c0_254 = arith.constant 0 : index
    %c0_255 = arith.constant 0 : index
    %347 = vector.load %arg8[%c1_252, %c1_253, %c0_254, %c0_255] : memref<2x4x1x8xf32, #tpu.memory_space<vmem>>, vector<1x1x1x8xf32>
    %348 = vector.shape_cast %347 : vector<1x1x1x8xf32> to vector<1x8xf32>
    %349 = vector.broadcast %348 : vector<1x8xf32> to vector<16x8xf32>
    %350 = arith.addf %346, %349 : vector<16x8xf32>
    %c1_256 = arith.constant 1 : index
    %c1_257 = arith.constant 1 : index
    %c0_258 = arith.constant 0 : index
    %c0_259 = arith.constant 0 : index
    %351 = vector.load %arg6[%c1_256, %c1_257, %c0_258, %c0_259] : memref<2x4x32x8xbf16, #tpu.memory_space<vmem>>, vector<1x1x32x8xbf16>
    %352 = vector.shape_cast %351 : vector<1x1x32x8xbf16> to vector<32x8xbf16>
    %cst_260 = arith.constant dense<0.000000e+00> : vector<16x8xf32>
    %353 = tpu.matmul %291, %352, %cst_260 {dimension_numbers = #tpu.dot_dimension_numbers<[1], [0], [0], [1], [0, 0, 1, 1], [], []>} : vector<16x32xbf16>, vector<32x8xbf16>, vector<16x8xf32> -> vector<16x8xf32>
    %c1_261 = arith.constant 1 : index
    %c1_262 = arith.constant 1 : index
    %c0_263 = arith.constant 0 : index
    %c0_264 = arith.constant 0 : index
    %354 = vector.load %arg9[%c1_261, %c1_262, %c0_263, %c0_264] : memref<2x4x1x8xf32, #tpu.memory_space<vmem>>, vector<1x1x1x8xf32>
    %355 = vector.shape_cast %354 : vector<1x1x1x8xf32> to vector<1x8xf32>
    %356 = vector.broadcast %355 : vector<1x8xf32> to vector<16x8xf32>
    %357 = arith.addf %353, %356 : vector<16x8xf32>
    %358 = arith.truncf %343 : vector<16x8xf32> to vector<16x8xbf16>
    %359 = arith.truncf %350 : vector<16x8xf32> to vector<16x8xbf16>
    "tpu.trace_start"() <{level = 10 : i32, message = "qd,kd->qk"}> : () -> ()
    %cst_265 = arith.constant dense<0.000000e+00> : vector<16x16xf32>
    %360 = tpu.matmul %358, %359, %cst_265 {dimension_numbers = #tpu.dot_dimension_numbers<[1], [1], [0], [0], [0, 0, 1, 0], [], []>} : vector<16x8xbf16>, vector<16x8xbf16>, vector<16x16xf32> -> vector<16x16xf32>
    "tpu.trace_stop"() : () -> ()
    %cst_266 = arith.constant 0.353553385 : f32
    %361 = vector.broadcast %cst_266 : f32 to vector<16x16xf32>
    %362 = arith.mulf %360, %361 : vector<16x16xf32>
    %363 = arith.addf %362, %0 : vector<16x16xf32>
    %cst_267 = arith.constant dense<0xFF800000> : vector<16xf32>
    %364 = vector.multi_reduction <maximumf>, %363, %cst_267 [1] : vector<16x16xf32> to vector<16xf32>
    %365 = vector.shape_cast %364 : vector<16xf32> to vector<16x1xf32>
    %366 = vector.broadcast %365 : vector<16x1xf32> to vector<16x16xf32>
    %367 = arith.subf %363, %366 : vector<16x16xf32>
    %368 = math.exp %367 : vector<16x16xf32>
    %cst_268 = arith.constant dense<0.000000e+00> : vector<16xf32>
    %369 = vector.multi_reduction <add>, %368, %cst_268 [1] : vector<16x16xf32> to vector<16xf32>
    %370 = vector.shape_cast %369 : vector<16xf32> to vector<16x1xf32>
    %371 = vector.broadcast %370 : vector<16x1xf32> to vector<16x16xf32>
    %372 = arith.divf %368, %371 : vector<16x16xf32>
    %373 = arith.truncf %372 : vector<16x16xf32> to vector<16x16xbf16>
    %374 = arith.truncf %357 : vector<16x8xf32> to vector<16x8xbf16>
    %cst_269 = arith.constant dense<0.000000e+00> : vector<16x8xf32>
    %375 = tpu.matmul %373, %374, %cst_269 {dimension_numbers = #tpu.dot_dimension_numbers<[1], [0], [0], [1], [0, 0, 1, 1], [], []>} : vector<16x16xbf16>, vector<16x8xbf16>, vector<16x8xf32> -> vector<16x8xf32>
    %376 = arith.truncf %375 : vector<16x8xf32> to vector<16x8xbf16>
    %c1_270 = arith.constant 1 : index
    %c1_271 = arith.constant 1 : index
    %c0_272 = arith.constant 0 : index
    %c0_273 = arith.constant 0 : index
    %377 = vector.load %arg10[%c1_270, %c1_271, %c0_272, %c0_273] : memref<2x4x8x32xbf16, #tpu.memory_space<vmem>>, vector<1x1x8x32xbf16>
    %378 = vector.shape_cast %377 : vector<1x1x8x32xbf16> to vector<8x32xbf16>
    %cst_274 = arith.constant dense<0.000000e+00> : vector<16x32xf32>
    %379 = tpu.matmul %376, %378, %cst_274 {dimension_numbers = #tpu.dot_dimension_numbers<[1], [0], [0], [1], [0, 0, 1, 1], [], []>} : vector<16x8xbf16>, vector<8x32xbf16>, vector<16x32xf32> -> vector<16x32xf32>
    %380 = arith.addf %336, %379 : vector<16x32xf32>
    %c1_275 = arith.constant 1 : index
    %c2_276 = arith.constant 2 : index
    %c0_277 = arith.constant 0 : index
    %c0_278 = arith.constant 0 : index
    %381 = vector.load %arg4[%c1_275, %c2_276, %c0_277, %c0_278] : memref<2x4x32x8xbf16, #tpu.memory_space<vmem>>, vector<1x1x32x8xbf16>
    %382 = vector.shape_cast %381 : vector<1x1x32x8xbf16> to vector<32x8xbf16>
    %cst_279 = arith.constant dense<0.000000e+00> : vector<16x8xf32>
    %383 = tpu.matmul %291, %382, %cst_279 {dimension_numbers = #tpu.dot_dimension_numbers<[1], [0], [0], [1], [0, 0, 1, 1], [], []>} : vector<16x32xbf16>, vector<32x8xbf16>, vector<16x8xf32> -> vector<16x8xf32>
    %c1_280 = arith.constant 1 : index
    %c2_281 = arith.constant 2 : index
    %c0_282 = arith.constant 0 : index
    %c0_283 = arith.constant 0 : index
    %384 = vector.load %arg7[%c1_280, %c2_281, %c0_282, %c0_283] : memref<2x4x1x8xf32, #tpu.memory_space<vmem>>, vector<1x1x1x8xf32>
    %385 = vector.shape_cast %384 : vector<1x1x1x8xf32> to vector<1x8xf32>
    %386 = vector.broadcast %385 : vector<1x8xf32> to vector<16x8xf32>
    %387 = arith.addf %383, %386 : vector<16x8xf32>
    %c1_284 = arith.constant 1 : index
    %c2_285 = arith.constant 2 : index
    %c0_286 = arith.constant 0 : index
    %c0_287 = arith.constant 0 : index
    %388 = vector.load %arg5[%c1_284, %c2_285, %c0_286, %c0_287] : memref<2x4x32x8xbf16, #tpu.memory_space<vmem>>, vector<1x1x32x8xbf16>
    %389 = vector.shape_cast %388 : vector<1x1x32x8xbf16> to vector<32x8xbf16>
    %cst_288 = arith.constant dense<0.000000e+00> : vector<16x8xf32>
    %390 = tpu.matmul %291, %389, %cst_288 {dimension_numbers = #tpu.dot_dimension_numbers<[1], [0], [0], [1], [0, 0, 1, 1], [], []>} : vector<16x32xbf16>, vector<32x8xbf16>, vector<16x8xf32> -> vector<16x8xf32>
    %c1_289 = arith.constant 1 : index
    %c2_290 = arith.constant 2 : index
    %c0_291 = arith.constant 0 : index
    %c0_292 = arith.constant 0 : index
    %391 = vector.load %arg8[%c1_289, %c2_290, %c0_291, %c0_292] : memref<2x4x1x8xf32, #tpu.memory_space<vmem>>, vector<1x1x1x8xf32>
    %392 = vector.shape_cast %391 : vector<1x1x1x8xf32> to vector<1x8xf32>
    %393 = vector.broadcast %392 : vector<1x8xf32> to vector<16x8xf32>
    %394 = arith.addf %390, %393 : vector<16x8xf32>
    %c1_293 = arith.constant 1 : index
    %c2_294 = arith.constant 2 : index
    %c0_295 = arith.constant 0 : index
    %c0_296 = arith.constant 0 : index
    %395 = vector.load %arg6[%c1_293, %c2_294, %c0_295, %c0_296] : memref<2x4x32x8xbf16, #tpu.memory_space<vmem>>, vector<1x1x32x8xbf16>
    %396 = vector.shape_cast %395 : vector<1x1x32x8xbf16> to vector<32x8xbf16>
    %cst_297 = arith.constant dense<0.000000e+00> : vector<16x8xf32>
    %397 = tpu.matmul %291, %396, %cst_297 {dimension_numbers = #tpu.dot_dimension_numbers<[1], [0], [0], [1], [0, 0, 1, 1], [], []>} : vector<16x32xbf16>, vector<32x8xbf16>, vector<16x8xf32> -> vector<16x8xf32>
    %c1_298 = arith.constant 1 : index
    %c2_299 = arith.constant 2 : index
    %c0_300 = arith.constant 0 : index
    %c0_301 = arith.constant 0 : index
    %398 = vector.load %arg9[%c1_298, %c2_299, %c0_300, %c0_301] : memref<2x4x1x8xf32, #tpu.memory_space<vmem>>, vector<1x1x1x8xf32>
    %399 = vector.shape_cast %398 : vector<1x1x1x8xf32> to vector<1x8xf32>
    %400 = vector.broadcast %399 : vector<1x8xf32> to vector<16x8xf32>
    %401 = arith.addf %397, %400 : vector<16x8xf32>
    %402 = arith.truncf %387 : vector<16x8xf32> to vector<16x8xbf16>
    %403 = arith.truncf %394 : vector<16x8xf32> to vector<16x8xbf16>
    "tpu.trace_start"() <{level = 10 : i32, message = "qd,kd->qk"}> : () -> ()
    %cst_302 = arith.constant dense<0.000000e+00> : vector<16x16xf32>
    %404 = tpu.matmul %402, %403, %cst_302 {dimension_numbers = #tpu.dot_dimension_numbers<[1], [1], [0], [0], [0, 0, 1, 0], [], []>} : vector<16x8xbf16>, vector<16x8xbf16>, vector<16x16xf32> -> vector<16x16xf32>
    "tpu.trace_stop"() : () -> ()
    %cst_303 = arith.constant 0.353553385 : f32
    %405 = vector.broadcast %cst_303 : f32 to vector<16x16xf32>
    %406 = arith.mulf %404, %405 : vector<16x16xf32>
    %407 = arith.addf %406, %0 : vector<16x16xf32>
    %cst_304 = arith.constant dense<0xFF800000> : vector<16xf32>
    %408 = vector.multi_reduction <maximumf>, %407, %cst_304 [1] : vector<16x16xf32> to vector<16xf32>
    %409 = vector.shape_cast %408 : vector<16xf32> to vector<16x1xf32>
    %410 = vector.broadcast %409 : vector<16x1xf32> to vector<16x16xf32>
    %411 = arith.subf %407, %410 : vector<16x16xf32>
    %412 = math.exp %411 : vector<16x16xf32>
    %cst_305 = arith.constant dense<0.000000e+00> : vector<16xf32>
    %413 = vector.multi_reduction <add>, %412, %cst_305 [1] : vector<16x16xf32> to vector<16xf32>
    %414 = vector.shape_cast %413 : vector<16xf32> to vector<16x1xf32>
    %415 = vector.broadcast %414 : vector<16x1xf32> to vector<16x16xf32>
    %416 = arith.divf %412, %415 : vector<16x16xf32>
    %417 = arith.truncf %416 : vector<16x16xf32> to vector<16x16xbf16>
    %418 = arith.truncf %401 : vector<16x8xf32> to vector<16x8xbf16>
    %cst_306 = arith.constant dense<0.000000e+00> : vector<16x8xf32>
    %419 = tpu.matmul %417, %418, %cst_306 {dimension_numbers = #tpu.dot_dimension_numbers<[1], [0], [0], [1], [0, 0, 1, 1], [], []>} : vector<16x16xbf16>, vector<16x8xbf16>, vector<16x8xf32> -> vector<16x8xf32>
    %420 = arith.truncf %419 : vector<16x8xf32> to vector<16x8xbf16>
    %c1_307 = arith.constant 1 : index
    %c2_308 = arith.constant 2 : index
    %c0_309 = arith.constant 0 : index
    %c0_310 = arith.constant 0 : index
    %421 = vector.load %arg10[%c1_307, %c2_308, %c0_309, %c0_310] : memref<2x4x8x32xbf16, #tpu.memory_space<vmem>>, vector<1x1x8x32xbf16>
    %422 = vector.shape_cast %421 : vector<1x1x8x32xbf16> to vector<8x32xbf16>
    %cst_311 = arith.constant dense<0.000000e+00> : vector<16x32xf32>
    %423 = tpu.matmul %420, %422, %cst_311 {dimension_numbers = #tpu.dot_dimension_numbers<[1], [0], [0], [1], [0, 0, 1, 1], [], []>} : vector<16x8xbf16>, vector<8x32xbf16>, vector<16x32xf32> -> vector<16x32xf32>
    %424 = arith.addf %380, %423 : vector<16x32xf32>
    %c1_312 = arith.constant 1 : index
    %c3_313 = arith.constant 3 : index
    %c0_314 = arith.constant 0 : index
    %c0_315 = arith.constant 0 : index
    %425 = vector.load %arg4[%c1_312, %c3_313, %c0_314, %c0_315] : memref<2x4x32x8xbf16, #tpu.memory_space<vmem>>, vector<1x1x32x8xbf16>
    %426 = vector.shape_cast %425 : vector<1x1x32x8xbf16> to vector<32x8xbf16>
    %cst_316 = arith.constant dense<0.000000e+00> : vector<16x8xf32>
    %427 = tpu.matmul %291, %426, %cst_316 {dimension_numbers = #tpu.dot_dimension_numbers<[1], [0], [0], [1], [0, 0, 1, 1], [], []>} : vector<16x32xbf16>, vector<32x8xbf16>, vector<16x8xf32> -> vector<16x8xf32>
    %c1_317 = arith.constant 1 : index
    %c3_318 = arith.constant 3 : index
    %c0_319 = arith.constant 0 : index
    %c0_320 = arith.constant 0 : index
    %428 = vector.load %arg7[%c1_317, %c3_318, %c0_319, %c0_320] : memref<2x4x1x8xf32, #tpu.memory_space<vmem>>, vector<1x1x1x8xf32>
    %429 = vector.shape_cast %428 : vector<1x1x1x8xf32> to vector<1x8xf32>
    %430 = vector.broadcast %429 : vector<1x8xf32> to vector<16x8xf32>
    %431 = arith.addf %427, %430 : vector<16x8xf32>
    %c1_321 = arith.constant 1 : index
    %c3_322 = arith.constant 3 : index
    %c0_323 = arith.constant 0 : index
    %c0_324 = arith.constant 0 : index
    %432 = vector.load %arg5[%c1_321, %c3_322, %c0_323, %c0_324] : memref<2x4x32x8xbf16, #tpu.memory_space<vmem>>, vector<1x1x32x8xbf16>
    %433 = vector.shape_cast %432 : vector<1x1x32x8xbf16> to vector<32x8xbf16>
    %cst_325 = arith.constant dense<0.000000e+00> : vector<16x8xf32>
    %434 = tpu.matmul %291, %433, %cst_325 {dimension_numbers = #tpu.dot_dimension_numbers<[1], [0], [0], [1], [0, 0, 1, 1], [], []>} : vector<16x32xbf16>, vector<32x8xbf16>, vector<16x8xf32> -> vector<16x8xf32>
    %c1_326 = arith.constant 1 : index
    %c3_327 = arith.constant 3 : index
    %c0_328 = arith.constant 0 : index
    %c0_329 = arith.constant 0 : index
    %435 = vector.load %arg8[%c1_326, %c3_327, %c0_328, %c0_329] : memref<2x4x1x8xf32, #tpu.memory_space<vmem>>, vector<1x1x1x8xf32>
    %436 = vector.shape_cast %435 : vector<1x1x1x8xf32> to vector<1x8xf32>
    %437 = vector.broadcast %436 : vector<1x8xf32> to vector<16x8xf32>
    %438 = arith.addf %434, %437 : vector<16x8xf32>
    %c1_330 = arith.constant 1 : index
    %c3_331 = arith.constant 3 : index
    %c0_332 = arith.constant 0 : index
    %c0_333 = arith.constant 0 : index
    %439 = vector.load %arg6[%c1_330, %c3_331, %c0_332, %c0_333] : memref<2x4x32x8xbf16, #tpu.memory_space<vmem>>, vector<1x1x32x8xbf16>
    %440 = vector.shape_cast %439 : vector<1x1x32x8xbf16> to vector<32x8xbf16>
    %cst_334 = arith.constant dense<0.000000e+00> : vector<16x8xf32>
    %441 = tpu.matmul %291, %440, %cst_334 {dimension_numbers = #tpu.dot_dimension_numbers<[1], [0], [0], [1], [0, 0, 1, 1], [], []>} : vector<16x32xbf16>, vector<32x8xbf16>, vector<16x8xf32> -> vector<16x8xf32>
    %c1_335 = arith.constant 1 : index
    %c3_336 = arith.constant 3 : index
    %c0_337 = arith.constant 0 : index
    %c0_338 = arith.constant 0 : index
    %442 = vector.load %arg9[%c1_335, %c3_336, %c0_337, %c0_338] : memref<2x4x1x8xf32, #tpu.memory_space<vmem>>, vector<1x1x1x8xf32>
    %443 = vector.shape_cast %442 : vector<1x1x1x8xf32> to vector<1x8xf32>
    %444 = vector.broadcast %443 : vector<1x8xf32> to vector<16x8xf32>
    %445 = arith.addf %441, %444 : vector<16x8xf32>
    %446 = arith.truncf %431 : vector<16x8xf32> to vector<16x8xbf16>
    %447 = arith.truncf %438 : vector<16x8xf32> to vector<16x8xbf16>
    "tpu.trace_start"() <{level = 10 : i32, message = "qd,kd->qk"}> : () -> ()
    %cst_339 = arith.constant dense<0.000000e+00> : vector<16x16xf32>
    %448 = tpu.matmul %446, %447, %cst_339 {dimension_numbers = #tpu.dot_dimension_numbers<[1], [1], [0], [0], [0, 0, 1, 0], [], []>} : vector<16x8xbf16>, vector<16x8xbf16>, vector<16x16xf32> -> vector<16x16xf32>
    "tpu.trace_stop"() : () -> ()
    %cst_340 = arith.constant 0.353553385 : f32
    %449 = vector.broadcast %cst_340 : f32 to vector<16x16xf32>
    %450 = arith.mulf %448, %449 : vector<16x16xf32>
    %451 = arith.addf %450, %0 : vector<16x16xf32>
    %cst_341 = arith.constant dense<0xFF800000> : vector<16xf32>
    %452 = vector.multi_reduction <maximumf>, %451, %cst_341 [1] : vector<16x16xf32> to vector<16xf32>
    %453 = vector.shape_cast %452 : vector<16xf32> to vector<16x1xf32>
    %454 = vector.broadcast %453 : vector<16x1xf32> to vector<16x16xf32>
    %455 = arith.subf %451, %454 : vector<16x16xf32>
    %456 = math.exp %455 : vector<16x16xf32>
    %cst_342 = arith.constant dense<0.000000e+00> : vector<16xf32>
    %457 = vector.multi_reduction <add>, %456, %cst_342 [1] : vector<16x16xf32> to vector<16xf32>
    %458 = vector.shape_cast %457 : vector<16xf32> to vector<16x1xf32>
    %459 = vector.broadcast %458 : vector<16x1xf32> to vector<16x16xf32>
    %460 = arith.divf %456, %459 : vector<16x16xf32>
    %461 = arith.truncf %460 : vector<16x16xf32> to vector<16x16xbf16>
    %462 = arith.truncf %445 : vector<16x8xf32> to vector<16x8xbf16>
    %cst_343 = arith.constant dense<0.000000e+00> : vector<16x8xf32>
    %463 = tpu.matmul %461, %462, %cst_343 {dimension_numbers = #tpu.dot_dimension_numbers<[1], [0], [0], [1], [0, 0, 1, 1], [], []>} : vector<16x16xbf16>, vector<16x8xbf16>, vector<16x8xf32> -> vector<16x8xf32>
    %464 = arith.truncf %463 : vector<16x8xf32> to vector<16x8xbf16>
    %c1_344 = arith.constant 1 : index
    %c3_345 = arith.constant 3 : index
    %c0_346 = arith.constant 0 : index
    %c0_347 = arith.constant 0 : index
    %465 = vector.load %arg10[%c1_344, %c3_345, %c0_346, %c0_347] : memref<2x4x8x32xbf16, #tpu.memory_space<vmem>>, vector<1x1x8x32xbf16>
    %466 = vector.shape_cast %465 : vector<1x1x8x32xbf16> to vector<8x32xbf16>
    %cst_348 = arith.constant dense<0.000000e+00> : vector<16x32xf32>
    %467 = tpu.matmul %464, %466, %cst_348 {dimension_numbers = #tpu.dot_dimension_numbers<[1], [0], [0], [1], [0, 0, 1, 1], [], []>} : vector<16x8xbf16>, vector<8x32xbf16>, vector<16x32xf32> -> vector<16x32xf32>
    %468 = arith.addf %424, %467 : vector<16x32xf32>
    %c1_349 = arith.constant 1 : index
    %c0_350 = arith.constant 0 : index
    %c0_351 = arith.constant 0 : index
    %469 = vector.load %arg11[%c1_349, %c0_350, %c0_351] : memref<2x1x32xf32, #tpu.memory_space<vmem>>, vector<1x1x32xf32>
    %470 = vector.shape_cast %469 : vector<1x1x32xf32> to vector<1x32xf32>
    %471 = vector.broadcast %470 : vector<1x32xf32> to vector<16x32xf32>
    %472 = arith.addf %468, %471 : vector<16x32xf32>
    %473 = arith.addf %472, %290 : vector<16x32xf32>
    %c1_352 = arith.constant 1 : index
    %c0_353 = arith.constant 0 : index
    %c0_354 = arith.constant 0 : index
    %474 = vector.load %arg12[%c1_352, %c0_353, %c0_354] : memref<2x1x32xf32, #tpu.memory_space<vmem>>, vector<1x1x32xf32>
    %475 = vector.shape_cast %474 : vector<1x1x32xf32> to vector<1x32xf32>
    %c1_355 = arith.constant 1 : index
    %c0_356 = arith.constant 0 : index
    %c0_357 = arith.constant 0 : index
    %476 = vector.load %arg13[%c1_355, %c0_356, %c0_357] : memref<2x1x32xf32, #tpu.memory_space<vmem>>, vector<1x1x32xf32>
    %477 = vector.shape_cast %476 : vector<1x1x32xf32> to vector<1x32xf32>
    %cst_358 = arith.constant dense<0.000000e+00> : vector<16xf32>
    %478 = vector.multi_reduction <add>, %473, %cst_358 [1] : vector<16x32xf32> to vector<16xf32>
    %479 = vector.shape_cast %478 : vector<16xf32> to vector<16x1xf32>
    %cst_359 = arith.constant 3.200000e+01 : f32
    %480 = vector.broadcast %cst_359 : f32 to vector<16x1xf32>
    %481 = arith.divf %479, %480 : vector<16x1xf32>
    %482 = vector.broadcast %481 : vector<16x1xf32> to vector<16x32xf32>
    %483 = arith.subf %473, %482 : vector<16x32xf32>
    %484 = arith.mulf %483, %483 : vector<16x32xf32>
    %cst_360 = arith.constant dense<0.000000e+00> : vector<16xf32>
    %485 = vector.multi_reduction <add>, %484, %cst_360 [1] : vector<16x32xf32> to vector<16xf32>
    %486 = vector.shape_cast %485 : vector<16xf32> to vector<16x1xf32>
    %cst_361 = arith.constant 3.200000e+01 : f32
    %487 = vector.broadcast %cst_361 : f32 to vector<16x1xf32>
    %488 = arith.divf %486, %487 : vector<16x1xf32>
    %489 = vector.broadcast %481 : vector<16x1xf32> to vector<16x32xf32>
    %490 = arith.subf %473, %489 : vector<16x32xf32>
    %cst_362 = arith.constant 9.99999996E-13 : f32
    %491 = vector.broadcast %cst_362 : f32 to vector<16x1xf32>
    %492 = arith.addf %488, %491 : vector<16x1xf32>
    %493 = math.rsqrt %492 : vector<16x1xf32>
    %494 = vector.broadcast %493 : vector<16x1xf32> to vector<16x32xf32>
    %495 = arith.mulf %490, %494 : vector<16x32xf32>
    %496 = vector.broadcast %475 : vector<1x32xf32> to vector<16x32xf32>
    %497 = arith.mulf %495, %496 : vector<16x32xf32>
    %498 = vector.broadcast %477 : vector<1x32xf32> to vector<16x32xf32>
    %499 = arith.addf %497, %498 : vector<16x32xf32>
    %500 = arith.truncf %499 : vector<16x32xf32> to vector<16x32xbf16>
    %c1_363 = arith.constant 1 : index
    %c0_364 = arith.constant 0 : index
    %c0_365 = arith.constant 0 : index
    %501 = vector.load %arg14[%c1_363, %c0_364, %c0_365] : memref<2x32x64xbf16, #tpu.memory_space<vmem>>, vector<1x32x64xbf16>
    %502 = vector.shape_cast %501 : vector<1x32x64xbf16> to vector<32x64xbf16>
    %cst_366 = arith.constant dense<0.000000e+00> : vector<16x64xf32>
    %503 = tpu.matmul %500, %502, %cst_366 {dimension_numbers = #tpu.dot_dimension_numbers<[1], [0], [0], [1], [0, 0, 1, 1], [], []>} : vector<16x32xbf16>, vector<32x64xbf16>, vector<16x64xf32> -> vector<16x64xf32>
    %c1_367 = arith.constant 1 : index
    %c0_368 = arith.constant 0 : index
    %c0_369 = arith.constant 0 : index
    %504 = vector.load %arg15[%c1_367, %c0_368, %c0_369] : memref<2x1x64xf32, #tpu.memory_space<vmem>>, vector<1x1x64xf32>
    %505 = vector.shape_cast %504 : vector<1x1x64xf32> to vector<1x64xf32>
    %506 = vector.broadcast %505 : vector<1x64xf32> to vector<16x64xf32>
    %507 = arith.addf %503, %506 : vector<16x64xf32>
    %508 = arith.mulf %507, %507 : vector<16x64xf32>
    %509 = arith.mulf %507, %508 : vector<16x64xf32>
    %cst_370 = arith.constant 4.471500e-02 : f32
    %510 = vector.broadcast %cst_370 : f32 to vector<16x64xf32>
    %511 = arith.mulf %510, %509 : vector<16x64xf32>
    %512 = arith.addf %507, %511 : vector<16x64xf32>
    %cst_371 = arith.constant 0.797884583 : f32
    %513 = vector.broadcast %cst_371 : f32 to vector<16x64xf32>
    %514 = arith.mulf %513, %512 : vector<16x64xf32>
    %515 = math.tanh %514 : vector<16x64xf32>
    %cst_372 = arith.constant 1.000000e+00 : f32
    %516 = vector.broadcast %cst_372 : f32 to vector<16x64xf32>
    %517 = arith.addf %516, %515 : vector<16x64xf32>
    %cst_373 = arith.constant 5.000000e-01 : f32
    %518 = vector.broadcast %cst_373 : f32 to vector<16x64xf32>
    %519 = arith.mulf %518, %517 : vector<16x64xf32>
    %520 = arith.mulf %507, %519 : vector<16x64xf32>
    %521 = arith.truncf %520 : vector<16x64xf32> to vector<16x64xbf16>
    %c1_374 = arith.constant 1 : index
    %c0_375 = arith.constant 0 : index
    %c0_376 = arith.constant 0 : index
    %522 = vector.load %arg16[%c1_374, %c0_375, %c0_376] : memref<2x64x32xbf16, #tpu.memory_space<vmem>>, vector<1x64x32xbf16>
    %523 = vector.shape_cast %522 : vector<1x64x32xbf16> to vector<64x32xbf16>
    %cst_377 = arith.constant dense<0.000000e+00> : vector<16x32xf32>
    %524 = tpu.matmul %521, %523, %cst_377 {dimension_numbers = #tpu.dot_dimension_numbers<[1], [0], [0], [1], [0, 0, 1, 1], [], []>} : vector<16x64xbf16>, vector<64x32xbf16>, vector<16x32xf32> -> vector<16x32xf32>
    %c1_378 = arith.constant 1 : index
    %c0_379 = arith.constant 0 : index
    %c0_380 = arith.constant 0 : index
    %525 = vector.load %arg17[%c1_378, %c0_379, %c0_380] : memref<2x1x32xf32, #tpu.memory_space<vmem>>, vector<1x1x32xf32>
    %526 = vector.shape_cast %525 : vector<1x1x32xf32> to vector<1x32xf32>
    %527 = vector.broadcast %526 : vector<1x32xf32> to vector<16x32xf32>
    %528 = arith.addf %524, %527 : vector<16x32xf32>
    %529 = arith.addf %528, %499 : vector<16x32xf32>
    %c1_381 = arith.constant 1 : index
    %c0_382 = arith.constant 0 : index
    %c0_383 = arith.constant 0 : index
    %530 = vector.load %arg18[%c1_381, %c0_382, %c0_383] : memref<2x1x32xf32, #tpu.memory_space<vmem>>, vector<1x1x32xf32>
    %531 = vector.shape_cast %530 : vector<1x1x32xf32> to vector<1x32xf32>
    %c1_384 = arith.constant 1 : index
    %c0_385 = arith.constant 0 : index
    %c0_386 = arith.constant 0 : index
    %532 = vector.load %arg19[%c1_384, %c0_385, %c0_386] : memref<2x1x32xf32, #tpu.memory_space<vmem>>, vector<1x1x32xf32>
    %533 = vector.shape_cast %532 : vector<1x1x32xf32> to vector<1x32xf32>
    %cst_387 = arith.constant dense<0.000000e+00> : vector<16xf32>
    %534 = vector.multi_reduction <add>, %529, %cst_387 [1] : vector<16x32xf32> to vector<16xf32>
    %535 = vector.shape_cast %534 : vector<16xf32> to vector<16x1xf32>
    %cst_388 = arith.constant 3.200000e+01 : f32
    %536 = vector.broadcast %cst_388 : f32 to vector<16x1xf32>
    %537 = arith.divf %535, %536 : vector<16x1xf32>
    %538 = vector.broadcast %537 : vector<16x1xf32> to vector<16x32xf32>
    %539 = arith.subf %529, %538 : vector<16x32xf32>
    %540 = arith.mulf %539, %539 : vector<16x32xf32>
    %cst_389 = arith.constant dense<0.000000e+00> : vector<16xf32>
    %541 = vector.multi_reduction <add>, %540, %cst_389 [1] : vector<16x32xf32> to vector<16xf32>
    %542 = vector.shape_cast %541 : vector<16xf32> to vector<16x1xf32>
    %cst_390 = arith.constant 3.200000e+01 : f32
    %543 = vector.broadcast %cst_390 : f32 to vector<16x1xf32>
    %544 = arith.divf %542, %543 : vector<16x1xf32>
    %545 = vector.broadcast %537 : vector<16x1xf32> to vector<16x32xf32>
    %546 = arith.subf %529, %545 : vector<16x32xf32>
    %cst_391 = arith.constant 9.99999996E-13 : f32
    %547 = vector.broadcast %cst_391 : f32 to vector<16x1xf32>
    %548 = arith.addf %544, %547 : vector<16x1xf32>
    %549 = math.rsqrt %548 : vector<16x1xf32>
    %550 = vector.broadcast %549 : vector<16x1xf32> to vector<16x32xf32>
    %551 = arith.mulf %546, %550 : vector<16x32xf32>
    %552 = vector.broadcast %531 : vector<1x32xf32> to vector<16x32xf32>
    %553 = arith.mulf %551, %552 : vector<16x32xf32>
    %554 = vector.broadcast %533 : vector<1x32xf32> to vector<16x32xf32>
    %555 = arith.addf %553, %554 : vector<16x32xf32>
    %c0_392 = arith.constant 0 : index
    %c0_393 = arith.constant 0 : index
    %556 = vector.load %arg22[%c0_392, %c0_393] : memref<16x32xf32, #tpu.memory_space<vmem>>, vector<16x32xf32>
    tpu.vector_store %arg22[%c0_392, %c0_393], %555 {strides = array<i32>} : memref<16x32xf32, #tpu.memory_space<vmem>>, vector<16x32xf32>,
    %557 = vector.extract_strided_slice %555 {offsets = [0, 0], sizes = [1, 32], strides = [1, 1]} : vector<16x32xf32> to vector<1x32xf32>
    %558 = vector.extract_strided_slice %555 {offsets = [8, 0], sizes = [1, 32], strides = [1, 1]} : vector<16x32xf32> to vector<1x32xf32>
    %559 = tpu.concatenate %557, %558 in 0 : vector<1x32xf32>, vector<1x32xf32> -> vector<2x32xf32>
    %560 = arith.truncf %559 : vector<2x32xf32> to vector<2x32xbf16>
    %c0_394 = arith.constant 0 : index
    %c0_395 = arith.constant 0 : index
    %561 = vector.load %arg20[%c0_394, %c0_395] : memref<32x128xbf16, #tpu.memory_space<vmem>>, vector<32x128xbf16>
    %cst_396 = arith.constant dense<0.000000e+00> : vector<2x128xf32>
    %562 = tpu.matmul %560, %561, %cst_396 {dimension_numbers = #tpu.dot_dimension_numbers<[1], [0], [0], [1], [0, 0, 1, 1], [], []>} : vector<2x32xbf16>, vector<32x128xbf16>, vector<2x128xf32> -> vector<2x128xf32>
    %c0_397 = arith.constant 0 : index
    %c0_398 = arith.constant 0 : index
    %563 = vector.load %arg21[%c0_397, %c0_398] : memref<1x128xf32, #tpu.memory_space<vmem>>, vector<1x128xf32>
    %564 = vector.broadcast %563 : vector<1x128xf32> to vector<2x128xf32>
    %565 = arith.addf %562, %564 : vector<2x128xf32>
    %c0_399 = arith.constant 0 : index
    %c0_400 = arith.constant 0 : index
    %566 = vector.load %arg23[%c0_399, %c0_400] : memref<2x128xf32, #tpu.memory_space<vmem>>, vector<2x128xf32>
    tpu.vector_store %arg23[%c0_399, %c0_400], %565 {strides = array<i32>} : memref<2x128xf32, #tpu.memory_space<vmem>>, vector<2x128xf32>,
    return
  }
}

</mosaic_0001>

<llo_original>
// kernel: newsnet_forward.1
$region0: #{newsnet_forward.1}
  #allocation0 [shape = 'u32[]', space=smem, size = 0x4, offset = 0x4, fixed_abs, tag = 'smem constant byte address 0x4 - core index']
  #allocation1 [shape = 'u32[144,128]{1,0:T(1,128)}', space=vmem, size = 0x12000, scoped, tag = 'internal scratch']
  %s0 = inlined_call_operand.vmem [shape: f32[16,32], index: 0, kind: input, shape index: {}]
  %s1 = inlined_call_operand.vmem [shape: f32[16,16], index: 1, kind: input, shape index: {}]
  %s2 = inlined_call_operand.vmem [shape: f32[1,32], index: 2, kind: input, shape index: {}]
  %s3 = inlined_call_operand.vmem [shape: f32[1,32], index: 3, kind: input, shape index: {}]
  %s4 = inlined_call_operand.vmem [shape: bf16[2,4,32,8], index: 4, kind: input, shape index: {}]
  %s5 = inlined_call_operand.vmem [shape: bf16[2,4,32,8], index: 5, kind: input, shape index: {}]
  %s6 = inlined_call_operand.vmem [shape: bf16[2,4,32,8], index: 6, kind: input, shape index: {}]
  %s7 = inlined_call_operand.vmem [shape: f32[2,4,1,8], index: 7, kind: input, shape index: {}]
  %s8 = inlined_call_operand.vmem [shape: f32[2,4,1,8], index: 8, kind: input, shape index: {}]
  %s9 = inlined_call_operand.vmem [shape: f32[2,4,1,8], index: 9, kind: input, shape index: {}]
  %s10 = inlined_call_operand.vmem [shape: bf16[2,4,8,32], index: 10, kind: input, shape index: {}]
  %s11 = inlined_call_operand.vmem [shape: f32[2,1,32], index: 11, kind: input, shape index: {}]
  %s12 = inlined_call_operand.vmem [shape: f32[2,1,32], index: 12, kind: input, shape index: {}]
  %s13 = inlined_call_operand.vmem [shape: f32[2,1,32], index: 13, kind: input, shape index: {}]
  %s14 = inlined_call_operand.vmem [shape: bf16[2,32,64], index: 14, kind: input, shape index: {}]
  %s15 = inlined_call_operand.vmem [shape: f32[2,1,64], index: 15, kind: input, shape index: {}]
  %s16 = inlined_call_operand.vmem [shape: bf16[2,64,32], index: 16, kind: input, shape index: {}]
  %s17 = inlined_call_operand.vmem [shape: f32[2,1,32], index: 17, kind: input, shape index: {}]
  %s18 = inlined_call_operand.vmem [shape: f32[2,1,32], index: 18, kind: input, shape index: {}]
  %s19 = inlined_call_operand.vmem [shape: f32[2,1,32], index: 19, kind: input, shape index: {}]
  %s20 = inlined_call_operand.vmem [shape: bf16[32,128], index: 20, kind: input, shape index: {}]
  %s21 = inlined_call_operand.vmem [shape: f32[1,128], index: 21, kind: input, shape index: {}]
  %s22 = inlined_call_operand.hbm [shape: f32[16,32], index: 22, kind: output, shape index: {0}]
  %s23 = inlined_call_operand.hbm [shape: f32[2,128], index: 23, kind: output, shape index: {1}]
  %24 = xla_tuple %s22, %s23
  %s25 = sld [smem:[#allocation0]]
  $region106: #{newsnet_forward.1} parent=0
    _
  %s27 = ssub.s32 1, %s25
  %s28 = scalar_select 0, %s27, %s25
  $region1: #{newsnet_forward.1} parent=0
    #allocation2 [shape = 'u8[8192]{0}', space=vmem, size = 0x2000, scoped, tag = 'output window, operand 0, single buffered']
    #allocation3 [shape = 's32[1]{0}', space=sflag, size = 0x4, scoped, tag = 'scoped memory for newsnet_forward.1']
    #allocation4 [shape = 'u8[1024]{0}', space=vmem, size = 0x400, scoped, tag = 'output window, operand 1, single buffered']
    #allocation5 [shape = 's32[1]{0}', space=sflag, size = 0x4, scoped, tag = 'scoped memory for newsnet_forward.1']
    %29 = vsyncpa [#allocation3], 0
    %30 = vsyncpa [#allocation5], 0
    // Predicated region
    $region2: #{newsnet_forward.1} parent=1 // pred_check
      _
    $region3: #{newsnet_forward.1} parent=1 // pred_check_branch
      %32 = sbr.rel (0) target = $region5
    $region4: #{newsnet_forward.1} parent=1 // pred_region
      _
    $region5: #{newsnet_forward.1} parent=1 // pred_fallthru
      _
    // Predicated region
    $region6: #{newsnet_forward.1} parent=1 // pred_check
      _
    $region7: #{newsnet_forward.1} parent=1 // pred_check_branch
      %34 = sbr.rel (0) target = $region9
    $region8: #{newsnet_forward.1} parent=1 // pred_region
      _
    $region9: #{newsnet_forward.1} parent=1 // pred_fallthru
      _
    // Predicated region
    $region10: #{newsnet_forward.1} parent=1 // pred_check
      _
    $region11: #{newsnet_forward.1} parent=1 // pred_check_branch
      %36 = sbr.rel (0) target = $region13
    $region12: #{newsnet_forward.1} parent=1 // pred_region
      _
    $region13: #{newsnet_forward.1} parent=1 // pred_fallthru
      _
    // Predicated region
    $region14: #{newsnet_forward.1} parent=1 // pred_check
      _
    $region15: #{newsnet_forward.1} parent=1 // pred_check_branch
      %38 = sbr.rel (0) target = $region17
    $region16: #{newsnet_forward.1} parent=1 // pred_region
      _
    $region17: #{newsnet_forward.1} parent=1 // pred_fallthru
      _
    // Predicated region
    $region18: #{newsnet_forward.1} parent=1 // pred_check
      _
    $region19: #{newsnet_forward.1} parent=1 // pred_check_branch
      %40 = sbr.rel (0) target = $region21
    $region20: #{newsnet_forward.1} parent=1 // pred_region
      _
    $region21: #{newsnet_forward.1} parent=1 // pred_fallthru
      _
    // Predicated region
    $region22: #{newsnet_forward.1} parent=1 // pred_check
      _
    $region23: #{newsnet_forward.1} parent=1 // pred_check_branch
      %42 = sbr.rel (0) target = $region25
    $region24: #{newsnet_forward.1} parent=1 // pred_region
      _
    $region25: #{newsnet_forward.1} parent=1 // pred_fallthru
      _
    // Predicated region
    $region26: #{newsnet_forward.1} parent=1 // pred_check
      _
    $region27: #{newsnet_forward.1} parent=1 // pred_check_branch
      %44 = sbr.rel (0) target = $region29
    $region28: #{newsnet_forward.1} parent=1 // pred_region
      _
    $region29: #{newsnet_forward.1} parent=1 // pred_fallthru
      _
    // Predicated region
    $region30: #{newsnet_forward.1} parent=1 // pred_check
      _
    $region31: #{newsnet_forward.1} parent=1 // pred_check_branch
      %46 = sbr.rel (0) target = $region33
    $region32: #{newsnet_forward.1} parent=1 // pred_region
      _
    $region33: #{newsnet_forward.1} parent=1 // pred_fallthru
      _
    // Predicated region
    $region34: #{newsnet_forward.1} parent=1 // pred_check
      _
    $region35: #{newsnet_forward.1} parent=1 // pred_check_branch
      %48 = sbr.rel (0) target = $region37
    $region36: #{newsnet_forward.1} parent=1 // pred_region
      _
    $region37: #{newsnet_forward.1} parent=1 // pred_fallthru
      _
    // Predicated region
    $region38: #{newsnet_forward.1} parent=1 // pred_check
      _
    $region39: #{newsnet_forward.1} parent=1 // pred_check_branch
      %50 = sbr.rel (0) target = $region41
    $region40: #{newsnet_forward.1} parent=1 // pred_region
      _
    $region41: #{newsnet_forward.1} parent=1 // pred_fallthru
      _
    // Predicated region
    $region42: #{newsnet_forward.1} parent=1 // pred_check
      _
    $region43: #{newsnet_forward.1} parent=1 // pred_check_branch
      %52 = sbr.rel (0) target = $region45
    $region44: #{newsnet_forward.1} parent=1 // pred_region
      _
    $region45: #{newsnet_forward.1} parent=1 // pred_fallthru
      _
    // Predicated region
    $region46: #{newsnet_forward.1} parent=1 // pred_check
      _
    $region47: #{newsnet_forward.1} parent=1 // pred_check_branch
      %54 = sbr.rel (0) target = $region49
    $region48: #{newsnet_forward.1} parent=1 // pred_region
      _
    $region49: #{newsnet_forward.1} parent=1 // pred_fallthru
      _
    // Predicated region
    $region50: #{newsnet_forward.1} parent=1 // pred_check
      _
    $region51: #{newsnet_forward.1} parent=1 // pred_check_branch
      %56 = sbr.rel (0) target = $region53
    $region52: #{newsnet_forward.1} parent=1 // pred_region
      _
    $region53: #{newsnet_forward.1} parent=1 // pred_fallthru
      _
    // Predicated region
    $region54: #{newsnet_forward.1} parent=1 // pred_check
      _
    $region55: #{newsnet_forward.1} parent=1 // pred_check_branch
      %58 = sbr.rel (0) target = $region57
    $region56: #{newsnet_forward.1} parent=1 // pred_region
      _
    $region57: #{newsnet_forward.1} parent=1 // pred_fallthru
      _
    // Predicated region
    $region58: #{newsnet_forward.1} parent=1 // pred_check
      _
    $region59: #{newsnet_forward.1} parent=1 // pred_check_branch
      %60 = sbr.rel (0) target = $region61
    $region60: #{newsnet_forward.1} parent=1 // pred_region
      _
    $region61: #{newsnet_forward.1} parent=1 // pred_fallthru
      _
    // Predicated region
    $region62: #{newsnet_forward.1} parent=1 // pred_check
      _
    $region63: #{newsnet_forward.1} parent=1 // pred_check_branch
      %62 = sbr.rel (0) target = $region65
    $region64: #{newsnet_forward.1} parent=1 // pred_region
      _
    $region65: #{newsnet_forward.1} parent=1 // pred_fallthru
      _
    // Predicated region
    $region66: #{newsnet_forward.1} parent=1 // pred_check
      _
    $region67: #{newsnet_forward.1} parent=1 // pred_check_branch
      %64 = sbr.rel (0) target = $region69
    $region68: #{newsnet_forward.1} parent=1 // pred_region
      _
    $region69: #{newsnet_forward.1} parent=1 // pred_fallthru
      _
    // Predicated region
    $region70: #{newsnet_forward.1} parent=1 // pred_check
      _
    $region71: #{newsnet_forward.1} parent=1 // pred_check_branch
      %66 = sbr.rel (0) target = $region73
    $region72: #{newsnet_forward.1} parent=1 // pred_region
      _
    $region73: #{newsnet_forward.1} parent=1 // pred_fallthru
      _
    // Predicated region
    $region74: #{newsnet_forward.1} parent=1 // pred_check
      _
    $region75: #{newsnet_forward.1} parent=1 // pred_check_branch
      %68 = sbr.rel (0) target = $region77
    $region76: #{newsnet_forward.1} parent=1 // pred_region
      _
    $region77: #{newsnet_forward.1} parent=1 // pred_fallthru
      _
    // Predicated region
    $region78: #{newsnet_forward.1} parent=1 // pred_check
      _
    $region79: #{newsnet_forward.1} parent=1 // pred_check_branch
      %70 = sbr.rel (0) target = $region81
    $region80: #{newsnet_forward.1} parent=1 // pred_region
      _
    $region81: #{newsnet_forward.1} parent=1 // pred_fallthru
      _
    // Predicated region
    $region82: #{newsnet_forward.1} parent=1 // pred_check
      _
    $region83: #{newsnet_forward.1} parent=1 // pred_check_branch
      %72 = sbr.rel (0) target = $region85
    $region84: #{newsnet_forward.1} parent=1 // pred_region
      _
    $region85: #{newsnet_forward.1} parent=1 // pred_fallthru
      _
    // Predicated region
    $region86: #{newsnet_forward.1} parent=1 // pred_check
      _
    $region87: #{newsnet_forward.1} parent=1 // pred_check_branch
      %74 = sbr.rel (0) target = $region89
    $region88: #{newsnet_forward.1} parent=1 // pred_region
      _
    $region89: #{newsnet_forward.1} parent=1 // pred_fallthru
      _
    %v76 = vld [vmem:[%s1] sm:$0xff]
    %v77 = vld [vmem:[%s1 + $0x8] sm:$0xff]
    %v78 = vld [vmem:[%s0] sm:$0xff]
    %v79 = vld [vmem:[%s0 + $0x8] sm:$0xff]
    %v80 = vld [vmem:[%s2] sm:$0x1]
    %v81 = vld [vmem:[%s3] sm:$0x1]
    %vm82 = vcmask 261120
    %v83 = vsel %vm82, %v78, 0.0
    %84 = vadd.xlane.f32.xlu0 %v83
    %v85 = vpop.xlane.xlu0 %84
    %v86 = vsel %vm82, %v79, 0.0
    %87 = vadd.xlane.f32.xlu0 %v86
    %v88 = vpop.xlane.xlu0 %87
    %v89 = vrcp.pop 32.0
    %v90 = vmul.f32 %v85, %v89
    %v91 = vmul.f32 %v88, %v89
    %v92 = vsub.f32 %v78, %v90
    %v93 = vsub.f32 %v79, %v91
    %v94 = vmul.f32 %v92, %v92
    %v95 = vmul.f32 %v93, %v93
    %v96 = vsel %vm82, %v94, 0.0
    %97 = vadd.xlane.f32.xlu0 %v96
    %v98 = vpop.xlane.xlu0 %97
    %v99 = vsel %vm82, %v95, 0.0
    %100 = vadd.xlane.f32.xlu0 %v99
    %v101 = vpop.xlane.xlu0 %100
    %v102 = vmul.f32 %v98, %v89
    %v103 = vmul.f32 %v101, %v89
    %v104 = vadd.f32 %v102, 1e-12
    %v105 = vadd.f32 %v103, 1e-12
    %v106 = vrsqrt.pop %v104
    %v107 = vrsqrt.pop %v105
    %v108 = vmul.f32 %v92, %v106
    %v109 = vmul.f32 %v93, %v107
    %v111 = vlaneseq
    %v112 = vshrl.u32 %v111, 7
    %v113 = vsub.s32 0, %v112
    %v114 = vrot.slane %v80, %v113
    %v116 = vmul.f32 %v108, %v114
    %v117 = vmul.f32 %v109, %v114
    %v119 = vlaneseq
    %v120 = vshrl.u32 %v119, 7
    %v121 = vsub.s32 0, %v120
    %v122 = vrot.slane %v81, %v121
    %v124 = vadd.f32 %v116, %v122
    %v125 = vadd.f32 %v117, %v122
    %v126 = vpack.c.bf16 %v125, %v124
    %v127 = vld [vmem:[%s4] sm:$0xf]
    %v128 = vld [vmem:[%s4 + $0x4] sm:$0xf]
    %v129 = vld [vmem:[%s4 + $0x8] sm:$0xf]
    %v130 = vld [vmem:[%s4 + $0xc] sm:$0xf]
    %v131 = vld [vmem:[%s7] sm:$0x1]
    %v133 = vlaneseq
    %v134 = vshrl.u32 %v133, 7
    %v135 = vsub.s32 0, %v134
    %v136 = vrot.slane %v131, %v135
    %v142 = vunpack.c.l.b16 %v127
    %v143 = vunpack.c.l.b16 %v128
    %v144 = vunpack.c.l.b16 %v129
    %v145 = vunpack.c.l.b16 %v130
    %v146 = vpack.c.b16 %v143, %v142
    %v147 = vpack.c.b16 %v145, %v144
    %v151 = vsel %vm82, %v126, 0
    %153 = vmatprep.subr.bf16.mxu0 0
    %154 = vmatpush1.bf16.msra.mxu0 %v146
    %155 = vmatprep.subr.bf16.mxu0 0
    %156 = vmatpush1.bf16.msra.mxu0 %v147
    %157 = vmatprep.subr.bf16.mxu0 0
    %158 = vmatpush1.bf16.msra.mxu0 0
    %159 = vmatprep.subr.bf16.mxu0 0
    %160 = vmatpush1.bf16.msra.mxu0 0
    %161 = vmatprep.subr.bf16.mxu0 0
    %162 = vmatpush1.bf16.msra.mxu0 0
    %163 = vmatprep.subr.bf16.mxu0 0
    %164 = vmatpush1.bf16.msra.mxu0 0
    %165 = vmatprep.subr.bf16.mxu0 0
    %166 = vmatpush1.bf16.msra.mxu0 0
    %167 = vmatprep.subr.bf16.mxu0 0
    %168 = vmatpush1.bf16.msra.mxu0 0
    %169 = vmatprep.subr.bf16.mxu0 0
    %170 = vmatpush1.bf16.msra.mxu0 0
    %171 = vmatprep.subr.bf16.mxu0 0
    %172 = vmatpush1.bf16.msra.mxu0 0
    %173 = vmatprep.subr.bf16.mxu0 0
    %174 = vmatpush1.bf16.msra.mxu0 0
    %175 = vmatprep.subr.bf16.mxu0 0
    %176 = vmatpush1.bf16.msra.mxu0 0
    %177 = vmatprep.subr.bf16.mxu0 0
    %178 = vmatpush1.bf16.msra.mxu0 0
    %179 = vmatprep.subr.bf16.mxu0 0
    %180 = vmatpush1.bf16.msra.mxu0 0
    %181 = vmatprep.subr.bf16.mxu0 0
    %182 = vmatpush1.bf16.msra.mxu0 0
    %183 = vmatprep.subr.bf16.mxu0 0
    %184 = vmatpush1.bf16.msra.mxu0 0
    %185 = vmatprep.mubr.bf16.mxu0 0
    %186 = vmatmul.mubr.bf16.gmra.mrb[0].mxu0 %v151
    %v187 = vpop.f32.mrb[0].mxu0
    %v188 = vadd.f32 %v136, %v187
    %v189 = vpop.f32.mrb[0].mxu0
    %v190 = vpop.f32.mrb[0].mxu0
    %v191 = vadd.f32 %v136, %v190
    %v192 = vpop.f32.mrb[0].mxu0
    %193 = vdwg.mxu0
    %v194 = vld [vmem:[%s5] sm:$0xf]
    %v195 = vld [vmem:[%s5 + $0x4] sm:$0xf]
    %v196 = vld [vmem:[%s5 + $0x8] sm:$0xf]
    %v197 = vld [vmem:[%s5 + $0xc] sm:$0xf]
    %v198 = vld [vmem:[%s8] sm:$0x1]
    %v200 = vlaneseq
    %v201 = vshrl.u32 %v200, 7
    %v202 = vsub.s32 0, %v201
    %v203 = vrot.slane %v198, %v202
    %v209 = vunpack.c.l.b16 %v194
    %v210 = vunpack.c.l.b16 %v195
    %v211 = vunpack.c.l.b16 %v196
    %v212 = vunpack.c.l.b16 %v197
    %v213 = vpack.c.b16 %v210, %v209
    %v214 = vpack.c.b16 %v212, %v211
    %217 = vmatprep.subr.bf16.mxu0 0
    %218 = vmatpush1.bf16.msra.mxu0 %v213
    %219 = vmatprep.subr.bf16.mxu0 0
    %220 = vmatpush1.bf16.msra.mxu0 %v214
    %221 = vmatprep.subr.bf16.mxu0 0
    %222 = vmatpush1.bf16.msra.mxu0 0
    %223 = vmatprep.subr.bf16.mxu0 0
    %224 = vmatpush1.bf16.msra.mxu0 0
    %225 = vmatprep.subr.bf16.mxu0 0
    %226 = vmatpush1.bf16.msra.mxu0 0
    %227 = vmatprep.subr.bf16.mxu0 0
    %228 = vmatpush1.bf16.msra.mxu0 0
    %229 = vmatprep.subr.bf16.mxu0 0
    %230 = vmatpush1.bf16.msra.mxu0 0
    %231 = vmatprep.subr.bf16.mxu0 0
    %232 = vmatpush1.bf16.msra.mxu0 0
    %233 = vmatprep.subr.bf16.mxu0 0
    %234 = vmatpush1.bf16.msra.mxu0 0
    %235 = vmatprep.subr.bf16.mxu0 0
    %236 = vmatpush1.bf16.msra.mxu0 0
    %237 = vmatprep.subr.bf16.mxu0 0
    %238 = vmatpush1.bf16.msra.mxu0 0
    %239 = vmatprep.subr.bf16.mxu0 0
    %240 = vmatpush1.bf16.msra.mxu0 0
    %241 = vmatprep.subr.bf16.mxu0 0
    %242 = vmatpush1.bf16.msra.mxu0 0
    %243 = vmatprep.subr.bf16.mxu0 0
    %244 = vmatpush1.bf16.msra.mxu0 0
    %245 = vmatprep.subr.bf16.mxu0 0
    %246 = vmatpush1.bf16.msra.mxu0 0
    %247 = vmatprep.subr.bf16.mxu0 0
    %248 = vmatpush1.bf16.msra.mxu0 0
    %249 = vmatprep.mubr.bf16.mxu0 0
    %250 = vmatmul.mubr.bf16.gmra.mrb[0].mxu0 %v151
    %v251 = vpop.f32.mrb[0].mxu0
    %v252 = vadd.f32 %v203, %v251
    %v253 = vpop.f32.mrb[0].mxu0
    %v254 = vpop.f32.mrb[0].mxu0
    %v255 = vadd.f32 %v203, %v254
    %v256 = vpop.f32.mrb[0].mxu0
    %257 = vdwg.mxu0
    %v258 = vld [vmem:[%s6] sm:$0xf]
    %v259 = vld [vmem:[%s6 + $0x4] sm:$0xf]
    %v260 = vld [vmem:[%s6 + $0x8] sm:$0xf]
    %v261 = vld [vmem:[%s6 + $0xc] sm:$0xf]
    %v262 = vld [vmem:[%s9] sm:$0x1]
    %v264 = vlaneseq
    %v265 = vshrl.u32 %v264, 7
    %v266 = vsub.s32 0, %v265
    %v267 = vrot.slane %v262, %v266
    %v273 = vunpack.c.l.b16 %v258
    %v274 = vunpack.c.l.b16 %v259
    %v275 = vunpack.c.l.b16 %v260
    %v276 = vunpack.c.l.b16 %v261
    %v277 = vpack.c.b16 %v274, %v273
    %v278 = vpack.c.b16 %v276, %v275
    %281 = vmatprep.subr.bf16.mxu0 0
    %282 = vmatpush1.bf16.msra.mxu0 %v277
    %283 = vmatprep.subr.bf16.mxu0 0
    %284 = vmatpush1.bf16.msra.mxu0 %v278
    %285 = vmatprep.subr.bf16.mxu0 0
    %286 = vmatpush1.bf16.msra.mxu0 0
    %287 = vmatprep.subr.bf16.mxu0 0
    %288 = vmatpush1.bf16.msra.mxu0 0
    %289 = vmatprep.subr.bf16.mxu0 0
    %290 = vmatpush1.bf16.msra.mxu0 0
    %291 = vmatprep.subr.bf16.mxu0 0
    %292 = vmatpush1.bf16.msra.mxu0 0
    %293 = vmatprep.subr.bf16.mxu0 0
    %294 = vmatpush1.bf16.msra.mxu0 0
    %295 = vmatprep.subr.bf16.mxu0 0
    %296 = vmatpush1.bf16.msra.mxu0 0
    %297 = vmatprep.subr.bf16.mxu0 0
    %298 = vmatpush1.bf16.msra.mxu0 0
    %299 = vmatprep.subr.bf16.mxu0 0
    %300 = vmatpush1.bf16.msra.mxu0 0
    %301 = vmatprep.subr.bf16.mxu0 0
    %302 = vmatpush1.bf16.msra.mxu0 0
    %303 = vmatprep.subr.bf16.mxu0 0
    %304 = vmatpush1.bf16.msra.mxu0 0
    %305 = vmatprep.subr.bf16.mxu0 0
    %306 = vmatpush1.bf16.msra.mxu0 0
    %307 = vmatprep.subr.bf16.mxu0 0
    %308 = vmatpush1.bf16.msra.mxu0 0
    %309 = vmatprep.subr.bf16.mxu0 0
    %310 = vmatpush1.bf16.msra.mxu0 0
    %311 = vmatprep.subr.bf16.mxu0 0
    %312 = vmatpush1.bf16.msra.mxu0 0
    %313 = vmatprep.mubr.bf16.mxu0 0
    %314 = vmatmul.mubr.bf16.gmra.mrb[0].mxu0 %v151
    %v315 = vpop.f32.mrb[0].mxu0
    %v316 = vadd.f32 %v267, %v315
    %v317 = vpop.f32.mrb[0].mxu0
    %v318 = vpop.f32.mrb[0].mxu0
    %v319 = vadd.f32 %v267, %v318
    %v320 = vpop.f32.mrb[0].mxu0
    %321 = vdwg.mxu0
    %v322 = vpack.c.bf16 %v191, %v188
    %v323 = vpack.c.bf16 %v255, %v252
    %vm324 = vcmask 64512
    %v326 = vsel %vm324, %v322, 0
    %v329 = vsel %vm324, %v323, 0
    %331 = vmatprep.subr.bf16.mxu0 0
    %332 = vmatpush1.bf16.xpose.msra.mxu0 %v329
    %333 = vmatprep.subr.bf16.mxu0 0
    %334 = vmatpush1.bf16.xpose.msra.mxu0 0
    %335 = vmatprep.subr.bf16.mxu0 0
    %336 = vmatpush1.bf16.xpose.msra.mxu0 0
    %337 = vmatprep.subr.bf16.mxu0 0
    %338 = vmatpush1.bf16.xpose.msra.mxu0 0
    %339 = vmatprep.subr.bf16.mxu0 0
    %340 = vmatpush1.bf16.xpose.msra.mxu0 0
    %341 = vmatprep.subr.bf16.mxu0 0
    %342 = vmatpush1.bf16.xpose.msra.mxu0 0
    %343 = vmatprep.subr.bf16.mxu0 0
    %344 = vmatpush1.bf16.xpose.msra.mxu0 0
    %345 = vmatprep.subr.bf16.mxu0 0
    %346 = vmatpush1.bf16.xpose.msra.mxu0 0
    %347 = vmatprep.subr.bf16.mxu0 0
    %348 = vmatpush1.bf16.xpose.msra.mxu0 0
    %349 = vmatprep.subr.bf16.mxu0 0
    %350 = vmatpush1.bf16.xpose.msra.mxu0 0
    %351 = vmatprep.subr.bf16.mxu0 0
    %352 = vmatpush1.bf16.xpose.msra.mxu0 0
    %353 = vmatprep.subr.bf16.mxu0 0
    %354 = vmatpush1.bf16.xpose.msra.mxu0 0
    %355 = vmatprep.subr.bf16.mxu0 0
    %356 = vmatpush1.bf16.xpose.msra.mxu0 0
    %357 = vmatprep.subr.bf16.mxu0 0
    %358 = vmatpush1.bf16.xpose.msra.mxu0 0
    %359 = vmatprep.subr.bf16.mxu0 0
    %360 = vmatpush1.bf16.xpose.msra.mxu0 0
    %361 = vmatprep.subr.bf16.mxu0 0
    %362 = vmatpush1.bf16.xpose.msra.mxu0 0
    %363 = vmatprep.mubr.bf16.mxu0 0
    %364 = vmatmul.mubr.bf16.gmra.mrb[0].mxu0 %v326
    %v365 = vpop.f32.mrb[0].mxu0
    %v366 = vadd.f32 0.0, %v365
    %v367 = vpop.f32.mrb[0].mxu0
    %v368 = vpop.f32.mrb[0].mxu0
    %v369 = vadd.f32 0.0, %v368
    %v370 = vpop.f32.mrb[0].mxu0
    %371 = vdwg.mxu0
    %v372 = vmul.f32 %v366, 0.35355338
    %v373 = vmul.f32 %v369, 0.35355338
    %v374 = vadd.f32 %v372, %v76
    %v375 = vadd.f32 %v373, %v77
    %vm376 = vcmask 130048
    %v377 = vsel %vm376, %v374, -inf
    %378 = vmax.xlane.f32.xlu0 %v377
    %v379 = vpop.xlane.xlu0 %378
    %v380 = vsel %vm376, %v375, -inf
    %381 = vmax.xlane.f32.xlu0 %v380
    %v382 = vpop.xlane.xlu0 %381
    %v383 = vsub.f32 %v374, %v379
    %v384 = vsub.f32 %v375, %v382
    %v385 = vmul.f32 %v383, 1.442695
    %v386 = vpow.pop %v385
    %v387 = vmul.f32 %v384, 1.442695
    %v388 = vpow.pop %v387
    %v389 = vsel %vm376, %v386, 0.0
    %390 = vadd.xlane.f32.xlu0 %v389
    %v391 = vpop.xlane.xlu0 %390
    %v392 = vsel %vm376, %v388, 0.0
    %393 = vadd.xlane.f32.xlu0 %v392
    %v394 = vpop.xlane.xlu0 %393
    %v395 = vrcp.pop %v391
    %v396 = vmul.f32 %v386, %v395
    %v397 = vrcp.pop %v394
    %v398 = vmul.f32 %v388, %v397
    %v399 = vpack.c.bf16 %v398, %v396
    %v400 = vpack.c.bf16 %v319, %v316
    %v402 = vsel %vm376, %v399, 0
    %404 = vmatprep.subr.bf16.mxu0 0
    %405 = vmatpush1.bf16.msra.mxu0 %v400
    %406 = vmatprep.subr.bf16.mxu0 0
    %407 = vmatpush1.bf16.msra.mxu0 0
    %408 = vmatprep.subr.bf16.mxu0 0
    %409 = vmatpush1.bf16.msra.mxu0 0
    %410 = vmatprep.subr.bf16.mxu0 0
    %411 = vmatpush1.bf16.msra.mxu0 0
    %412 = vmatprep.subr.bf16.mxu0 0
    %413 = vmatpush1.bf16.msra.mxu0 0
    %414 = vmatprep.subr.bf16.mxu0 0
    %415 = vmatpush1.bf16.msra.mxu0 0
    %416 = vmatprep.subr.bf16.mxu0 0
    %417 = vmatpush1.bf16.msra.mxu0 0
    %418 = vmatprep.subr.bf16.mxu0 0
    %419 = vmatpush1.bf16.msra.mxu0 0
    %420 = vmatprep.subr.bf16.mxu0 0
    %421 = vmatpush1.bf16.msra.mxu0 0
    %422 = vmatprep.subr.bf16.mxu0 0
    %423 = vmatpush1.bf16.msra.mxu0 0
    %424 = vmatprep.subr.bf16.mxu0 0
    %425 = vmatpush1.bf16.msra.mxu0 0
    %426 = vmatprep.subr.bf16.mxu0 0
    %427 = vmatpush1.bf16.msra.mxu0 0
    %428 = vmatprep.subr.bf16.mxu0 0
    %429 = vmatpush1.bf16.msra.mxu0 0
    %430 = vmatprep.subr.bf16.mxu0 0
    %431 = vmatpush1.bf16.msra.mxu0 0
    %432 = vmatprep.subr.bf16.mxu0 0
    %433 = vmatpush1.bf16.msra.mxu0 0
    %434 = vmatprep.subr.bf16.mxu0 0
    %435 = vmatpush1.bf16.msra.mxu0 0
    %436 = vmatprep.mubr.bf16.mxu0 0
    %437 = vmatmul.mubr.bf16.gmra.mrb[0].mxu0 %v402
    %v438 = vpop.f32.mrb[0].mxu0
    %v439 = vadd.f32 0.0, %v438
    %v440 = vpop.f32.mrb[0].mxu0
    %v441 = vpop.f32.mrb[0].mxu0
    %v442 = vadd.f32 0.0, %v441
    %v443 = vpop.f32.mrb[0].mxu0
    %444 = vdwg.mxu0
    %v445 = vpack.c.bf16 %v442, %v439
    %v446 = vld [vmem:[%s10] sm:$0xf]
    %s447 = scalar_lea.vmem %s4, 16
    %v448 = vld [vmem:[%s447] sm:$0xf]
    %v449 = vld [vmem:[%s447 + $0x4] sm:$0xf]
    %v450 = vld [vmem:[%s447 + $0x8] sm:$0xf]
    %v451 = vld [vmem:[%s447 + $0xc] sm:$0xf]
    %s452 = scalar_lea.vmem %s7, 1
    %v453 = vld [vmem:[%s452] sm:$0x1]
    %v455 = vlaneseq
    %v456 = vshrl.u32 %v455, 7
    %v457 = vsub.s32 0, %v456
    %v458 = vrot.slane %v453, %v457
    %v464 = vunpack.c.l.b16 %v448
    %v465 = vunpack.c.l.b16 %v449
    %v466 = vunpack.c.l.b16 %v450
    %v467 = vunpack.c.l.b16 %v451
    %v468 = vpack.c.b16 %v465, %v464
    %v469 = vpack.c.b16 %v467, %v466
    %472 = vmatprep.subr.bf16.mxu0 0
    %473 = vmatpush1.bf16.msra.mxu0 %v468
    %474 = vmatprep.subr.bf16.mxu0 0
    %475 = vmatpush1.bf16.msra.mxu0 %v469
    %476 = vmatprep.subr.bf16.mxu0 0
    %477 = vmatpush1.bf16.msra.mxu0 0
    %478 = vmatprep.subr.bf16.mxu0 0
    %479 = vmatpush1.bf16.msra.mxu0 0
    %480 = vmatprep.subr.bf16.mxu0 0
    %481 = vmatpush1.bf16.msra.mxu0 0
    %482 = vmatprep.subr.bf16.mxu0 0
    %483 = vmatpush1.bf16.msra.mxu0 0
    %484 = vmatprep.subr.bf16.mxu0 0
    %485 = vmatpush1.bf16.msra.mxu0 0
    %486 = vmatprep.subr.bf16.mxu0 0
    %487 = vmatpush1.bf16.msra.mxu0 0
    %488 = vmatprep.subr.bf16.mxu0 0
    %489 = vmatpush1.bf16.msra.mxu0 0
    %490 = vmatprep.subr.bf16.mxu0 0
    %491 = vmatpush1.bf16.msra.mxu0 0
    %492 = vmatprep.subr.bf16.mxu0 0
    %493 = vmatpush1.bf16.msra.mxu0 0
    %494 = vmatprep.subr.bf16.mxu0 0
    %495 = vmatpush1.bf16.msra.mxu0 0
    %496 = vmatprep.subr.bf16.mxu0 0
    %497 = vmatpush1.bf16.msra.mxu0 0
    %498 = vmatprep.subr.bf16.mxu0 0
    %499 = vmatpush1.bf16.msra.mxu0 0
    %500 = vmatprep.subr.bf16.mxu0 0
    %501 = vmatpush1.bf16.msra.mxu0 0
    %502 = vmatprep.subr.bf16.mxu0 0
    %503 = vmatpush1.bf16.msra.mxu0 0
    %504 = vmatprep.mubr.bf16.mxu0 0
    %505 = vmatmul.mubr.bf16.gmra.mrb[0].mxu0 %v151
    %v506 = vpop.f32.mrb[0].mxu0
    %v507 = vadd.f32 %v458, %v506
    %v508 = vpop.f32.mrb[0].mxu0
    %v509 = vpop.f32.mrb[0].mxu0
    %v510 = vadd.f32 %v458, %v509
    %v511 = vpop.f32.mrb[0].mxu0
    %512 = vdwg.mxu0
    %s513 = scalar_lea.vmem %s5, 16
    %v514 = vld [vmem:[%s513] sm:$0xf]
    %v515 = vld [vmem:[%s513 + $0x4] sm:$0xf]
    %v516 = vld [vmem:[%s513 + $0x8] sm:$0xf]
    %v517 = vld [vmem:[%s513 + $0xc] sm:$0xf]
    %s518 = scalar_lea.vmem %s8, 1
    %v519 = vld [vmem:[%s518] sm:$0x1]
    %v521 = vlaneseq
    %v522 = vshrl.u32 %v521, 7
    %v523 = vsub.s32 0, %v522
    %v524 = vrot.slane %v519, %v523
    %v530 = vunpack.c.l.b16 %v514
    %v531 = vunpack.c.l.b16 %v515
    %v532 = vunpack.c.l.b16 %v516
    %v533 = vunpack.c.l.b16 %v517
    %v534 = vpack.c.b16 %v531, %v530
    %v535 = vpack.c.b16 %v533, %v532
    %538 = vmatprep.subr.bf16.mxu0 0
    %539 = vmatpush1.bf16.msra.mxu0 %v534
    %540 = vmatprep.subr.bf16.mxu0 0
    %541 = vmatpush1.bf16.msra.mxu0 %v535
    %542 = vmatprep.subr.bf16.mxu0 0
    %543 = vmatpush1.bf16.msra.mxu0 0
    %544 = vmatprep.subr.bf16.mxu0 0
    %545 = vmatpush1.bf16.msra.mxu0 0
    %546 = vmatprep.subr.bf16.mxu0 0
    %547 = vmatpush1.bf16.msra.mxu0 0
    %548 = vmatprep.subr.bf16.mxu0 0
    %549 = vmatpush1.bf16.msra.mxu0 0
    %550 = vmatprep.subr.bf16.mxu0 0
    %551 = vmatpush1.bf16.msra.mxu0 0
    %552 = vmatprep.subr.bf16.mxu0 0
    %553 = vmatpush1.bf16.msra.mxu0 0
    %554 = vmatprep.subr.bf16.mxu0 0
    %555 = vmatpush1.bf16.msra.mxu0 0
    %556 = vmatprep.subr.bf16.mxu0 0
    %557 = vmatpush1.bf16.msra.mxu0 0
    %558 = vmatprep.subr.bf16.mxu0 0
    %559 = vmatpush1.bf16.msra.mxu0 0
    %560 = vmatprep.subr.bf16.mxu0 0
    %561 = vmatpush1.bf16.msra.mxu0 0
    %562 = vmatprep.subr.bf16.mxu0 0
    %563 = vmatpush1.bf16.msra.mxu0 0
    %564 = vmatprep.subr.bf16.mxu0 0
    %565 = vmatpush1.bf16.msra.mxu0 0
    %566 = vmatprep.subr.bf16.mxu0 0
    %567 = vmatpush1.bf16.msra.mxu0 0
    %568 = vmatprep.subr.bf16.mxu0 0
    %569 = vmatpush1.bf16.msra.mxu0 0
    %570 = vmatprep.mubr.bf16.mxu0 0
    %571 = vmatmul.mubr.bf16.gmra.mrb[0].mxu0 %v151
    %v572 = vpop.f32.mrb[0].mxu0
    %v573 = vadd.f32 %v524, %v572
    %v574 = vpop.f32.mrb[0].mxu0
    %v575 = vpop.f32.mrb[0].mxu0
    %v576 = vadd.f32 %v524, %v575
    %v577 = vpop.f32.mrb[0].mxu0
    %578 = vdwg.mxu0
    %s579 = scalar_lea.vmem %s6, 16
    %v580 = vld [vmem:[%s579] sm:$0xf]
    %v581 = vld [vmem:[%s579 + $0x4] sm:$0xf]
    %v582 = vld [vmem:[%s579 + $0x8] sm:$0xf]
    %v583 = vld [vmem:[%s579 + $0xc] sm:$0xf]
    %s584 = scalar_lea.vmem %s9, 1
    %v585 = vld [vmem:[%s584] sm:$0x1]
    %v587 = vlaneseq
    %v588 = vshrl.u32 %v587, 7
    %v589 = vsub.s32 0, %v588
    %v590 = vrot.slane %v585, %v589
    %v596 = vunpack.c.l.b16 %v580
    %v597 = vunpack.c.l.b16 %v581
    %v598 = vunpack.c.l.b16 %v582
    %v599 = vunpack.c.l.b16 %v583
    %v600 = vpack.c.b16 %v597, %v596
    %v601 = vpack.c.b16 %v599, %v598
    %604 = vmatprep.subr.bf16.mxu0 0
    %605 = vmatpush1.bf16.msra.mxu0 %v600
    %606 = vmatprep.subr.bf16.mxu0 0
    %607 = vmatpush1.bf16.msra.mxu0 %v601
    %608 = vmatprep.subr.bf16.mxu0 0
    %609 = vmatpush1.bf16.msra.mxu0 0
    %610 = vmatprep.subr.bf16.mxu0 0
    %611 = vmatpush1.bf16.msra.mxu0 0
    %612 = vmatprep.subr.bf16.mxu0 0
    %613 = vmatpush1.bf16.msra.mxu0 0
    %614 = vmatprep.subr.bf16.mxu0 0
    %615 = vmatpush1.bf16.msra.mxu0 0
    %616 = vmatprep.subr.bf16.mxu0 0
    %617 = vmatpush1.bf16.msra.mxu0 0
    %618 = vmatprep.subr.bf16.mxu0 0
    %619 = vmatpush1.bf16.msra.mxu0 0
    %620 = vmatprep.subr.bf16.mxu0 0
    %621 = vmatpush1.bf16.msra.mxu0 0
    %622 = vmatprep.subr.bf16.mxu0 0
    %623 = vmatpush1.bf16.msra.mxu0 0
    %624 = vmatprep.subr.bf16.mxu0 0
    %625 = vmatpush1.bf16.msra.mxu0 0
    %626 = vmatprep.subr.bf16.mxu0 0
    %627 = vmatpush1.bf16.msra.mxu0 0
    %628 = vmatprep.subr.bf16.mxu0 0
    %629 = vmatpush1.bf16.msra.mxu0 0
    %630 = vmatprep.subr.bf16.mxu0 0
    %631 = vmatpush1.bf16.msra.mxu0 0
    %632 = vmatprep.subr.bf16.mxu0 0
    %633 = vmatpush1.bf16.msra.mxu0 0
    %634 = vmatprep.subr.bf16.mxu0 0
    %635 = vmatpush1.bf16.msra.mxu0 0
    %636 = vmatprep.mubr.bf16.mxu0 0
    %637 = vmatmul.mubr.bf16.gmra.mrb[0].mxu0 %v151
    %v638 = vpop.f32.mrb[0].mxu0
    %v639 = vadd.f32 %v590, %v638
    %v640 = vpop.f32.mrb[0].mxu0
    %v641 = vpop.f32.mrb[0].mxu0
    %v642 = vadd.f32 %v590, %v641
    %v643 = vpop.f32.mrb[0].mxu0
    %644 = vdwg.mxu0
    %v645 = vpack.c.bf16 %v510, %v507
    %v646 = vpack.c.bf16 %v576, %v573
    %v648 = vsel %vm324, %v645, 0
    %v651 = vsel %vm324, %v646, 0
    %653 = vmatprep.subr.bf16.mxu0 0
    %654 = vmatpush1.bf16.xpose.msra.mxu0 %v651
    %655 = vmatprep.subr.bf16.mxu0 0
    %656 = vmatpush1.bf16.xpose.msra.mxu0 0
    %657 = vmatprep.subr.bf16.mxu0 0
    %658 = vmatpush1.bf16.xpose.msra.mxu0 0
    %659 = vmatprep.subr.bf16.mxu0 0
    %660 = vmatpush1.bf16.xpose.msra.mxu0 0
    %661 = vmatprep.subr.bf16.mxu0 0
    %662 = vmatpush1.bf16.xpose.msra.mxu0 0
    %663 = vmatprep.subr.bf16.mxu0 0
    %664 = vmatpush1.bf16.xpose.msra.mxu0 0
    %665 = vmatprep.subr.bf16.mxu0 0
    %666 = vmatpush1.bf16.xpose.msra.mxu0 0
    %667 = vmatprep.subr.bf16.mxu0 0
    %668 = vmatpush1.bf16.xpose.msra.mxu0 0
    %669 = vmatprep.subr.bf16.mxu0 0
    %670 = vmatpush1.bf16.xpose.msra.mxu0 0
    %671 = vmatprep.subr.bf16.mxu0 0
    %672 = vmatpush1.bf16.xpose.msra.mxu0 0
    %673 = vmatprep.subr.bf16.mxu0 0
    %674 = vmatpush1.bf16.xpose.msra.mxu0 0
    %675 = vmatprep.subr.bf16.mxu0 0
    %676 = vmatpush1.bf16.xpose.msra.mxu0 0
    %677 = vmatprep.subr.bf16.mxu0 0
    %678 = vmatpush1.bf16.xpose.msra.mxu0 0
    %679 = vmatprep.subr.bf16.mxu0 0
    %680 = vmatpush1.bf16.xpose.msra.mxu0 0
    %681 = vmatprep.subr.bf16.mxu0 0
    %682 = vmatpush1.bf16.xpose.msra.mxu0 0
    %683 = vmatprep.subr.bf16.mxu0 0
    %684 = vmatpush1.bf16.xpose.msra.mxu0 0
    %685 = vmatprep.mubr.bf16.mxu0 0
    %686 = vmatmul.mubr.bf16.gmra.mrb[0].mxu0 %v648
    %v687 = vpop.f32.mrb[0].mxu0
    %v688 = vadd.f32 0.0, %v687
    %v689 = vpop.f32.mrb[0].mxu0
    %v690 = vpop.f32.mrb[0].mxu0
    %v691 = vadd.f32 0.0, %v690
    %v692 = vpop.f32.mrb[0].mxu0
    %693 = vdwg.mxu0
    %v694 = vmul.f32 %v688, 0.35355338
    %v695 = vmul.f32 %v691, 0.35355338
    %v696 = vadd.f32 %v694, %v76
    %v697 = vadd.f32 %v695, %v77
    %v698 = vsel %vm376, %v696, -inf
    %699 = vmax.xlane.f32.xlu0 %v698
    %v700 = vpop.xlane.xlu0 %699
    %v701 = vsel %vm376, %v697, -inf
    %702 = vmax.xlane.f32.xlu0 %v701
    %v703 = vpop.xlane.xlu0 %702
    %v704 = vsub.f32 %v696, %v700
    %v705 = vsub.f32 %v697, %v703
    %v706 = vmul.f32 %v704, 1.442695
    %v707 = vpow.pop %v706
    %v708 = vmul.f32 %v705, 1.442695
    %v709 = vpow.pop %v708
    %v710 = vsel %vm376, %v707, 0.0
    %711 = vadd.xlane.f32.xlu0 %v710
    %v712 = vpop.xlane.xlu0 %711
    %v713 = vsel %vm376, %v709, 0.0
    %714 = vadd.xlane.f32.xlu0 %v713
    %v715 = vpop.xlane.xlu0 %714
    %v716 = vrcp.pop %v712
    %v717 = vmul.f32 %v707, %v716
    %v718 = vrcp.pop %v715
    %v719 = vmul.f32 %v709, %v718
    %v720 = vpack.c.bf16 %v719, %v717
    %v721 = vpack.c.bf16 %v642, %v639
    %v723 = vsel %vm376, %v720, 0
    %725 = vmatprep.subr.bf16.mxu0 0
    %726 = vmatpush1.bf16.msra.mxu0 %v721
    %727 = vmatprep.subr.bf16.mxu0 0
    %728 = vmatpush1.bf16.msra.mxu0 0
    %729 = vmatprep.subr.bf16.mxu0 0
    %730 = vmatpush1.bf16.msra.mxu0 0
    %731 = vmatprep.subr.bf16.mxu0 0
    %732 = vmatpush1.bf16.msra.mxu0 0
    %733 = vmatprep.subr.bf16.mxu0 0
    %734 = vmatpush1.bf16.msra.mxu0 0
    %735 = vmatprep.subr.bf16.mxu0 0
    %736 = vmatpush1.bf16.msra.mxu0 0
    %737 = vmatprep.subr.bf16.mxu0 0
    %738 = vmatpush1.bf16.msra.mxu0 0
    %739 = vmatprep.subr.bf16.mxu0 0
    %740 = vmatpush1.bf16.msra.mxu0 0
    %741 = vmatprep.subr.bf16.mxu0 0
    %742 = vmatpush1.bf16.msra.mxu0 0
    %743 = vmatprep.subr.bf16.mxu0 0
    %744 = vmatpush1.bf16.msra.mxu0 0
    %745 = vmatprep.subr.bf16.mxu0 0
    %746 = vmatpush1.bf16.msra.mxu0 0
    %747 = vmatprep.subr.bf16.mxu0 0
    %748 = vmatpush1.bf16.msra.mxu0 0
    %749 = vmatprep.subr.bf16.mxu0 0
    %750 = vmatpush1.bf16.msra.mxu0 0
    %751 = vmatprep.subr.bf16.mxu0 0
    %752 = vmatpush1.bf16.msra.mxu0 0
    %753 = vmatprep.subr.bf16.mxu0 0
    %754 = vmatpush1.bf16.msra.mxu0 0
    %755 = vmatprep.subr.bf16.mxu0 0
    %756 = vmatpush1.bf16.msra.mxu0 0
    %757 = vmatprep.mubr.bf16.mxu0 0
    %758 = vmatmul.mubr.bf16.gmra.mrb[0].mxu0 %v723
    %v759 = vpop.f32.mrb[0].mxu0
    %v760 = vadd.f32 0.0, %v759
    %v761 = vpop.f32.mrb[0].mxu0
    %v762 = vpop.f32.mrb[0].mxu0
    %v763 = vadd.f32 0.0, %v762
    %v764 = vpop.f32.mrb[0].mxu0
    %765 = vdwg.mxu0
    %v766 = vpack.c.bf16 %v763, %v760
    %s767 = scalar_lea.vmem %s10, 4
    %v768 = vld [vmem:[%s767] sm:$0xf]
    %v770 = vsel %vm324, %v766, 0
    %vm772 = vcmask 1043456
    %v774 = vsel %vm772, %v768, 0
    %776 = vmatprep.subr.bf16.mxu0 0
    %777 = vmatpush1.bf16.msra.mxu0 %v774
    %778 = vmatprep.subr.bf16.mxu0 0
    %779 = vmatpush1.bf16.msra.mxu0 0
    %780 = vmatprep.subr.bf16.mxu0 0
    %781 = vmatpush1.bf16.msra.mxu0 0
    %782 = vmatprep.subr.bf16.mxu0 0
    %783 = vmatpush1.bf16.msra.mxu0 0
    %784 = vmatprep.subr.bf16.mxu0 0
    %785 = vmatpush1.bf16.msra.mxu0 0
    %786 = vmatprep.subr.bf16.mxu0 0
    %787 = vmatpush1.bf16.msra.mxu0 0
    %788 = vmatprep.subr.bf16.mxu0 0
    %789 = vmatpush1.bf16.msra.mxu0 0
    %790 = vmatprep.subr.bf16.mxu0 0
    %791 = vmatpush1.bf16.msra.mxu0 0
    %792 = vmatprep.subr.bf16.mxu0 0
    %793 = vmatpush1.bf16.msra.mxu0 0
    %794 = vmatprep.subr.bf16.mxu0 0
    %795 = vmatpush1.bf16.msra.mxu0 0
    %796 = vmatprep.subr.bf16.mxu0 0
    %797 = vmatpush1.bf16.msra.mxu0 0
    %798 = vmatprep.subr.bf16.mxu0 0
    %799 = vmatpush1.bf16.msra.mxu0 0
    %800 = vmatprep.subr.bf16.mxu0 0
    %801 = vmatpush1.bf16.msra.mxu0 0
    %802 = vmatprep.subr.bf16.mxu0 0
    %803 = vmatpush1.bf16.msra.mxu0 0
    %804 = vmatprep.subr.bf16.mxu0 0
    %805 = vmatpush1.bf16.msra.mxu0 0
    %806 = vmatprep.subr.bf16.mxu0 0
    %807 = vmatpush1.bf16.msra.mxu0 0
    %808 = vmatprep.mubr.bf16.mxu0 0
    %809 = vmatmul.mubr.bf16.gmra.mrb[0].mxu0 %v770
    %v810 = vpop.f32.mrb[0].mxu0
    %v811 = vadd.f32 0.0, %v810
    %v812 = vpop.f32.mrb[0].mxu0
    %v813 = vpop.f32.mrb[0].mxu0
    %v814 = vadd.f32 0.0, %v813
    %v815 = vpop.f32.mrb[0].mxu0
    %816 = vdwg.mxu0
    %v818 = vsel %vm324, %v445, 0
    %v821 = vsel %vm772, %v446, 0
    %823 = vmatprep.subr.bf16.mxu0 0
    %824 = vmatpush1.bf16.msra.mxu0 %v821
    %825 = vmatprep.subr.bf16.mxu0 0
    %826 = vmatpush1.bf16.msra.mxu0 0
    %827 = vmatprep.subr.bf16.mxu0 0
    %828 = vmatpush1.bf16.msra.mxu0 0
    %829 = vmatprep.subr.bf16.mxu0 0
    %830 = vmatpush1.bf16.msra.mxu0 0
    %831 = vmatprep.subr.bf16.mxu0 0
    %832 = vmatpush1.bf16.msra.mxu0 0
    %833 = vmatprep.subr.bf16.mxu0 0
    %834 = vmatpush1.bf16.msra.mxu0 0
    %835 = vmatprep.subr.bf16.mxu0 0
    %836 = vmatpush1.bf16.msra.mxu0 0
    %837 = vmatprep.subr.bf16.mxu0 0
    %838 = vmatpush1.bf16.msra.mxu0 0
    %839 = vmatprep.subr.bf16.mxu0 0
    %840 = vmatpush1.bf16.msra.mxu0 0
    %841 = vmatprep.subr.bf16.mxu0 0
    %842 = vmatpush1.bf16.msra.mxu0 0
    %843 = vmatprep.subr.bf16.mxu0 0
    %844 = vmatpush1.bf16.msra.mxu0 0
    %845 = vmatprep.subr.bf16.mxu0 0
    %846 = vmatpush1.bf16.msra.mxu0 0
    %847 = vmatprep.subr.bf16.mxu0 0
    %848 = vmatpush1.bf16.msra.mxu0 0
    %849 = vmatprep.subr.bf16.mxu0 0
    %850 = vmatpush1.bf16.msra.mxu0 0
    %851 = vmatprep.subr.bf16.mxu0 0
    %852 = vmatpush1.bf16.msra.mxu0 0
    %853 = vmatprep.subr.bf16.mxu0 0
    %854 = vmatpush1.bf16.msra.mxu0 0
    %855 = vmatprep.mubr.bf16.mxu0 0
    %856 = vmatmul.mubr.bf16.gmra.mrb[0].mxu0 %v818
    %v857 = vpop.f32.mrb[0].mxu0
    %v858 = vadd.f32 %v811, %v857
    %v859 = vpop.f32.mrb[0].mxu0
    %v860 = vpop.f32.mrb[0].mxu0
    %v861 = vadd.f32 %v814, %v860
    %v862 = vpop.f32.mrb[0].mxu0
    %863 = vdwg.mxu0
    %s864 = scalar_lea.vmem %s4, 32
    %v865 = vld [vmem:[%s864] sm:$0xf]
    %v866 = vld [vmem:[%s864 + $0x4] sm:$0xf]
    %v867 = vld [vmem:[%s864 + $0x8] sm:$0xf]
    %v868 = vld [vmem:[%s864 + $0xc] sm:$0xf]
    %s869 = scalar_lea.vmem %s7, 2
    %v870 = vld [vmem:[%s869] sm:$0x1]
    %v872 = vlaneseq
    %v873 = vshrl.u32 %v872, 7
    %v874 = vsub.s32 0, %v873
    %v875 = vrot.slane %v870, %v874
    %v881 = vunpack.c.l.b16 %v865
    %v882 = vunpack.c.l.b16 %v866
    %v883 = vunpack.c.l.b16 %v867
    %v884 = vunpack.c.l.b16 %v868
    %v885 = vpack.c.b16 %v882, %v881
    %v886 = vpack.c.b16 %v884, %v883
    %889 = vmatprep.subr.bf16.mxu0 0
    %890 = vmatpush1.bf16.msra.mxu0 %v885
    %891 = vmatprep.subr.bf16.mxu0 0
    %892 = vmatpush1.bf16.msra.mxu0 %v886
    %893 = vmatprep.subr.bf16.mxu0 0
    %894 = vmatpush1.bf16.msra.mxu0 0
    %895 = vmatprep.subr.bf16.mxu0 0
    %896 = vmatpush1.bf16.msra.mxu0 0
    %897 = vmatprep.subr.bf16.mxu0 0
    %898 = vmatpush1.bf16.msra.mxu0 0
    %899 = vmatprep.subr.bf16.mxu0 0
    %900 = vmatpush1.bf16.msra.mxu0 0
    %901 = vmatprep.subr.bf16.mxu0 0
    %902 = vmatpush1.bf16.msra.mxu0 0
    %903 = vmatprep.subr.bf16.mxu0 0
    %904 = vmatpush1.bf16.msra.mxu0 0
    %905 = vmatprep.subr.bf16.mxu0 0
    %906 = vmatpush1.bf16.msra.mxu0 0
    %907 = vmatprep.subr.bf16.mxu0 0
    %908 = vmatpush1.bf16.msra.mxu0 0
    %909 = vmatprep.subr.bf16.mxu0 0
    %910 = vmatpush1.bf16.msra.mxu0 0
    %911 = vmatprep.subr.bf16.mxu0 0
    %912 = vmatpush1.bf16.msra.mxu0 0
    %913 = vmatprep.subr.bf16.mxu0 0
    %914 = vmatpush1.bf16.msra.mxu0 0
    %915 = vmatprep.subr.bf16.mxu0 0
    %916 = vmatpush1.bf16.msra.mxu0 0
    %917 = vmatprep.subr.bf16.mxu0 0
    %918 = vmatpush1.bf16.msra.mxu0 0
    %919 = vmatprep.subr.bf16.mxu0 0
    %920 = vmatpush1.bf16.msra.mxu0 0
    %921 = vmatprep.mubr.bf16.mxu0 0
    %922 = vmatmul.mubr.bf16.gmra.mrb[0].mxu0 %v151
    %v923 = vpop.f32.mrb[0].mxu0
    %v924 = vadd.f32 %v875, %v923
    %v925 = vpop.f32.mrb[0].mxu0
    %v926 = vpop.f32.mrb[0].mxu0
    %v927 = vadd.f32 %v875, %v926
    %v928 = vpop.f32.mrb[0].mxu0
    %929 = vdwg.mxu0
    %s930 = scalar_lea.vmem %s5, 32
    %v931 = vld [vmem:[%s930] sm:$0xf]
    %v932 = vld [vmem:[%s930 + $0x4] sm:$0xf]
    %v933 = vld [vmem:[%s930 + $0x8] sm:$0xf]
    %v934 = vld [vmem:[%s930 + $0xc] sm:$0xf]
    %s935 = scalar_lea.vmem %s8, 2
    %v936 = vld [vmem:[%s935] sm:$0x1]
    %v938 = vlaneseq
    %v939 = vshrl.u32 %v938, 7
    %v940 = vsub.s32 0, %v939
    %v941 = vrot.slane %v936, %v940
    %v947 = vunpack.c.l.b16 %v931
    %v948 = vunpack.c.l.b16 %v932
    %v949 = vunpack.c.l.b16 %v933
    %v950 = vunpack.c.l.b16 %v934
    %v951 = vpack.c.b16 %v948, %v947
    %v952 = vpack.c.b16 %v950, %v949
    %955 = vmatprep.subr.bf16.mxu0 0
    %956 = vmatpush1.bf16.msra.mxu0 %v951
    %957 = vmatprep.subr.bf16.mxu0 0
    %958 = vmatpush1.bf16.msra.mxu0 %v952
    %959 = vmatprep.subr.bf16.mxu0 0
    %960 = vmatpush1.bf16.msra.mxu0 0
    %961 = vmatprep.subr.bf16.mxu0 0
    %962 = vmatpush1.bf16.msra.mxu0 0
    %963 = vmatprep.subr.bf16.mxu0 0
    %964 = vmatpush1.bf16.msra.mxu0 0
    %965 = vmatprep.subr.bf16.mxu0 0
    %966 = vmatpush1.bf16.msra.mxu0 0
    %967 = vmatprep.subr.bf16.mxu0 0
    %968 = vmatpush1.bf16.msra.mxu0 0
    %969 = vmatprep.subr.bf16.mxu0 0
    %970 = vmatpush1.bf16.msra.mxu0 0
    %971 = vmatprep.subr.bf16.mxu0 0
    %972 = vmatpush1.bf16.msra.mxu0 0
    %973 = vmatprep.subr.bf16.mxu0 0
    %974 = vmatpush1.bf16.msra.mxu0 0
    %975 = vmatprep.subr.bf16.mxu0 0
    %976 = vmatpush1.bf16.msra.mxu0 0
    %977 = vmatprep.subr.bf16.mxu0 0
    %978 = vmatpush1.bf16.msra.mxu0 0
    %979 = vmatprep.subr.bf16.mxu0 0
    %980 = vmatpush1.bf16.msra.mxu0 0
    %981 = vmatprep.subr.bf16.mxu0 0
    %982 = vmatpush1.bf16.msra.mxu0 0
    %983 = vmatprep.subr.bf16.mxu0 0
    %984 = vmatpush1.bf16.msra.mxu0 0
    %985 = vmatprep.subr.bf16.mxu0 0
    %986 = vmatpush1.bf16.msra.mxu0 0
    %987 = vmatprep.mubr.bf16.mxu0 0
    %988 = vmatmul.mubr.bf16.gmra.mrb[0].mxu0 %v151
    %v989 = vpop.f32.mrb[0].mxu0
    %v990 = vadd.f32 %v941, %v989
    %v991 = vpop.f32.mrb[0].mxu0
    %v992 = vpop.f32.mrb[0].mxu0
    %v993 = vadd.f32 %v941, %v992
    %v994 = vpop.f32.mrb[0].mxu0
    %995 = vdwg.mxu0
    %s996 = scalar_lea.vmem %s6, 32
    %v997 = vld [vmem:[%s996] sm:$0xf]
    %v998 = vld [vmem:[%s996 + $0x4] sm:$0xf]
    %v999 = vld [vmem:[%s996 + $0x8] sm:$0xf]
    %v1000 = vld [vmem:[%s996 + $0xc] sm:$0xf]
    %s1001 = scalar_lea.vmem %s9, 2
    %v1002 = vld [vmem:[%s1001] sm:$0x1]
    %v1004 = vlaneseq
    %v1005 = vshrl.u32 %v1004, 7
    %v1006 = vsub.s32 0, %v1005
    %v1007 = vrot.slane %v1002, %v1006
    %v1013 = vunpack.c.l.b16 %v997
    %v1014 = vunpack.c.l.b16 %v998
    %v1015 = vunpack.c.l.b16 %v999
    %v1016 = vunpack.c.l.b16 %v1000
    %v1017 = vpack.c.b16 %v1014, %v1013
    %v1018 = vpack.c.b16 %v1016, %v1015
    %1021 = vmatprep.subr.bf16.mxu0 0
    %1022 = vmatpush1.bf16.msra.mxu0 %v1017
    %1023 = vmatprep.subr.bf16.mxu0 0
    %1024 = vmatpush1.bf16.msra.mxu0 %v1018
    %1025 = vmatprep.subr.bf16.mxu0 0
    %1026 = vmatpush1.bf16.msra.mxu0 0
    %1027 = vmatprep.subr.bf16.mxu0 0
    %1028 = vmatpush1.bf16.msra.mxu0 0
    %1029 = vmatprep.subr.bf16.mxu0 0
    %1030 = vmatpush1.bf16.msra.mxu0 0
    %1031 = vmatprep.subr.bf16.mxu0 0
    %1032 = vmatpush1.bf16.msra.mxu0 0
    %1033 = vmatprep.subr.bf16.mxu0 0
    %1034 = vmatpush1.bf16.msra.mxu0 0
    %1035 = vmatprep.subr.bf16.mxu0 0
    %1036 = vmatpush1.bf16.msra.mxu0 0
    %1037 = vmatprep.subr.bf16.mxu0 0
    %1038 = vmatpush1.bf16.msra.mxu0 0
    %1039 = vmatprep.subr.bf16.mxu0 0
    %1040 = vmatpush1.bf16.msra.mxu0 0
    %1041 = vmatprep.subr.bf16.mxu0 0
    %1042 = vmatpush1.bf16.msra.mxu0 0
    %1043 = vmatprep.subr.bf16.mxu0 0
    %1044 = vmatpush1.bf16.msra.mxu0 0
    %1045 = vmatprep.subr.bf16.mxu0 0
    %1046 = vmatpush1.bf16.msra.mxu0 0
    %1047 = vmatprep.subr.bf16.mxu0 0
    %1048 = vmatpush1.bf16.msra.mxu0 0
    %1049 = vmatprep.subr.bf16.mxu0 0
    %1050 = vmatpush1.bf16.msra.mxu0 0
    %1051 = vmatprep.subr.bf16.mxu0 0
    %1052 = vmatpush1.bf16.msra.mxu0 0
    %1053 = vmatprep.mubr.bf16.mxu0 0
    %1054 = vmatmul.mubr.bf16.gmra.mrb[0].mxu0 %v151
    %v1055 = vpop.f32.mrb[0].mxu0
    %v1056 = vadd.f32 %v1007, %v1055
    %v1057 = vpop.f32.mrb[0].mxu0
    %v1058 = vpop.f32.mrb[0].mxu0
    %v1059 = vadd.f32 %v1007, %v1058
    %v1060 = vpop.f32.mrb[0].mxu0
    %1061 = vdwg.mxu0
    %v1062 = vpack.c.bf16 %v927, %v924
    %v1063 = vpack.c.bf16 %v993, %v990
    %v1065 = vsel %vm324, %v1062, 0
    %v1068 = vsel %vm324, %v1063, 0
    %1070 = vmatprep.subr.bf16.mxu0 0
    %1071 = vmatpush1.bf16.xpose.msra.mxu0 %v1068
    %1072 = vmatprep.subr.bf16.mxu0 0
    %1073 = vmatpush1.bf16.xpose.msra.mxu0 0
    %1074 = vmatprep.subr.bf16.mxu0 0
    %1075 = vmatpush1.bf16.xpose.msra.mxu0 0
    %1076 = vmatprep.subr.bf16.mxu0 0
    %1077 = vmatpush1.bf16.xpose.msra.mxu0 0
    %1078 = vmatprep.subr.bf16.mxu0 0
    %1079 = vmatpush1.bf16.xpose.msra.mxu0 0
    %1080 = vmatprep.subr.bf16.mxu0 0
    %1081 = vmatpush1.bf16.xpose.msra.mxu0 0
    %1082 = vmatprep.subr.bf16.mxu0 0
    %1083 = vmatpush1.bf16.xpose.msra.mxu0 0
    %1084 = vmatprep.subr.bf16.mxu0 0
    %1085 = vmatpush1.bf16.xpose.msra.mxu0 0
    %1086 = vmatprep.subr.bf16.mxu0 0
    %1087 = vmatpush1.bf16.xpose.msra.mxu0 0
    %1088 = vmatprep.subr.bf16.mxu0 0
    %1089 = vmatpush1.bf16.xpose.msra.mxu0 0
    %1090 = vmatprep.subr.bf16.mxu0 0
    %1091 = vmatpush1.bf16.xpose.msra.mxu0 0
    %1092 = vmatprep.subr.bf16.mxu0 0
    %1093 = vmatpush1.bf16.xpose.msra.mxu0 0
    %1094 = vmatprep.subr.bf16.mxu0 0
    %1095 = vmatpush1.bf16.xpose.msra.mxu0 0
    %1096 = vmatprep.subr.bf16.mxu0 0
    %1097 = vmatpush1.bf16.xpose.msra.mxu0 0
    %1098 = vmatprep.subr.bf16.mxu0 0
    %1099 = vmatpush1.bf16.xpose.msra.mxu0 0
    %1100 = vmatprep.subr.bf16.mxu0 0
    %1101 = vmatpush1.bf16.xpose.msra.mxu0 0
    %1102 = vmatprep.mubr.bf16.mxu0 0
    %1103 = vmatmul.mubr.bf16.gmra.mrb[0].mxu0 %v1065
    %v1104 = vpop.f32.mrb[0].mxu0
    %v1105 = vadd.f32 0.0, %v1104
    %v1106 = vpop.f32.mrb[0].mxu0
    %v1107 = vpop.f32.mrb[0].mxu0
    %v1108 = vadd.f32 0.0, %v1107
    %v1109 = vpop.f32.mrb[0].mxu0
    %1110 = vdwg.mxu0
    %v1111 = vmul.f32 %v1105, 0.35355338
    %v1112 = vmul.f32 %v1108, 0.35355338
    %v1113 = vadd.f32 %v1111, %v76
    %v1114 = vadd.f32 %v1112, %v77
    %v1115 = vsel %vm376, %v1113, -inf
    %1116 = vmax.xlane.f32.xlu0 %v1115
    %v1117 = vpop.xlane.xlu0 %1116
    %v1118 = vsel %vm376, %v1114, -inf
    %1119 = vmax.xlane.f32.xlu0 %v1118
    %v1120 = vpop.xlane.xlu0 %1119
    %v1121 = vsub.f32 %v1113, %v1117
    %v1122 = vsub.f32 %v1114, %v1120
    %v1123 = vmul.f32 %v1121, 1.442695
    %v1124 = vpow.pop %v1123
    %v1125 = vmul.f32 %v1122, 1.442695
    %v1126 = vpow.pop %v1125
    %v1127 = vsel %vm376, %v1124, 0.0
    %1128 = vadd.xlane.f32.xlu0 %v1127
    %v1129 = vpop.xlane.xlu0 %1128
    %v1130 = vsel %vm376, %v1126, 0.0
    %1131 = vadd.xlane.f32.xlu0 %v1130
    %v1132 = vpop.xlane.xlu0 %1131
    %v1133 = vrcp.pop %v1129
    %v1134 = vmul.f32 %v1124, %v1133
    %v1135 = vrcp.pop %v1132
    %v1136 = vmul.f32 %v1126, %v1135
    %v1137 = vpack.c.bf16 %v1136, %v1134
    %v1138 = vpack.c.bf16 %v1059, %v1056
    %v1140 = vsel %vm376, %v1137, 0
    %1142 = vmatprep.subr.bf16.mxu0 0
    %1143 = vmatpush1.bf16.msra.mxu0 %v1138
    %1144 = vmatprep.subr.bf16.mxu0 0
    %1145 = vmatpush1.bf16.msra.mxu0 0
    %1146 = vmatprep.subr.bf16.mxu0 0
    %1147 = vmatpush1.bf16.msra.mxu0 0
    %1148 = vmatprep.subr.bf16.mxu0 0
    %1149 = vmatpush1.bf16.msra.mxu0 0
    %1150 = vmatprep.subr.bf16.mxu0 0
    %1151 = vmatpush1.bf16.msra.mxu0 0
    %1152 = vmatprep.subr.bf16.mxu0 0
    %1153 = vmatpush1.bf16.msra.mxu0 0
    %1154 = vmatprep.subr.bf16.mxu0 0
    %1155 = vmatpush1.bf16.msra.mxu0 0
    %1156 = vmatprep.subr.bf16.mxu0 0
    %1157 = vmatpush1.bf16.msra.mxu0 0
    %1158 = vmatprep.subr.bf16.mxu0 0
    %1159 = vmatpush1.bf16.msra.mxu0 0
    %1160 = vmatprep.subr.bf16.mxu0 0
    %1161 = vmatpush1.bf16.msra.mxu0 0
    %1162 = vmatprep.subr.bf16.mxu0 0
    %1163 = vmatpush1.bf16.msra.mxu0 0
    %1164 = vmatprep.subr.bf16.mxu0 0
    %1165 = vmatpush1.bf16.msra.mxu0 0
    %1166 = vmatprep.subr.bf16.mxu0 0
    %1167 = vmatpush1.bf16.msra.mxu0 0
    %1168 = vmatprep.subr.bf16.mxu0 0
    %1169 = vmatpush1.bf16.msra.mxu0 0
    %1170 = vmatprep.subr.bf16.mxu0 0
    %1171 = vmatpush1.bf16.msra.mxu0 0
    %1172 = vmatprep.subr.bf16.mxu0 0
    %1173 = vmatpush1.bf16.msra.mxu0 0
    %1174 = vmatprep.mubr.bf16.mxu0 0
    %1175 = vmatmul.mubr.bf16.gmra.mrb[0].mxu0 %v1140
    %v1176 = vpop.f32.mrb[0].mxu0
    %v1177 = vadd.f32 0.0, %v1176
    %v1178 = vpop.f32.mrb[0].mxu0
    %v1179 = vpop.f32.mrb[0].mxu0
    %v1180 = vadd.f32 0.0, %v1179
    %v1181 = vpop.f32.mrb[0].mxu0
    %1182 = vdwg.mxu0
    %v1183 = vpack.c.bf16 %v1180, %v1177
    %s1184 = scalar_lea.vmem %s10, 8
    %v1185 = vld [vmem:[%s1184] sm:$0xf]
    %v1187 = vsel %vm324, %v1183, 0
    %v1190 = vsel %vm772, %v1185, 0
    %1192 = vmatprep.subr.bf16.mxu0 0
    %1193 = vmatpush1.bf16.msra.mxu0 %v1190
    %1194 = vmatprep.subr.bf16.mxu0 0
    %1195 = vmatpush1.bf16.msra.mxu0 0
    %1196 = vmatprep.subr.bf16.mxu0 0
    %1197 = vmatpush1.bf16.msra.mxu0 0
    %1198 = vmatprep.subr.bf16.mxu0 0
    %1199 = vmatpush1.bf16.msra.mxu0 0
    %1200 = vmatprep.subr.bf16.mxu0 0
    %1201 = vmatpush1.bf16.msra.mxu0 0
    %1202 = vmatprep.subr.bf16.mxu0 0
    %1203 = vmatpush1.bf16.msra.mxu0 0
    %1204 = vmatprep.subr.bf16.mxu0 0
    %1205 = vmatpush1.bf16.msra.mxu0 0
    %1206 = vmatprep.subr.bf16.mxu0 0
    %1207 = vmatpush1.bf16.msra.mxu0 0
    %1208 = vmatprep.subr.bf16.mxu0 0
    %1209 = vmatpush1.bf16.msra.mxu0 0
    %1210 = vmatprep.subr.bf16.mxu0 0
    %1211 = vmatpush1.bf16.msra.mxu0 0
    %1212 = vmatprep.subr.bf16.mxu0 0
    %1213 = vmatpush1.bf16.msra.mxu0 0
    %1214 = vmatprep.subr.bf16.mxu0 0
    %1215 = vmatpush1.bf16.msra.mxu0 0
    %1216 = vmatprep.subr.bf16.mxu0 0
    %1217 = vmatpush1.bf16.msra.mxu0 0
    %1218 = vmatprep.subr.bf16.mxu0 0
    %1219 = vmatpush1.bf16.msra.mxu0 0
    %1220 = vmatprep.subr.bf16.mxu0 0
    %1221 = vmatpush1.bf16.msra.mxu0 0
    %1222 = vmatprep.subr.bf16.mxu0 0
    %1223 = vmatpush1.bf16.msra.mxu0 0
    %1224 = vmatprep.mubr.bf16.mxu0 0
    %1225 = vmatmul.mubr.bf16.gmra.mrb[0].mxu0 %v1187
    %v1226 = vpop.f32.mrb[0].mxu0
    %v1227 = vadd.f32 0.0, %v1226
    %v1228 = vpop.f32.mrb[0].mxu0
    %v1229 = vpop.f32.mrb[0].mxu0
    %v1230 = vadd.f32 0.0, %v1229
    %v1231 = vpop.f32.mrb[0].mxu0
    %1232 = vdwg.mxu0
    %v1233 = vadd.f32 %v858, %v1227
    %v1234 = vadd.f32 %v861, %v1230
    %s1235 = scalar_lea.vmem %s4, 48
    %v1236 = vld [vmem:[%s1235] sm:$0xf]
    %v1237 = vld [vmem:[%s1235 + $0x4] sm:$0xf]
    %v1238 = vld [vmem:[%s1235 + $0x8] sm:$0xf]
    %v1239 = vld [vmem:[%s1235 + $0xc] sm:$0xf]
    %s1240 = scalar_lea.vmem %s7, 3
    %v1241 = vld [vmem:[%s1240] sm:$0x1]
    %v1243 = vlaneseq
    %v1244 = vshrl.u32 %v1243, 7
    %v1245 = vsub.s32 0, %v1244
    %v1246 = vrot.slane %v1241, %v1245
    %v1252 = vunpack.c.l.b16 %v1236
    %v1253 = vunpack.c.l.b16 %v1237
    %v1254 = vunpack.c.l.b16 %v1238
    %v1255 = vunpack.c.l.b16 %v1239
    %v1256 = vpack.c.b16 %v1253, %v1252
    %v1257 = vpack.c.b16 %v1255, %v1254
    %1260 = vmatprep.subr.bf16.mxu0 0
    %1261 = vmatpush1.bf16.msra.mxu0 %v1256
    %1262 = vmatprep.subr.bf16.mxu0 0
    %1263 = vmatpush1.bf16.msra.mxu0 %v1257
    %1264 = vmatprep.subr.bf16.mxu0 0
    %1265 = vmatpush1.bf16.msra.mxu0 0
    %1266 = vmatprep.subr.bf16.mxu0 0
    %1267 = vmatpush1.bf16.msra.mxu0 0
    %1268 = vmatprep.subr.bf16.mxu0 0
    %1269 = vmatpush1.bf16.msra.mxu0 0
    %1270 = vmatprep.subr.bf16.mxu0 0
    %1271 = vmatpush1.bf16.msra.mxu0 0
    %1272 = vmatprep.subr.bf16.mxu0 0
    %1273 = vmatpush1.bf16.msra.mxu0 0
    %1274 = vmatprep.subr.bf16.mxu0 0
    %1275 = vmatpush1.bf16.msra.mxu0 0
    %1276 = vmatprep.subr.bf16.mxu0 0
    %1277 = vmatpush1.bf16.msra.mxu0 0
    %1278 = vmatprep.subr.bf16.mxu0 0
    %1279 = vmatpush1.bf16.msra.mxu0 0
    %1280 = vmatprep.subr.bf16.mxu0 0
    %1281 = vmatpush1.bf16.msra.mxu0 0
    %1282 = vmatprep.subr.bf16.mxu0 0
    %1283 = vmatpush1.bf16.msra.mxu0 0
    %1284 = vmatprep.subr.bf16.mxu0 0
    %1285 = vmatpush1.bf16.msra.mxu0 0
    %1286 = vmatprep.subr.bf16.mxu0 0
    %1287 = vmatpush1.bf16.msra.mxu0 0
    %1288 = vmatprep.subr.bf16.mxu0 0
    %1289 = vmatpush1.bf16.msra.mxu0 0
    %1290 = vmatprep.subr.bf16.mxu0 0
    %1291 = vmatpush1.bf16.msra.mxu0 0
    %1292 = vmatprep.mubr.bf16.mxu0 0
    %1293 = vmatmul.mubr.bf16.gmra.mrb[0].mxu0 %v151
    %v1294 = vpop.f32.mrb[0].mxu0
    %v1295 = vadd.f32 %v1246, %v1294
    %v1296 = vpop.f32.mrb[0].mxu0
    %v1297 = vpop.f32.mrb[0].mxu0
    %v1298 = vadd.f32 %v1246, %v1297
    %v1299 = vpop.f32.mrb[0].mxu0
    %1300 = vdwg.mxu0
    %s1301 = scalar_lea.vmem %s5, 48
    %v1302 = vld [vmem:[%s1301] sm:$0xf]
    %v1303 = vld [vmem:[%s1301 + $0x4] sm:$0xf]
    %v1304 = vld [vmem:[%s1301 + $0x8] sm:$0xf]
    %v1305 = vld [vmem:[%s1301 + $0xc] sm:$0xf]
    %s1306 = scalar_lea.vmem %s8, 3
    %v1307 = vld [vmem:[%s1306] sm:$0x1]
    %v1309 = vlaneseq
    %v1310 = vshrl.u32 %v1309, 7
    %v1311 = vsub.s32 0, %v1310
    %v1312 = vrot.slane %v1307, %v1311
    %v1318 = vunpack.c.l.b16 %v1302
    %v1319 = vunpack.c.l.b16 %v1303
    %v1320 = vunpack.c.l.b16 %v1304
    %v1321 = vunpack.c.l.b16 %v1305
    %v1322 = vpack.c.b16 %v1319, %v1318
    %v1323 = vpack.c.b16 %v1321, %v1320
    %1326 = vmatprep.subr.bf16.mxu0 0
    %1327 = vmatpush1.bf16.msra.mxu0 %v1322
    %1328 = vmatprep.subr.bf16.mxu0 0
    %1329 = vmatpush1.bf16.msra.mxu0 %v1323
    %1330 = vmatprep.subr.bf16.mxu0 0
    %1331 = vmatpush1.bf16.msra.mxu0 0
    %1332 = vmatprep.subr.bf16.mxu0 0
    %1333 = vmatpush1.bf16.msra.mxu0 0
    %1334 = vmatprep.subr.bf16.mxu0 0
    %1335 = vmatpush1.bf16.msra.mxu0 0
    %1336 = vmatprep.subr.bf16.mxu0 0
    %1337 = vmatpush1.bf16.msra.mxu0 0
    %1338 = vmatprep.subr.bf16.mxu0 0
    %1339 = vmatpush1.bf16.msra.mxu0 0
    %1340 = vmatprep.subr.bf16.mxu0 0
    %1341 = vmatpush1.bf16.msra.mxu0 0
    %1342 = vmatprep.subr.bf16.mxu0 0
    %1343 = vmatpush1.bf16.msra.mxu0 0
    %1344 = vmatprep.subr.bf16.mxu0 0
    %1345 = vmatpush1.bf16.msra.mxu0 0
    %1346 = vmatprep.subr.bf16.mxu0 0
    %1347 = vmatpush1.bf16.msra.mxu0 0
    %1348 = vmatprep.subr.bf16.mxu0 0
    %1349 = vmatpush1.bf16.msra.mxu0 0
    %1350 = vmatprep.subr.bf16.mxu0 0
    %1351 = vmatpush1.bf16.msra.mxu0 0
    %1352 = vmatprep.subr.bf16.mxu0 0
    %1353 = vmatpush1.bf16.msra.mxu0 0
    %1354 = vmatprep.subr.bf16.mxu0 0
    %1355 = vmatpush1.bf16.msra.mxu0 0
    %1356 = vmatprep.subr.bf16.mxu0 0
    %1357 = vmatpush1.bf16.msra.mxu0 0
    %1358 = vmatprep.mubr.bf16.mxu0 0
    %1359 = vmatmul.mubr.bf16.gmra.mrb[0].mxu0 %v151
    %v1360 = vpop.f32.mrb[0].mxu0
    %v1361 = vadd.f32 %v1312, %v1360
    %v1362 = vpop.f32.mrb[0].mxu0
    %v1363 = vpop.f32.mrb[0].mxu0
    %v1364 = vadd.f32 %v1312, %v1363
    %v1365 = vpop.f32.mrb[0].mxu0
    %1366 = vdwg.mxu0
    %s1367 = scalar_lea.vmem %s6, 48
    %v1368 = vld [vmem:[%s1367] sm:$0xf]
    %v1369 = vld [vmem:[%s1367 + $0x4] sm:$0xf]
    %v1370 = vld [vmem:[%s1367 + $0x8] sm:$0xf]
    %v1371 = vld [vmem:[%s1367 + $0xc] sm:$0xf]
    %s1372 = scalar_lea.vmem %s9, 3
    %v1373 = vld [vmem:[%s1372] sm:$0x1]
    %v1375 = vlaneseq
    %v1376 = vshrl.u32 %v1375, 7
    %v1377 = vsub.s32 0, %v1376
    %v1378 = vrot.slane %v1373, %v1377
    %v1384 = vunpack.c.l.b16 %v1368
    %v1385 = vunpack.c.l.b16 %v1369
    %v1386 = vunpack.c.l.b16 %v1370
    %v1387 = vunpack.c.l.b16 %v1371
    %v1388 = vpack.c.b16 %v1385, %v1384
    %v1389 = vpack.c.b16 %v1387, %v1386
    %1392 = vmatprep.subr.bf16.mxu0 0
    %1393 = vmatpush1.bf16.msra.mxu0 %v1388
    %1394 = vmatprep.subr.bf16.mxu0 0
    %1395 = vmatpush1.bf16.msra.mxu0 %v1389
    %1396 = vmatprep.subr.bf16.mxu0 0
    %1397 = vmatpush1.bf16.msra.mxu0 0
    %1398 = vmatprep.subr.bf16.mxu0 0
    %1399 = vmatpush1.bf16.msra.mxu0 0
    %1400 = vmatprep.subr.bf16.mxu0 0
    %1401 = vmatpush1.bf16.msra.mxu0 0
    %1402 = vmatprep.subr.bf16.mxu0 0
    %1403 = vmatpush1.bf16.msra.mxu0 0
    %1404 = vmatprep.subr.bf16.mxu0 0
    %1405 = vmatpush1.bf16.msra.mxu0 0
    %1406 = vmatprep.subr.bf16.mxu0 0
    %1407 = vmatpush1.bf16.msra.mxu0 0
    %1408 = vmatprep.subr.bf16.mxu0 0
    %1409 = vmatpush1.bf16.msra.mxu0 0
    %1410 = vmatprep.subr.bf16.mxu0 0
    %1411 = vmatpush1.bf16.msra.mxu0 0
    %1412 = vmatprep.subr.bf16.mxu0 0
    %1413 = vmatpush1.bf16.msra.mxu0 0
    %1414 = vmatprep.subr.bf16.mxu0 0
    %1415 = vmatpush1.bf16.msra.mxu0 0
    %1416 = vmatprep.subr.bf16.mxu0 0
    %1417 = vmatpush1.bf16.msra.mxu0 0
    %1418 = vmatprep.subr.bf16.mxu0 0
    %1419 = vmatpush1.bf16.msra.mxu0 0
    %1420 = vmatprep.subr.bf16.mxu0 0
    %1421 = vmatpush1.bf16.msra.mxu0 0
    %1422 = vmatprep.subr.bf16.mxu0 0
    %1423 = vmatpush1.bf16.msra.mxu0 0
    %1424 = vmatprep.mubr.bf16.mxu0 0
    %1425 = vmatmul.mubr.bf16.gmra.mrb[0].mxu0 %v151
    %v1426 = vpop.f32.mrb[0].mxu0
    %v1427 = vadd.f32 %v1378, %v1426
    %v1428 = vpop.f32.mrb[0].mxu0
    %v1429 = vpop.f32.mrb[0].mxu0
    %v1430 = vadd.f32 %v1378, %v1429
    %v1431 = vpop.f32.mrb[0].mxu0
    %1432 = vdwg.mxu0
    %v1433 = vpack.c.bf16 %v1298, %v1295
    %v1434 = vpack.c.bf16 %v1364, %v1361
    %v1436 = vsel %vm324, %v1433, 0
    %v1439 = vsel %vm324, %v1434, 0
    %1441 = vmatprep.subr.bf16.mxu0 0
    %1442 = vmatpush1.bf16.xpose.msra.mxu0 %v1439
    %1443 = vmatprep.subr.bf16.mxu0 0
    %1444 = vmatpush1.bf16.xpose.msra.mxu0 0
    %1445 = vmatprep.subr.bf16.mxu0 0
    %1446 = vmatpush1.bf16.xpose.msra.mxu0 0
    %1447 = vmatprep.subr.bf16.mxu0 0
    %1448 = vmatpush1.bf16.xpose.msra.mxu0 0
    %1449 = vmatprep.subr.bf16.mxu0 0
    %1450 = vmatpush1.bf16.xpose.msra.mxu0 0
    %1451 = vmatprep.subr.bf16.mxu0 0
    %1452 = vmatpush1.bf16.xpose.msra.mxu0 0
    %1453 = vmatprep.subr.bf16.mxu0 0
    %1454 = vmatpush1.bf16.xpose.msra.mxu0 0
    %1455 = vmatprep.subr.bf16.mxu0 0
    %1456 = vmatpush1.bf16.xpose.msra.mxu0 0
    %1457 = vmatprep.subr.bf16.mxu0 0
    %1458 = vmatpush1.bf16.xpose.msra.mxu0 0
    %1459 = vmatprep.subr.bf16.mxu0 0
    %1460 = vmatpush1.bf16.xpose.msra.mxu0 0
    %1461 = vmatprep.subr.bf16.mxu0 0
    %1462 = vmatpush1.bf16.xpose.msra.mxu0 0
    %1463 = vmatprep.subr.bf16.mxu0 0
    %1464 = vmatpush1.bf16.xpose.msra.mxu0 0
    %1465 = vmatprep.subr.bf16.mxu0 0
    %1466 = vmatpush1.bf16.xpose.msra.mxu0 0
    %1467 = vmatprep.subr.bf16.mxu0 0
    %1468 = vmatpush1.bf16.xpose.msra.mxu0 0
    %1469 = vmatprep.subr.bf16.mxu0 0
    %1470 = vmatpush1.bf16.xpose.msra.mxu0 0
    %1471 = vmatprep.subr.bf16.mxu0 0
    %1472 = vmatpush1.bf16.xpose.msra.mxu0 0
    %1473 = vmatprep.mubr.bf16.mxu0 0
    %1474 = vmatmul.mubr.bf16.gmra.mrb[0].mxu0 %v1436
    %v1475 = vpop.f32.mrb[0].mxu0
    %v1476 = vadd.f32 0.0, %v1475
    %v1477 = vpop.f32.mrb[0].mxu0
    %v1478 = vpop.f32.mrb[0].mxu0
    %v1479 = vadd.f32 0.0, %v1478
    %v1480 = vpop.f32.mrb[0].mxu0
    %1481 = vdwg.mxu0
    %v1482 = vmul.f32 %v1476, 0.35355338
    %v1483 = vmul.f32 %v1479, 0.35355338
    %v1484 = vadd.f32 %v1482, %v76
    %v1485 = vadd.f32 %v1483, %v77
    %v1486 = vsel %vm376, %v1484, -inf
    %1487 = vmax.xlane.f32.xlu0 %v1486
    %v1488 = vpop.xlane.xlu0 %1487
    %v1489 = vsel %vm376, %v1485, -inf
    %1490 = vmax.xlane.f32.xlu0 %v1489
    %v1491 = vpop.xlane.xlu0 %1490
    %v1492 = vsub.f32 %v1484, %v1488
    %v1493 = vsub.f32 %v1485, %v1491
    %v1494 = vmul.f32 %v1492, 1.442695
    %v1495 = vpow.pop %v1494
    %v1496 = vmul.f32 %v1493, 1.442695
    %v1497 = vpow.pop %v1496
    %v1498 = vsel %vm376, %v1495, 0.0
    %1499 = vadd.xlane.f32.xlu0 %v1498
    %v1500 = vpop.xlane.xlu0 %1499
    %v1501 = vsel %vm376, %v1497, 0.0
    %1502 = vadd.xlane.f32.xlu0 %v1501
    %v1503 = vpop.xlane.xlu0 %1502
    %v1504 = vrcp.pop %v1500
    %v1505 = vmul.f32 %v1495, %v1504
    %v1506 = vrcp.pop %v1503
    %v1507 = vmul.f32 %v1497, %v1506
    %v1508 = vpack.c.bf16 %v1507, %v1505
    %v1509 = vpack.c.bf16 %v1430, %v1427
    %v1511 = vsel %vm376, %v1508, 0
    %1513 = vmatprep.subr.bf16.mxu0 0
    %1514 = vmatpush1.bf16.msra.mxu0 %v1509
    %1515 = vmatprep.subr.bf16.mxu0 0
    %1516 = vmatpush1.bf16.msra.mxu0 0
    %1517 = vmatprep.subr.bf16.mxu0 0
    %1518 = vmatpush1.bf16.msra.mxu0 0
    %1519 = vmatprep.subr.bf16.mxu0 0
    %1520 = vmatpush1.bf16.msra.mxu0 0
    %1521 = vmatprep.subr.bf16.mxu0 0
    %1522 = vmatpush1.bf16.msra.mxu0 0
    %1523 = vmatprep.subr.bf16.mxu0 0
    %1524 = vmatpush1.bf16.msra.mxu0 0
    %1525 = vmatprep.subr.bf16.mxu0 0
    %1526 = vmatpush1.bf16.msra.mxu0 0
    %1527 = vmatprep.subr.bf16.mxu0 0
    %1528 = vmatpush1.bf16.msra.mxu0 0
    %1529 = vmatprep.subr.bf16.mxu0 0
    %1530 = vmatpush1.bf16.msra.mxu0 0
    %1531 = vmatprep.subr.bf16.mxu0 0
    %1532 = vmatpush1.bf16.msra.mxu0 0
    %1533 = vmatprep.subr.bf16.mxu0 0
    %1534 = vmatpush1.bf16.msra.mxu0 0
    %1535 = vmatprep.subr.bf16.mxu0 0
    %1536 = vmatpush1.bf16.msra.mxu0 0
    %1537 = vmatprep.subr.bf16.mxu0 0
    %1538 = vmatpush1.bf16.msra.mxu0 0
    %1539 = vmatprep.subr.bf16.mxu0 0
    %1540 = vmatpush1.bf16.msra.mxu0 0
    %1541 = vmatprep.subr.bf16.mxu0 0
    %1542 = vmatpush1.bf16.msra.mxu0 0
    %1543 = vmatprep.subr.bf16.mxu0 0
    %1544 = vmatpush1.bf16.msra.mxu0 0
    %1545 = vmatprep.mubr.bf16.mxu0 0
    %1546 = vmatmul.mubr.bf16.gmra.mrb[0].mxu0 %v1511
    %v1547 = vpop.f32.mrb[0].mxu0
    %v1548 = vadd.f32 0.0, %v1547
    %v1549 = vpop.f32.mrb[0].mxu0
    %v1550 = vpop.f32.mrb[0].mxu0
    %v1551 = vadd.f32 0.0, %v1550
    %v1552 = vpop.f32.mrb[0].mxu0
    %1553 = vdwg.mxu0
    %v1554 = vpack.c.bf16 %v1551, %v1548
    %s1555 = scalar_lea.vmem %s10, 12
    %v1556 = vld [vmem:[%s1555] sm:$0xf]
    %v1558 = vsel %vm324, %v1554, 0
    %v1561 = vsel %vm772, %v1556, 0
    %1563 = vmatprep.subr.bf16.mxu0 0
    %1564 = vmatpush1.bf16.msra.mxu0 %v1561
    %1565 = vmatprep.subr.bf16.mxu0 0
    %1566 = vmatpush1.bf16.msra.mxu0 0
    %1567 = vmatprep.subr.bf16.mxu0 0
    %1568 = vmatpush1.bf16.msra.mxu0 0
    %1569 = vmatprep.subr.bf16.mxu0 0
    %1570 = vmatpush1.bf16.msra.mxu0 0
    %1571 = vmatprep.subr.bf16.mxu0 0
    %1572 = vmatpush1.bf16.msra.mxu0 0
    %1573 = vmatprep.subr.bf16.mxu0 0
    %1574 = vmatpush1.bf16.msra.mxu0 0
    %1575 = vmatprep.subr.bf16.mxu0 0
    %1576 = vmatpush1.bf16.msra.mxu0 0
    %1577 = vmatprep.subr.bf16.mxu0 0
    %1578 = vmatpush1.bf16.msra.mxu0 0
    %1579 = vmatprep.subr.bf16.mxu0 0
    %1580 = vmatpush1.bf16.msra.mxu0 0
    %1581 = vmatprep.subr.bf16.mxu0 0
    %1582 = vmatpush1.bf16.msra.mxu0 0
    %1583 = vmatprep.subr.bf16.mxu0 0
    %1584 = vmatpush1.bf16.msra.mxu0 0
    %1585 = vmatprep.subr.bf16.mxu0 0
    %1586 = vmatpush1.bf16.msra.mxu0 0
    %1587 = vmatprep.subr.bf16.mxu0 0
    %1588 = vmatpush1.bf16.msra.mxu0 0
    %1589 = vmatprep.subr.bf16.mxu0 0
    %1590 = vmatpush1.bf16.msra.mxu0 0
    %1591 = vmatprep.subr.bf16.mxu0 0
    %1592 = vmatpush1.bf16.msra.mxu0 0
    %1593 = vmatprep.subr.bf16.mxu0 0
    %1594 = vmatpush1.bf16.msra.mxu0 0
    %1595 = vmatprep.mubr.bf16.mxu0 0
    %1596 = vmatmul.mubr.bf16.gmra.mrb[0].mxu0 %v1558
    %v1597 = vpop.f32.mrb[0].mxu0
    %v1598 = vadd.f32 0.0, %v1597
    %v1599 = vpop.f32.mrb[0].mxu0
    %v1600 = vpop.f32.mrb[0].mxu0
    %v1601 = vadd.f32 0.0, %v1600
    %v1602 = vpop.f32.mrb[0].mxu0
    %1603 = vdwg.mxu0
    %v1604 = vadd.f32 %v1233, %v1598
    %v1605 = vadd.f32 %v1234, %v1601
    %v1606 = vld [vmem:[%s11] sm:$0x1]
    %v1608 = vlaneseq
    %v1609 = vshrl.u32 %v1608, 7
    %v1610 = vsub.s32 0, %v1609
    %v1611 = vrot.slane %v1606, %v1610
    %v1613 = vadd.f32 %v1604, %v1611
    %v1614 = vadd.f32 %v1605, %v1611
    %v1615 = vadd.f32 %v1613, %v124
    %v1616 = vadd.f32 %v1614, %v125
    %v1617 = vld [vmem:[%s12] sm:$0x1]
    %v1618 = vld [vmem:[%s13] sm:$0x1]
    %v1619 = vsel %vm82, %v1615, 0.0
    %1620 = vadd.xlane.f32.xlu0 %v1619
    %v1621 = vpop.xlane.xlu0 %1620
    %v1622 = vsel %vm82, %v1616, 0.0
    %1623 = vadd.xlane.f32.xlu0 %v1622
    %v1624 = vpop.xlane.xlu0 %1623
    %v1625 = vmul.f32 %v1621, %v89
    %v1626 = vmul.f32 %v1624, %v89
    %v1627 = vsub.f32 %v1615, %v1625
    %v1628 = vsub.f32 %v1616, %v1626
    %v1629 = vmul.f32 %v1627, %v1627
    %v1630 = vmul.f32 %v1628, %v1628
    %v1631 = vsel %vm82, %v1629, 0.0
    %1632 = vadd.xlane.f32.xlu0 %v1631
    %v1633 = vpop.xlane.xlu0 %1632
    %v1634 = vsel %vm82, %v1630, 0.0
    %1635 = vadd.xlane.f32.xlu0 %v1634
    %v1636 = vpop.xlane.xlu0 %1635
    %v1637 = vmul.f32 %v1633, %v89
    %v1638 = vmul.f32 %v1636, %v89
    %v1639 = vadd.f32 %v1637, 1e-12
    %v1640 = vadd.f32 %v1638, 1e-12
    %v1641 = vrsqrt.pop %v1639
    %v1642 = vrsqrt.pop %v1640
    %v1643 = vmul.f32 %v1627, %v1641
    %v1644 = vmul.f32 %v1628, %v1642
    %v1646 = vlaneseq
    %v1647 = vshrl.u32 %v1646, 7
    %v1648 = vsub.s32 0, %v1647
    %v1649 = vrot.slane %v1617, %v1648
    %v1651 = vmul.f32 %v1643, %v1649
    %v1652 = vmul.f32 %v1644, %v1649
    %v1654 = vlaneseq
    %v1655 = vshrl.u32 %v1654, 7
    %v1656 = vsub.s32 0, %v1655
    %v1657 = vrot.slane %v1618, %v1656
    %v1659 = vadd.f32 %v1651, %v1657
    %v1660 = vadd.f32 %v1652, %v1657
    %v1661 = vpack.c.bf16 %v1660, %v1659
    %v1662 = vld [vmem:[%s14] sm:$0xf]
    %v1663 = vld [vmem:[%s14 + $0x4] sm:$0xf]
    %v1664 = vld [vmem:[%s14 + $0x8] sm:$0xf]
    %v1665 = vld [vmem:[%s14 + $0xc] sm:$0xf]
    %v1666 = vld [vmem:[%s15] sm:$0x1]
    %v1668 = vlaneseq
    %v1669 = vshrl.u32 %v1668, 7
    %v1670 = vsub.s32 0, %v1669
    %v1671 = vrot.slane %v1666, %v1670
    %v1677 = vunpack.c.l.b16 %v1662
    %v1678 = vunpack.c.l.b16 %v1663
    %v1679 = vunpack.c.l.b16 %v1664
    %v1680 = vunpack.c.l.b16 %v1665
    %v1681 = vpack.c.b16 %v1678, %v1677
    %v1682 = vpack.c.b16 %v1680, %v1679
    %v1686 = vsel %vm82, %v1661, 0
    %1688 = vmatprep.subr.bf16.mxu0 0
    %1689 = vmatpush1.bf16.msra.mxu0 %v1681
    %1690 = vmatprep.subr.bf16.mxu0 0
    %1691 = vmatpush1.bf16.msra.mxu0 %v1682
    %1692 = vmatprep.subr.bf16.mxu0 0
    %1693 = vmatpush1.bf16.msra.mxu0 0
    %1694 = vmatprep.subr.bf16.mxu0 0
    %1695 = vmatpush1.bf16.msra.mxu0 0
    %1696 = vmatprep.subr.bf16.mxu0 0
    %1697 = vmatpush1.bf16.msra.mxu0 0
    %1698 = vmatprep.subr.bf16.mxu0 0
    %1699 = vmatpush1.bf16.msra.mxu0 0
    %1700 = vmatprep.subr.bf16.mxu0 0
    %1701 = vmatpush1.bf16.msra.mxu0 0
    %1702 = vmatprep.subr.bf16.mxu0 0
    %1703 = vmatpush1.bf16.msra.mxu0 0
    %1704 = vmatprep.subr.bf16.mxu0 0
    %1705 = vmatpush1.bf16.msra.mxu0 0
    %1706 = vmatprep.subr.bf16.mxu0 0
    %1707 = vmatpush1.bf16.msra.mxu0 0
    %1708 = vmatprep.subr.bf16.mxu0 0
    %1709 = vmatpush1.bf16.msra.mxu0 0
    %1710 = vmatprep.subr.bf16.mxu0 0
    %1711 = vmatpush1.bf16.msra.mxu0 0
    %1712 = vmatprep.subr.bf16.mxu0 0
    %1713 = vmatpush1.bf16.msra.mxu0 0
    %1714 = vmatprep.subr.bf16.mxu0 0
    %1715 = vmatpush1.bf16.msra.mxu0 0
    %1716 = vmatprep.subr.bf16.mxu0 0
    %1717 = vmatpush1.bf16.msra.mxu0 0
    %1718 = vmatprep.subr.bf16.mxu0 0
    %1719 = vmatpush1.bf16.msra.mxu0 0
    %1720 = vmatprep.mubr.bf16.mxu0 0
    %1721 = vmatmul.mubr.bf16.gmra.mrb[0].mxu0 %v1686
    %v1722 = vpop.f32.mrb[0].mxu0
    %v1723 = vadd.f32 %v1671, %v1722
    %v1724 = vpop.f32.mrb[0].mxu0
    %v1725 = vpop.f32.mrb[0].mxu0
    %v1726 = vadd.f32 %v1671, %v1725
    %v1727 = vpop.f32.mrb[0].mxu0
    %1728 = vdwg.mxu0
    %v1729 = vmul.f32 %v1723, %v1723
    %v1730 = vmul.f32 %v1726, %v1726
    %v1731 = vmul.f32 %v1723, %v1729
    %v1732 = vmul.f32 %v1726, %v1730
    %v1733 = vmul.f32 %v1731, 0.044715
    %v1734 = vmul.f32 %v1732, 0.044715
    %v1735 = vadd.f32 %v1723, %v1733
    %v1736 = vadd.f32 %v1726, %v1734
    %v1737 = vmul.f32 %v1735, 0.7978846
    %v1738 = vmul.f32 %v1736, 0.7978846
    %v1739 = vtanh.pop %v1737
    %v1740 = vtanh.pop %v1738
    %v1741 = vadd.f32 %v1739, 1.0
    %v1742 = vadd.f32 %v1740, 1.0
    %v1743 = vmul.f32 %v1741, 0.5
    %v1744 = vmul.f32 %v1742, 0.5
    %v1745 = vmul.f32 %v1723, %v1743
    %v1746 = vmul.f32 %v1726, %v1744
    %v1747 = vpack.c.bf16 %v1746, %v1745
    %v1748 = vld [vmem:[%s16] sm:$0xf]
    %v1749 = vld [vmem:[%s16 + $0x4] sm:$0xf]
    %v1750 = vld [vmem:[%s16 + $0x8] sm:$0xf]
    %v1751 = vld [vmem:[%s16 + $0xc] sm:$0xf]
    %v1752 = vld [vmem:[%s16 + $0x10] sm:$0xf]
    %v1753 = vld [vmem:[%s16 + $0x14] sm:$0xf]
    %v1754 = vld [vmem:[%s16 + $0x18] sm:$0xf]
    %v1755 = vld [vmem:[%s16 + $0x1c] sm:$0xf]
    %v1756 = vld [vmem:[%s17] sm:$0x1]
    %v1758 = vlaneseq
    %v1759 = vshrl.u32 %v1758, 7
    %v1760 = vsub.s32 0, %v1759
    %v1761 = vrot.slane %v1756, %v1760
    %v1771 = vunpack.c.l.b16 %v1748
    %v1772 = vunpack.c.l.b16 %v1749
    %v1773 = vunpack.c.l.b16 %v1750
    %v1774 = vunpack.c.l.b16 %v1751
    %v1775 = vunpack.c.l.b16 %v1752
    %v1776 = vunpack.c.l.b16 %v1753
    %v1777 = vunpack.c.l.b16 %v1754
    %v1778 = vunpack.c.l.b16 %v1755
    %v1779 = vpack.c.b16 %v1772, %v1771
    %v1780 = vpack.c.b16 %v1774, %v1773
    %v1781 = vpack.c.b16 %v1776, %v1775
    %v1782 = vpack.c.b16 %v1778, %v1777
    %vm1787 = vcmask 523264
    %v1789 = vsel %vm1787, %v1747, 0
    %1791 = vmatprep.subr.bf16.mxu0 0
    %1792 = vmatpush1.bf16.msra.mxu0 %v1779
    %1793 = vmatprep.subr.bf16.mxu0 0
    %1794 = vmatpush1.bf16.msra.mxu0 %v1780
    %1795 = vmatprep.subr.bf16.mxu0 0
    %1796 = vmatpush1.bf16.msra.mxu0 %v1781
    %1797 = vmatprep.subr.bf16.mxu0 0
    %1798 = vmatpush1.bf16.msra.mxu0 %v1782
    %1799 = vmatprep.subr.bf16.mxu0 0
    %1800 = vmatpush1.bf16.msra.mxu0 0
    %1801 = vmatprep.subr.bf16.mxu0 0
    %1802 = vmatpush1.bf16.msra.mxu0 0
    %1803 = vmatprep.subr.bf16.mxu0 0
    %1804 = vmatpush1.bf16.msra.mxu0 0
    %1805 = vmatprep.subr.bf16.mxu0 0
    %1806 = vmatpush1.bf16.msra.mxu0 0
    %1807 = vmatprep.subr.bf16.mxu0 0
    %1808 = vmatpush1.bf16.msra.mxu0 0
    %1809 = vmatprep.subr.bf16.mxu0 0
    %1810 = vmatpush1.bf16.msra.mxu0 0
    %1811 = vmatprep.subr.bf16.mxu0 0
    %1812 = vmatpush1.bf16.msra.mxu0 0
    %1813 = vmatprep.subr.bf16.mxu0 0
    %1814 = vmatpush1.bf16.msra.mxu0 0
    %1815 = vmatprep.subr.bf16.mxu0 0
    %1816 = vmatpush1.bf16.msra.mxu0 0
    %1817 = vmatprep.subr.bf16.mxu0 0
    %1818 = vmatpush1.bf16.msra.mxu0 0
    %1819 = vmatprep.subr.bf16.mxu0 0
    %1820 = vmatpush1.bf16.msra.mxu0 0
    %1821 = vmatprep.subr.bf16.mxu0 0
    %1822 = vmatpush1.bf16.msra.mxu0 0
    %1823 = vmatprep.mubr.bf16.mxu0 0
    %1824 = vmatmul.mubr.bf16.gmra.mrb[0].mxu0 %v1789
    %v1825 = vpop.f32.mrb[0].mxu0
    %v1826 = vadd.f32 %v1761, %v1825
    %v1827 = vpop.f32.mrb[0].mxu0
    %v1828 = vpop.f32.mrb[0].mxu0
    %v1829 = vadd.f32 %v1761, %v1828
    %v1830 = vpop.f32.mrb[0].mxu0
    %1831 = vdwg.mxu0
    %v1832 = vadd.f32 %v1826, %v1659
    %v1833 = vadd.f32 %v1829, %v1660
    %v1834 = vld [vmem:[%s18] sm:$0x1]
    %v1835 = vld [vmem:[%s19] sm:$0x1]
    %v1836 = vsel %vm82, %v1832, 0.0
    %1837 = vadd.xlane.f32.xlu0 %v1836
    %v1838 = vpop.xlane.xlu0 %1837
    %v1839 = vsel %vm82, %v1833, 0.0
    %1840 = vadd.xlane.f32.xlu0 %v1839
    %v1841 = vpop.xlane.xlu0 %1840
    %v1842 = vmul.f32 %v1838, %v89
    %v1843 = vmul.f32 %v1841, %v89
    %v1844 = vsub.f32 %v1832, %v1842
    %v1845 = vsub.f32 %v1833, %v1843
    %v1846 = vmul.f32 %v1844, %v1844
    %v1847 = vmul.f32 %v1845, %v1845
    %v1848 = vsel %vm82, %v1846, 0.0
    %1849 = vadd.xlane.f32.xlu0 %v1848
    %v1850 = vpop.xlane.xlu0 %1849
    %v1851 = vsel %vm82, %v1847, 0.0
    %1852 = vadd.xlane.f32.xlu0 %v1851
    %v1853 = vpop.xlane.xlu0 %1852
    %v1854 = vmul.f32 %v1850, %v89
    %v1855 = vmul.f32 %v1853, %v89
    %v1856 = vadd.f32 %v1854, 1e-12
    %v1857 = vadd.f32 %v1855, 1e-12
    %v1858 = vrsqrt.pop %v1856
    %v1859 = vrsqrt.pop %v1857
    %v1860 = vmul.f32 %v1844, %v1858
    %v1861 = vmul.f32 %v1845, %v1859
    %v1863 = vlaneseq
    %v1864 = vshrl.u32 %v1863, 7
    %v1865 = vsub.s32 0, %v1864
    %v1866 = vrot.slane %v1834, %v1865
    %v1868 = vmul.f32 %v1860, %v1866
    %v1869 = vmul.f32 %v1861, %v1866
    %v1871 = vlaneseq
    %v1872 = vshrl.u32 %v1871, 7
    %v1873 = vsub.s32 0, %v1872
    %v1874 = vrot.slane %v1835, %v1873
    %v1876 = vadd.f32 %v1868, %v1874
    %v1877 = vadd.f32 %v1869, %v1874
    %v1878 = vpack.c.bf16 %v1877, %v1876
    %s1879 = scalar_lea.vmem %s4, 64
    %v1880 = vld [vmem:[%s1879] sm:$0xf]
    %v1881 = vld [vmem:[%s1879 + $0x4] sm:$0xf]
    %v1882 = vld [vmem:[%s1879 + $0x8] sm:$0xf]
    %v1883 = vld [vmem:[%s1879 + $0xc] sm:$0xf]
    %s1884 = scalar_lea.vmem %s7, 4
    %v1885 = vld [vmem:[%s1884] sm:$0x1]
    %v1887 = vlaneseq
    %v1888 = vshrl.u32 %v1887, 7
    %v1889 = vsub.s32 0, %v1888
    %v1890 = vrot.slane %v1885, %v1889
    %v1896 = vunpack.c.l.b16 %v1880
    %v1897 = vunpack.c.l.b16 %v1881
    %v1898 = vunpack.c.l.b16 %v1882
    %v1899 = vunpack.c.l.b16 %v1883
    %v1900 = vpack.c.b16 %v1897, %v1896
    %v1901 = vpack.c.b16 %v1899, %v1898
    %v1905 = vsel %vm82, %v1878, 0
    %1907 = vmatprep.subr.bf16.mxu0 0
    %1908 = vmatpush1.bf16.msra.mxu0 %v1900
    %1909 = vmatprep.subr.bf16.mxu0 0
    %1910 = vmatpush1.bf16.msra.mxu0 %v1901
    %1911 = vmatprep.subr.bf16.mxu0 0
    %1912 = vmatpush1.bf16.msra.mxu0 0
    %1913 = vmatprep.subr.bf16.mxu0 0
    %1914 = vmatpush1.bf16.msra.mxu0 0
    %1915 = vmatprep.subr.bf16.mxu0 0
    %1916 = vmatpush1.bf16.msra.mxu0 0
    %1917 = vmatprep.subr.bf16.mxu0 0
    %1918 = vmatpush1.bf16.msra.mxu0 0
    %1919 = vmatprep.subr.bf16.mxu0 0
    %1920 = vmatpush1.bf16.msra.mxu0 0
    %1921 = vmatprep.subr.bf16.mxu0 0
    %1922 = vmatpush1.bf16.msra.mxu0 0
    %1923 = vmatprep.subr.bf16.mxu0 0
    %1924 = vmatpush1.bf16.msra.mxu0 0
    %1925 = vmatprep.subr.bf16.mxu0 0
    %1926 = vmatpush1.bf16.msra.mxu0 0
    %1927 = vmatprep.subr.bf16.mxu0 0
    %1928 = vmatpush1.bf16.msra.mxu0 0
    %1929 = vmatprep.subr.bf16.mxu0 0
    %1930 = vmatpush1.bf16.msra.mxu0 0
    %1931 = vmatprep.subr.bf16.mxu0 0
    %1932 = vmatpush1.bf16.msra.mxu0 0
    %1933 = vmatprep.subr.bf16.mxu0 0
    %1934 = vmatpush1.bf16.msra.mxu0 0
    %1935 = vmatprep.subr.bf16.mxu0 0
    %1936 = vmatpush1.bf16.msra.mxu0 0
    %1937 = vmatprep.subr.bf16.mxu0 0
    %1938 = vmatpush1.bf16.msra.mxu0 0
    %1939 = vmatprep.mubr.bf16.mxu0 0
    %1940 = vmatmul.mubr.bf16.gmra.mrb[0].mxu0 %v1905
    %v1941 = vpop.f32.mrb[0].mxu0
    %v1942 = vadd.f32 %v1890, %v1941
    %v1943 = vpop.f32.mrb[0].mxu0
    %v1944 = vpop.f32.mrb[0].mxu0
    %v1945 = vadd.f32 %v1890, %v1944
    %v1946 = vpop.f32.mrb[0].mxu0
    %1947 = vdwg.mxu0
    %s1948 = scalar_lea.vmem %s5, 64
    %v1949 = vld [vmem:[%s1948] sm:$0xf]
    %v1950 = vld [vmem:[%s1948 + $0x4] sm:$0xf]
    %v1951 = vld [vmem:[%s1948 + $0x8] sm:$0xf]
    %v1952 = vld [vmem:[%s1948 + $0xc] sm:$0xf]
    %s1953 = scalar_lea.vmem %s8, 4
    %v1954 = vld [vmem:[%s1953] sm:$0x1]
    %v1956 = vlaneseq
    %v1957 = vshrl.u32 %v1956, 7
    %v1958 = vsub.s32 0, %v1957
    %v1959 = vrot.slane %v1954, %v1958
    %v1965 = vunpack.c.l.b16 %v1949
    %v1966 = vunpack.c.l.b16 %v1950
    %v1967 = vunpack.c.l.b16 %v1951
    %v1968 = vunpack.c.l.b16 %v1952
    %v1969 = vpack.c.b16 %v1966, %v1965
    %v1970 = vpack.c.b16 %v1968, %v1967
    %1973 = vmatprep.subr.bf16.mxu0 0
    %1974 = vmatpush1.bf16.msra.mxu0 %v1969
    %1975 = vmatprep.subr.bf16.mxu0 0
    %1976 = vmatpush1.bf16.msra.mxu0 %v1970
    %1977 = vmatprep.subr.bf16.mxu0 0
    %1978 = vmatpush1.bf16.msra.mxu0 0
    %1979 = vmatprep.subr.bf16.mxu0 0
    %1980 = vmatpush1.bf16.msra.mxu0 0
    %1981 = vmatprep.subr.bf16.mxu0 0
    %1982 = vmatpush1.bf16.msra.mxu0 0
    %1983 = vmatprep.subr.bf16.mxu0 0
    %1984 = vmatpush1.bf16.msra.mxu0 0
    %1985 = vmatprep.subr.bf16.mxu0 0
    %1986 = vmatpush1.bf16.msra.mxu0 0
    %1987 = vmatprep.subr.bf16.mxu0 0
    %1988 = vmatpush1.bf16.msra.mxu0 0
    %1989 = vmatprep.subr.bf16.mxu0 0
    %1990 = vmatpush1.bf16.msra.mxu0 0
    %1991 = vmatprep.subr.bf16.mxu0 0
    %1992 = vmatpush1.bf16.msra.mxu0 0
    %1993 = vmatprep.subr.bf16.mxu0 0
    %1994 = vmatpush1.bf16.msra.mxu0 0
    %1995 = vmatprep.subr.bf16.mxu0 0
    %1996 = vmatpush1.bf16.msra.mxu0 0
    %1997 = vmatprep.subr.bf16.mxu0 0
    %1998 = vmatpush1.bf16.msra.mxu0 0
    %1999 = vmatprep.subr.bf16.mxu0 0
    %2000 = vmatpush1.bf16.msra.mxu0 0
    %2001 = vmatprep.subr.bf16.mxu0 0
    %2002 = vmatpush1.bf16.msra.mxu0 0
    %2003 = vmatprep.subr.bf16.mxu0 0
    %2004 = vmatpush1.bf16.msra.mxu0 0
    %2005 = vmatprep.mubr.bf16.mxu0 0
    %2006 = vmatmul.mubr.bf16.gmra.mrb[0].mxu0 %v1905
    %v2007 = vpop.f32.mrb[0].mxu0
    %v2008 = vadd.f32 %v1959, %v2007
    %v2009 = vpop.f32.mrb[0].mxu0
    %v2010 = vpop.f32.mrb[0].mxu0
    %v2011 = vadd.f32 %v1959, %v2010
    %v2012 = vpop.f32.mrb[0].mxu0
    %2013 = vdwg.mxu0
    %s2014 = scalar_lea.vmem %s6, 64
    %v2015 = vld [vmem:[%s2014] sm:$0xf]
    %v2016 = vld [vmem:[%s2014 + $0x4] sm:$0xf]
    %v2017 = vld [vmem:[%s2014 + $0x8] sm:$0xf]
    %v2018 = vld [vmem:[%s2014 + $0xc] sm:$0xf]
    %s2019 = scalar_lea.vmem %s9, 4
    %v2020 = vld [vmem:[%s2019] sm:$0x1]
    %v2022 = vlaneseq
    %v2023 = vshrl.u32 %v2022, 7
    %v2024 = vsub.s32 0, %v2023
    %v2025 = vrot.slane %v2020, %v2024
    %v2031 = vunpack.c.l.b16 %v2015
    %v2032 = vunpack.c.l.b16 %v2016
    %v2033 = vunpack.c.l.b16 %v2017
    %v2034 = vunpack.c.l.b16 %v2018
    %v2035 = vpack.c.b16 %v2032, %v2031
    %v2036 = vpack.c.b16 %v2034, %v2033
    %2039 = vmatprep.subr.bf16.mxu0 0
    %2040 = vmatpush1.bf16.msra.mxu0 %v2035
    %2041 = vmatprep.subr.bf16.mxu0 0
    %2042 = vmatpush1.bf16.msra.mxu0 %v2036
    %2043 = vmatprep.subr.bf16.mxu0 0
    %2044 = vmatpush1.bf16.msra.mxu0 0
    %2045 = vmatprep.subr.bf16.mxu0 0
    %2046 = vmatpush1.bf16.msra.mxu0 0
    %2047 = vmatprep.subr.bf16.mxu0 0
    %2048 = vmatpush1.bf16.msra.mxu0 0
    %2049 = vmatprep.subr.bf16.mxu0 0
    %2050 = vmatpush1.bf16.msra.mxu0 0
    %2051 = vmatprep.subr.bf16.mxu0 0
    %2052 = vmatpush1.bf16.msra.mxu0 0
    %2053 = vmatprep.subr.bf16.mxu0 0
    %2054 = vmatpush1.bf16.msra.mxu0 0
    %2055 = vmatprep.subr.bf16.mxu0 0
    %2056 = vmatpush1.bf16.msra.mxu0 0
    %2057 = vmatprep.subr.bf16.mxu0 0
    %2058 = vmatpush1.bf16.msra.mxu0 0
    %2059 = vmatprep.subr.bf16.mxu0 0
    %2060 = vmatpush1.bf16.msra.mxu0 0
    %2061 = vmatprep.subr.bf16.mxu0 0
    %2062 = vmatpush1.bf16.msra.mxu0 0
    %2063 = vmatprep.subr.bf16.mxu0 0
    %2064 = vmatpush1.bf16.msra.mxu0 0
    %2065 = vmatprep.subr.bf16.mxu0 0
    %2066 = vmatpush1.bf16.msra.mxu0 0
    %2067 = vmatprep.subr.bf16.mxu0 0
    %2068 = vmatpush1.bf16.msra.mxu0 0
    %2069 = vmatprep.subr.bf16.mxu0 0
    %2070 = vmatpush1.bf16.msra.mxu0 0
    %2071 = vmatprep.mubr.bf16.mxu0 0
    %2072 = vmatmul.mubr.bf16.gmra.mrb[0].mxu0 %v1905
    %v2073 = vpop.f32.mrb[0].mxu0
    %v2074 = vadd.f32 %v2025, %v2073
    %v2075 = vpop.f32.mrb[0].mxu0
    %v2076 = vpop.f32.mrb[0].mxu0
    %v2077 = vadd.f32 %v2025, %v2076
    %v2078 = vpop.f32.mrb[0].mxu0
    %2079 = vdwg.mxu0
    %v2080 = vpack.c.bf16 %v1945, %v1942
    %v2081 = vpack.c.bf16 %v2011, %v2008
    %v2083 = vsel %vm324, %v2080, 0
    %v2086 = vsel %vm324, %v2081, 0
    %2088 = vmatprep.subr.bf16.mxu0 0
    %2089 = vmatpush1.bf16.xpose.msra.mxu0 %v2086
    %2090 = vmatprep.subr.bf16.mxu0 0
    %2091 = vmatpush1.bf16.xpose.msra.mxu0 0
    %2092 = vmatprep.subr.bf16.mxu0 0
    %2093 = vmatpush1.bf16.xpose.msra.mxu0 0
    %2094 = vmatprep.subr.bf16.mxu0 0
    %2095 = vmatpush1.bf16.xpose.msra.mxu0 0
    %2096 = vmatprep.subr.bf16.mxu0 0
    %2097 = vmatpush1.bf16.xpose.msra.mxu0 0
    %2098 = vmatprep.subr.bf16.mxu0 0
    %2099 = vmatpush1.bf16.xpose.msra.mxu0 0
    %2100 = vmatprep.subr.bf16.mxu0 0
    %2101 = vmatpush1.bf16.xpose.msra.mxu0 0
    %2102 = vmatprep.subr.bf16.mxu0 0
    %2103 = vmatpush1.bf16.xpose.msra.mxu0 0
    %2104 = vmatprep.subr.bf16.mxu0 0
    %2105 = vmatpush1.bf16.xpose.msra.mxu0 0
    %2106 = vmatprep.subr.bf16.mxu0 0
    %2107 = vmatpush1.bf16.xpose.msra.mxu0 0
    %2108 = vmatprep.subr.bf16.mxu0 0
    %2109 = vmatpush1.bf16.xpose.msra.mxu0 0
    %2110 = vmatprep.subr.bf16.mxu0 0
    %2111 = vmatpush1.bf16.xpose.msra.mxu0 0
    %2112 = vmatprep.subr.bf16.mxu0 0
    %2113 = vmatpush1.bf16.xpose.msra.mxu0 0
    %2114 = vmatprep.subr.bf16.mxu0 0
    %2115 = vmatpush1.bf16.xpose.msra.mxu0 0
    %2116 = vmatprep.subr.bf16.mxu0 0
    %2117 = vmatpush1.bf16.xpose.msra.mxu0 0
    %2118 = vmatprep.subr.bf16.mxu0 0
    %2119 = vmatpush1.bf16.xpose.msra.mxu0 0
    %2120 = vmatprep.mubr.bf16.mxu0 0
    %2121 = vmatmul.mubr.bf16.gmra.mrb[0].mxu0 %v2083
    %v2122 = vpop.f32.mrb[0].mxu0
    %v2123 = vadd.f32 0.0, %v2122
    %v2124 = vpop.f32.mrb[0].mxu0
    %v2125 = vpop.f32.mrb[0].mxu0
    %v2126 = vadd.f32 0.0, %v2125
    %v2127 = vpop.f32.mrb[0].mxu0
    %2128 = vdwg.mxu0
    %v2129 = vmul.f32 %v2123, 0.35355338
    %v2130 = vmul.f32 %v2126, 0.35355338
    %v2131 = vadd.f32 %v2129, %v76
    %v2132 = vadd.f32 %v2130, %v77
    %v2133 = vsel %vm376, %v2131, -inf
    %2134 = vmax.xlane.f32.xlu0 %v2133
    %v2135 = vpop.xlane.xlu0 %2134
    %v2136 = vsel %vm376, %v2132, -inf
    %2137 = vmax.xlane.f32.xlu0 %v2136
    %v2138 = vpop.xlane.xlu0 %2137
    %v2139 = vsub.f32 %v2131, %v2135
    %v2140 = vsub.f32 %v2132, %v2138
    %v2141 = vmul.f32 %v2139, 1.442695
    %v2142 = vpow.pop %v2141
    %v2143 = vmul.f32 %v2140, 1.442695
    %v2144 = vpow.pop %v2143
    %v2145 = vsel %vm376, %v2142, 0.0
    %2146 = vadd.xlane.f32.xlu0 %v2145
    %v2147 = vpop.xlane.xlu0 %2146
    %v2148 = vsel %vm376, %v2144, 0.0
    %2149 = vadd.xlane.f32.xlu0 %v2148
    %v2150 = vpop.xlane.xlu0 %2149
    %v2151 = vrcp.pop %v2147
    %v2152 = vmul.f32 %v2142, %v2151
    %v2153 = vrcp.pop %v2150
    %v2154 = vmul.f32 %v2144, %v2153
    %v2155 = vpack.c.bf16 %v2154, %v2152
    %v2156 = vpack.c.bf16 %v2077, %v2074
    %v2158 = vsel %vm376, %v2155, 0
    %2160 = vmatprep.subr.bf16.mxu0 0
    %2161 = vmatpush1.bf16.msra.mxu0 %v2156
    %2162 = vmatprep.subr.bf16.mxu0 0
    %2163 = vmatpush1.bf16.msra.mxu0 0
    %2164 = vmatprep.subr.bf16.mxu0 0
    %2165 = vmatpush1.bf16.msra.mxu0 0
    %2166 = vmatprep.subr.bf16.mxu0 0
    %2167 = vmatpush1.bf16.msra.mxu0 0
    %2168 = vmatprep.subr.bf16.mxu0 0
    %2169 = vmatpush1.bf16.msra.mxu0 0
    %2170 = vmatprep.subr.bf16.mxu0 0
    %2171 = vmatpush1.bf16.msra.mxu0 0
    %2172 = vmatprep.subr.bf16.mxu0 0
    %2173 = vmatpush1.bf16.msra.mxu0 0
    %2174 = vmatprep.subr.bf16.mxu0 0
    %2175 = vmatpush1.bf16.msra.mxu0 0
    %2176 = vmatprep.subr.bf16.mxu0 0
    %2177 = vmatpush1.bf16.msra.mxu0 0
    %2178 = vmatprep.subr.bf16.mxu0 0
    %2179 = vmatpush1.bf16.msra.mxu0 0
    %2180 = vmatprep.subr.bf16.mxu0 0
    %2181 = vmatpush1.bf16.msra.mxu0 0
    %2182 = vmatprep.subr.bf16.mxu0 0
    %2183 = vmatpush1.bf16.msra.mxu0 0
    %2184 = vmatprep.subr.bf16.mxu0 0
    %2185 = vmatpush1.bf16.msra.mxu0 0
    %2186 = vmatprep.subr.bf16.mxu0 0
    %2187 = vmatpush1.bf16.msra.mxu0 0
    %2188 = vmatprep.subr.bf16.mxu0 0
    %2189 = vmatpush1.bf16.msra.mxu0 0
    %2190 = vmatprep.subr.bf16.mxu0 0
    %2191 = vmatpush1.bf16.msra.mxu0 0
    %2192 = vmatprep.mubr.bf16.mxu0 0
    %2193 = vmatmul.mubr.bf16.gmra.mrb[0].mxu0 %v2158
    %v2194 = vpop.f32.mrb[0].mxu0
    %v2195 = vadd.f32 0.0, %v2194
    %v2196 = vpop.f32.mrb[0].mxu0
    %v2197 = vpop.f32.mrb[0].mxu0
    %v2198 = vadd.f32 0.0, %v2197
    %v2199 = vpop.f32.mrb[0].mxu0
    %2200 = vdwg.mxu0
    %v2201 = vpack.c.bf16 %v2198, %v2195
    %s2202 = scalar_lea.vmem %s10, 16
    %v2203 = vld [vmem:[%s2202] sm:$0xf]
    %s2204 = scalar_lea.vmem %s4, 80
    %v2205 = vld [vmem:[%s2204] sm:$0xf]
    %v2206 = vld [vmem:[%s2204 + $0x4] sm:$0xf]
    %v2207 = vld [vmem:[%s2204 + $0x8] sm:$0xf]
    %v2208 = vld [vmem:[%s2204 + $0xc] sm:$0xf]
    %s2209 = scalar_lea.vmem %s7, 5
    %v2210 = vld [vmem:[%s2209] sm:$0x1]
    %v2212 = vlaneseq
    %v2213 = vshrl.u32 %v2212, 7
    %v2214 = vsub.s32 0, %v2213
    %v2215 = vrot.slane %v2210, %v2214
    %v2221 = vunpack.c.l.b16 %v2205
    %v2222 = vunpack.c.l.b16 %v2206
    %v2223 = vunpack.c.l.b16 %v2207
    %v2224 = vunpack.c.l.b16 %v2208
    %v2225 = vpack.c.b16 %v2222, %v2221
    %v2226 = vpack.c.b16 %v2224, %v2223
    %2229 = vmatprep.subr.bf16.mxu0 0
    %2230 = vmatpush1.bf16.msra.mxu0 %v2225
    %2231 = vmatprep.subr.bf16.mxu0 0
    %2232 = vmatpush1.bf16.msra.mxu0 %v2226
    %2233 = vmatprep.subr.bf16.mxu0 0
    %2234 = vmatpush1.bf16.msra.mxu0 0
    %2235 = vmatprep.subr.bf16.mxu0 0
    %2236 = vmatpush1.bf16.msra.mxu0 0
    %2237 = vmatprep.subr.bf16.mxu0 0
    %2238 = vmatpush1.bf16.msra.mxu0 0
    %2239 = vmatprep.subr.bf16.mxu0 0
    %2240 = vmatpush1.bf16.msra.mxu0 0
    %2241 = vmatprep.subr.bf16.mxu0 0
    %2242 = vmatpush1.bf16.msra.mxu0 0
    %2243 = vmatprep.subr.bf16.mxu0 0
    %2244 = vmatpush1.bf16.msra.mxu0 0
    %2245 = vmatprep.subr.bf16.mxu0 0
    %2246 = vmatpush1.bf16.msra.mxu0 0
    %2247 = vmatprep.subr.bf16.mxu0 0
    %2248 = vmatpush1.bf16.msra.mxu0 0
    %2249 = vmatprep.subr.bf16.mxu0 0
    %2250 = vmatpush1.bf16.msra.mxu0 0
    %2251 = vmatprep.subr.bf16.mxu0 0
    %2252 = vmatpush1.bf16.msra.mxu0 0
    %2253 = vmatprep.subr.bf16.mxu0 0
    %2254 = vmatpush1.bf16.msra.mxu0 0
    %2255 = vmatprep.subr.bf16.mxu0 0
    %2256 = vmatpush1.bf16.msra.mxu0 0
    %2257 = vmatprep.subr.bf16.mxu0 0
    %2258 = vmatpush1.bf16.msra.mxu0 0
    %2259 = vmatprep.subr.bf16.mxu0 0
    %2260 = vmatpush1.bf16.msra.mxu0 0
    %2261 = vmatprep.mubr.bf16.mxu0 0
    %2262 = vmatmul.mubr.bf16.gmra.mrb[0].mxu0 %v1905
    %v2263 = vpop.f32.mrb[0].mxu0
    %v2264 = vadd.f32 %v2215, %v2263
    %v2265 = vpop.f32.mrb[0].mxu0
    %v2266 = vpop.f32.mrb[0].mxu0
    %v2267 = vadd.f32 %v2215, %v2266
    %v2268 = vpop.f32.mrb[0].mxu0
    %2269 = vdwg.mxu0
    %s2270 = scalar_lea.vmem %s5, 80
    %v2271 = vld [vmem:[%s2270] sm:$0xf]
    %v2272 = vld [vmem:[%s2270 + $0x4] sm:$0xf]
    %v2273 = vld [vmem:[%s2270 + $0x8] sm:$0xf]
    %v2274 = vld [vmem:[%s2270 + $0xc] sm:$0xf]
    %s2275 = scalar_lea.vmem %s8, 5
    %v2276 = vld [vmem:[%s2275] sm:$0x1]
    %v2278 = vlaneseq
    %v2279 = vshrl.u32 %v2278, 7
    %v2280 = vsub.s32 0, %v2279
    %v2281 = vrot.slane %v2276, %v2280
    %v2287 = vunpack.c.l.b16 %v2271
    %v2288 = vunpack.c.l.b16 %v2272
    %v2289 = vunpack.c.l.b16 %v2273
    %v2290 = vunpack.c.l.b16 %v2274
    %v2291 = vpack.c.b16 %v2288, %v2287
    %v2292 = vpack.c.b16 %v2290, %v2289
    %2295 = vmatprep.subr.bf16.mxu0 0
    %2296 = vmatpush1.bf16.msra.mxu0 %v2291
    %2297 = vmatprep.subr.bf16.mxu0 0
    %2298 = vmatpush1.bf16.msra.mxu0 %v2292
    %2299 = vmatprep.subr.bf16.mxu0 0
    %2300 = vmatpush1.bf16.msra.mxu0 0
    %2301 = vmatprep.subr.bf16.mxu0 0
    %2302 = vmatpush1.bf16.msra.mxu0 0
    %2303 = vmatprep.subr.bf16.mxu0 0
    %2304 = vmatpush1.bf16.msra.mxu0 0
    %2305 = vmatprep.subr.bf16.mxu0 0
    %2306 = vmatpush1.bf16.msra.mxu0 0
    %2307 = vmatprep.subr.bf16.mxu0 0
    %2308 = vmatpush1.bf16.msra.mxu0 0
    %2309 = vmatprep.subr.bf16.mxu0 0
    %2310 = vmatpush1.bf16.msra.mxu0 0
    %2311 = vmatprep.subr.bf16.mxu0 0
    %2312 = vmatpush1.bf16.msra.mxu0 0
    %2313 = vmatprep.subr.bf16.mxu0 0
    %2314 = vmatpush1.bf16.msra.mxu0 0
    %2315 = vmatprep.subr.bf16.mxu0 0
    %2316 = vmatpush1.bf16.msra.mxu0 0
    %2317 = vmatprep.subr.bf16.mxu0 0
    %2318 = vmatpush1.bf16.msra.mxu0 0
    %2319 = vmatprep.subr.bf16.mxu0 0
    %2320 = vmatpush1.bf16.msra.mxu0 0
    %2321 = vmatprep.subr.bf16.mxu0 0
    %2322 = vmatpush1.bf16.msra.mxu0 0
    %2323 = vmatprep.subr.bf16.mxu0 0
    %2324 = vmatpush1.bf16.msra.mxu0 0
    %2325 = vmatprep.subr.bf16.mxu0 0
    %2326 = vmatpush1.bf16.msra.mxu0 0
    %2327 = vmatprep.mubr.bf16.mxu0 0
    %2328 = vmatmul.mubr.bf16.gmra.mrb[0].mxu0 %v1905
    %v2329 = vpop.f32.mrb[0].mxu0
    %v2330 = vadd.f32 %v2281, %v2329
    %v2331 = vpop.f32.mrb[0].mxu0
    %v2332 = vpop.f32.mrb[0].mxu0
    %v2333 = vadd.f32 %v2281, %v2332
    %v2334 = vpop.f32.mrb[0].mxu0
    %2335 = vdwg.mxu0
    %s2336 = scalar_lea.vmem %s6, 80
    %v2337 = vld [vmem:[%s2336] sm:$0xf]
    %v2338 = vld [vmem:[%s2336 + $0x4] sm:$0xf]
    %v2339 = vld [vmem:[%s2336 + $0x8] sm:$0xf]
    %v2340 = vld [vmem:[%s2336 + $0xc] sm:$0xf]
    %s2341 = scalar_lea.vmem %s9, 5
    %v2342 = vld [vmem:[%s2341] sm:$0x1]
    %v2344 = vlaneseq
    %v2345 = vshrl.u32 %v2344, 7
    %v2346 = vsub.s32 0, %v2345
    %v2347 = vrot.slane %v2342, %v2346
    %v2353 = vunpack.c.l.b16 %v2337
    %v2354 = vunpack.c.l.b16 %v2338
    %v2355 = vunpack.c.l.b16 %v2339
    %v2356 = vunpack.c.l.b16 %v2340
    %v2357 = vpack.c.b16 %v2354, %v2353
    %v2358 = vpack.c.b16 %v2356, %v2355
    %2361 = vmatprep.subr.bf16.mxu0 0
    %2362 = vmatpush1.bf16.msra.mxu0 %v2357
    %2363 = vmatprep.subr.bf16.mxu0 0
    %2364 = vmatpush1.bf16.msra.mxu0 %v2358
    %2365 = vmatprep.subr.bf16.mxu0 0
    %2366 = vmatpush1.bf16.msra.mxu0 0
    %2367 = vmatprep.subr.bf16.mxu0 0
    %2368 = vmatpush1.bf16.msra.mxu0 0
    %2369 = vmatprep.subr.bf16.mxu0 0
    %2370 = vmatpush1.bf16.msra.mxu0 0
    %2371 = vmatprep.subr.bf16.mxu0 0
    %2372 = vmatpush1.bf16.msra.mxu0 0
    %2373 = vmatprep.subr.bf16.mxu0 0
    %2374 = vmatpush1.bf16.msra.mxu0 0
    %2375 = vmatprep.subr.bf16.mxu0 0
    %2376 = vmatpush1.bf16.msra.mxu0 0
    %2377 = vmatprep.subr.bf16.mxu0 0
    %2378 = vmatpush1.bf16.msra.mxu0 0
    %2379 = vmatprep.subr.bf16.mxu0 0
    %2380 = vmatpush1.bf16.msra.mxu0 0
    %2381 = vmatprep.subr.bf16.mxu0 0
    %2382 = vmatpush1.bf16.msra.mxu0 0
    %2383 = vmatprep.subr.bf16.mxu0 0
    %2384 = vmatpush1.bf16.msra.mxu0 0
    %2385 = vmatprep.subr.bf16.mxu0 0
    %2386 = vmatpush1.bf16.msra.mxu0 0
    %2387 = vmatprep.subr.bf16.mxu0 0
    %2388 = vmatpush1.bf16.msra.mxu0 0
    %2389 = vmatprep.subr.bf16.mxu0 0
    %2390 = vmatpush1.bf16.msra.mxu0 0
    %2391 = vmatprep.subr.bf16.mxu0 0
    %2392 = vmatpush1.bf16.msra.mxu0 0
    %2393 = vmatprep.mubr.bf16.mxu0 0
    %2394 = vmatmul.mubr.bf16.gmra.mrb[0].mxu0 %v1905
    %v2395 = vpop.f32.mrb[0].mxu0
    %v2396 = vadd.f32 %v2347, %v2395
    %v2397 = vpop.f32.mrb[0].mxu0
    %v2398 = vpop.f32.mrb[0].mxu0
    %v2399 = vadd.f32 %v2347, %v2398
    %v2400 = vpop.f32.mrb[0].mxu0
    %2401 = vdwg.mxu0
    %v2402 = vpack.c.bf16 %v2267, %v2264
    %v2403 = vpack.c.bf16 %v2333, %v2330
    %v2405 = vsel %vm324, %v2402, 0
    %v2408 = vsel %vm324, %v2403, 0
    %2410 = vmatprep.subr.bf16.mxu0 0
    %2411 = vmatpush1.bf16.xpose.msra.mxu0 %v2408
    %2412 = vmatprep.subr.bf16.mxu0 0
    %2413 = vmatpush1.bf16.xpose.msra.mxu0 0
    %2414 = vmatprep.subr.bf16.mxu0 0
    %2415 = vmatpush1.bf16.xpose.msra.mxu0 0
    %2416 = vmatprep.subr.bf16.mxu0 0
    %2417 = vmatpush1.bf16.xpose.msra.mxu0 0
    %2418 = vmatprep.subr.bf16.mxu0 0
    %2419 = vmatpush1.bf16.xpose.msra.mxu0 0
    %2420 = vmatprep.subr.bf16.mxu0 0
    %2421 = vmatpush1.bf16.xpose.msra.mxu0 0
    %2422 = vmatprep.subr.bf16.mxu0 0
    %2423 = vmatpush1.bf16.xpose.msra.mxu0 0
    %2424 = vmatprep.subr.bf16.mxu0 0
    %2425 = vmatpush1.bf16.xpose.msra.mxu0 0
    %2426 = vmatprep.subr.bf16.mxu0 0
    %2427 = vmatpush1.bf16.xpose.msra.mxu0 0
    %2428 = vmatprep.subr.bf16.mxu0 0
    %2429 = vmatpush1.bf16.xpose.msra.mxu0 0
    %2430 = vmatprep.subr.bf16.mxu0 0
    %2431 = vmatpush1.bf16.xpose.msra.mxu0 0
    %2432 = vmatprep.subr.bf16.mxu0 0
    %2433 = vmatpush1.bf16.xpose.msra.mxu0 0
    %2434 = vmatprep.subr.bf16.mxu0 0
    %2435 = vmatpush1.bf16.xpose.msra.mxu0 0
    %2436 = vmatprep.subr.bf16.mxu0 0
    %2437 = vmatpush1.bf16.xpose.msra.mxu0 0
    %2438 = vmatprep.subr.bf16.mxu0 0
    %2439 = vmatpush1.bf16.xpose.msra.mxu0 0
    %2440 = vmatprep.subr.bf16.mxu0 0
    %2441 = vmatpush1.bf16.xpose.msra.mxu0 0
    %2442 = vmatprep.mubr.bf16.mxu0 0
    %2443 = vmatmul.mubr.bf16.gmra.mrb[0].mxu0 %v2405
    %v2444 = vpop.f32.mrb[0].mxu0
    %v2445 = vadd.f32 0.0, %v2444
    %v2446 = vpop.f32.mrb[0].mxu0
    %v2447 = vpop.f32.mrb[0].mxu0
    %v2448 = vadd.f32 0.0, %v2447
    %v2449 = vpop.f32.mrb[0].mxu0
    %2450 = vdwg.mxu0
    %v2451 = vmul.f32 %v2445, 0.35355338
    %v2452 = vmul.f32 %v2448, 0.35355338
    %v2453 = vadd.f32 %v2451, %v76
    %v2454 = vadd.f32 %v2452, %v77
    %v2455 = vsel %vm376, %v2453, -inf
    %2456 = vmax.xlane.f32.xlu0 %v2455
    %v2457 = vpop.xlane.xlu0 %2456
    %v2458 = vsel %vm376, %v2454, -inf
    %2459 = vmax.xlane.f32.xlu0 %v2458
    %v2460 = vpop.xlane.xlu0 %2459
    %v2461 = vsub.f32 %v2453, %v2457
    %v2462 = vsub.f32 %v2454, %v2460
    %v2463 = vmul.f32 %v2461, 1.442695
    %v2464 = vpow.pop %v2463
    %v2465 = vmul.f32 %v2462, 1.442695
    %v2466 = vpow.pop %v2465
    %v2467 = vsel %vm376, %v2464, 0.0
    %2468 = vadd.xlane.f32.xlu0 %v2467
    %v2469 = vpop.xlane.xlu0 %2468
    %v2470 = vsel %vm376, %v2466, 0.0
    %2471 = vadd.xlane.f32.xlu0 %v2470
    %v2472 = vpop.xlane.xlu0 %2471
    %v2473 = vrcp.pop %v2469
    %v2474 = vmul.f32 %v2464, %v2473
    %v2475 = vrcp.pop %v2472
    %v2476 = vmul.f32 %v2466, %v2475
    %v2477 = vpack.c.bf16 %v2476, %v2474
    %v2478 = vpack.c.bf16 %v2399, %v2396
    %v2480 = vsel %vm376, %v2477, 0
    %2482 = vmatprep.subr.bf16.mxu0 0
    %2483 = vmatpush1.bf16.msra.mxu0 %v2478
    %2484 = vmatprep.subr.bf16.mxu0 0
    %2485 = vmatpush1.bf16.msra.mxu0 0
    %2486 = vmatprep.subr.bf16.mxu0 0
    %2487 = vmatpush1.bf16.msra.mxu0 0
    %2488 = vmatprep.subr.bf16.mxu0 0
    %2489 = vmatpush1.bf16.msra.mxu0 0
    %2490 = vmatprep.subr.bf16.mxu0 0
    %2491 = vmatpush1.bf16.msra.mxu0 0
    %2492 = vmatprep.subr.bf16.mxu0 0
    %2493 = vmatpush1.bf16.msra.mxu0 0
    %2494 = vmatprep.subr.bf16.mxu0 0
    %2495 = vmatpush1.bf16.msra.mxu0 0
    %2496 = vmatprep.subr.bf16.mxu0 0
    %2497 = vmatpush1.bf16.msra.mxu0 0
    %2498 = vmatprep.subr.bf16.mxu0 0
    %2499 = vmatpush1.bf16.msra.mxu0 0
    %2500 = vmatprep.subr.bf16.mxu0 0
    %2501 = vmatpush1.bf16.msra.mxu0 0
    %2502 = vmatprep.subr.bf16.mxu0 0
    %2503 = vmatpush1.bf16.msra.mxu0 0
    %2504 = vmatprep.subr.bf16.mxu0 0
    %2505 = vmatpush1.bf16.msra.mxu0 0
    %2506 = vmatprep.subr.bf16.mxu0 0
    %2507 = vmatpush1.bf16.msra.mxu0 0
    %2508 = vmatprep.subr.bf16.mxu0 0
    %2509 = vmatpush1.bf16.msra.mxu0 0
    %2510 = vmatprep.subr.bf16.mxu0 0
    %2511 = vmatpush1.bf16.msra.mxu0 0
    %2512 = vmatprep.subr.bf16.mxu0 0
    %2513 = vmatpush1.bf16.msra.mxu0 0
    %2514 = vmatprep.mubr.bf16.mxu0 0
    %2515 = vmatmul.mubr.bf16.gmra.mrb[0].mxu0 %v2480
    %v2516 = vpop.f32.mrb[0].mxu0
    %v2517 = vadd.f32 0.0, %v2516
    %v2518 = vpop.f32.mrb[0].mxu0
    %v2519 = vpop.f32.mrb[0].mxu0
    %v2520 = vadd.f32 0.0, %v2519
    %v2521 = vpop.f32.mrb[0].mxu0
    %2522 = vdwg.mxu0
    %v2523 = vpack.c.bf16 %v2520, %v2517
    %s2524 = scalar_lea.vmem %s10, 20
    %v2525 = vld [vmem:[%s2524] sm:$0xf]
    %v2527 = vsel %vm324, %v2523, 0
    %v2530 = vsel %vm772, %v2525, 0
    %2532 = vmatprep.subr.bf16.mxu0 0
    %2533 = vmatpush1.bf16.msra.mxu0 %v2530
    %2534 = vmatprep.subr.bf16.mxu0 0
    %2535 = vmatpush1.bf16.msra.mxu0 0
    %2536 = vmatprep.subr.bf16.mxu0 0
    %2537 = vmatpush1.bf16.msra.mxu0 0
    %2538 = vmatprep.subr.bf16.mxu0 0
    %2539 = vmatpush1.bf16.msra.mxu0 0
    %2540 = vmatprep.subr.bf16.mxu0 0
    %2541 = vmatpush1.bf16.msra.mxu0 0
    %2542 = vmatprep.subr.bf16.mxu0 0
    %2543 = vmatpush1.bf16.msra.mxu0 0
    %2544 = vmatprep.subr.bf16.mxu0 0
    %2545 = vmatpush1.bf16.msra.mxu0 0
    %2546 = vmatprep.subr.bf16.mxu0 0
    %2547 = vmatpush1.bf16.msra.mxu0 0
    %2548 = vmatprep.subr.bf16.mxu0 0
    %2549 = vmatpush1.bf16.msra.mxu0 0
    %2550 = vmatprep.subr.bf16.mxu0 0
    %2551 = vmatpush1.bf16.msra.mxu0 0
    %2552 = vmatprep.subr.bf16.mxu0 0
    %2553 = vmatpush1.bf16.msra.mxu0 0
    %2554 = vmatprep.subr.bf16.mxu0 0
    %2555 = vmatpush1.bf16.msra.mxu0 0
    %2556 = vmatprep.subr.bf16.mxu0 0
    %2557 = vmatpush1.bf16.msra.mxu0 0
    %2558 = vmatprep.subr.bf16.mxu0 0
    %2559 = vmatpush1.bf16.msra.mxu0 0
    %2560 = vmatprep.subr.bf16.mxu0 0
    %2561 = vmatpush1.bf16.msra.mxu0 0
    %2562 = vmatprep.subr.bf16.mxu0 0
    %2563 = vmatpush1.bf16.msra.mxu0 0
    %2564 = vmatprep.mubr.bf16.mxu0 0
    %2565 = vmatmul.mubr.bf16.gmra.mrb[0].mxu0 %v2527
    %v2566 = vpop.f32.mrb[0].mxu0
    %v2567 = vadd.f32 0.0, %v2566
    %v2568 = vpop.f32.mrb[0].mxu0
    %v2569 = vpop.f32.mrb[0].mxu0
    %v2570 = vadd.f32 0.0, %v2569
    %v2571 = vpop.f32.mrb[0].mxu0
    %2572 = vdwg.mxu0
    %v2574 = vsel %vm324, %v2201, 0
    %v2577 = vsel %vm772, %v2203, 0
    %2579 = vmatprep.subr.bf16.mxu0 0
    %2580 = vmatpush1.bf16.msra.mxu0 %v2577
    %2581 = vmatprep.subr.bf16.mxu0 0
    %2582 = vmatpush1.bf16.msra.mxu0 0
    %2583 = vmatprep.subr.bf16.mxu0 0
    %2584 = vmatpush1.bf16.msra.mxu0 0
    %2585 = vmatprep.subr.bf16.mxu0 0
    %2586 = vmatpush1.bf16.msra.mxu0 0
    %2587 = vmatprep.subr.bf16.mxu0 0
    %2588 = vmatpush1.bf16.msra.mxu0 0
    %2589 = vmatprep.subr.bf16.mxu0 0
    %2590 = vmatpush1.bf16.msra.mxu0 0
    %2591 = vmatprep.subr.bf16.mxu0 0
    %2592 = vmatpush1.bf16.msra.mxu0 0
    %2593 = vmatprep.subr.bf16.mxu0 0
    %2594 = vmatpush1.bf16.msra.mxu0 0
    %2595 = vmatprep.subr.bf16.mxu0 0
    %2596 = vmatpush1.bf16.msra.mxu0 0
    %2597 = vmatprep.subr.bf16.mxu0 0
    %2598 = vmatpush1.bf16.msra.mxu0 0
    %2599 = vmatprep.subr.bf16.mxu0 0
    %2600 = vmatpush1.bf16.msra.mxu0 0
    %2601 = vmatprep.subr.bf16.mxu0 0
    %2602 = vmatpush1.bf16.msra.mxu0 0
    %2603 = vmatprep.subr.bf16.mxu0 0
    %2604 = vmatpush1.bf16.msra.mxu0 0
    %2605 = vmatprep.subr.bf16.mxu0 0
    %2606 = vmatpush1.bf16.msra.mxu0 0
    %2607 = vmatprep.subr.bf16.mxu0 0
    %2608 = vmatpush1.bf16.msra.mxu0 0
    %2609 = vmatprep.subr.bf16.mxu0 0
    %2610 = vmatpush1.bf16.msra.mxu0 0
    %2611 = vmatprep.mubr.bf16.mxu0 0
    %2612 = vmatmul.mubr.bf16.gmra.mrb[0].mxu0 %v2574
    %v2613 = vpop.f32.mrb[0].mxu0
    %v2614 = vadd.f32 %v2567, %v2613
    %v2615 = vpop.f32.mrb[0].mxu0
    %v2616 = vpop.f32.mrb[0].mxu0
    %v2617 = vadd.f32 %v2570, %v2616
    %v2618 = vpop.f32.mrb[0].mxu0
    %2619 = vdwg.mxu0
    %s2620 = scalar_lea.vmem %s4, 96
    %v2621 = vld [vmem:[%s2620] sm:$0xf]
    %v2622 = vld [vmem:[%s2620 + $0x4] sm:$0xf]
    %v2623 = vld [vmem:[%s2620 + $0x8] sm:$0xf]
    %v2624 = vld [vmem:[%s2620 + $0xc] sm:$0xf]
    %s2625 = scalar_lea.vmem %s7, 6
    %v2626 = vld [vmem:[%s2625] sm:$0x1]
    %v2628 = vlaneseq
    %v2629 = vshrl.u32 %v2628, 7
    %v2630 = vsub.s32 0, %v2629
    %v2631 = vrot.slane %v2626, %v2630
    %v2637 = vunpack.c.l.b16 %v2621
    %v2638 = vunpack.c.l.b16 %v2622
    %v2639 = vunpack.c.l.b16 %v2623
    %v2640 = vunpack.c.l.b16 %v2624
    %v2641 = vpack.c.b16 %v2638, %v2637
    %v2642 = vpack.c.b16 %v2640, %v2639
    %2645 = vmatprep.subr.bf16.mxu0 0
    %2646 = vmatpush1.bf16.msra.mxu0 %v2641
    %2647 = vmatprep.subr.bf16.mxu0 0
    %2648 = vmatpush1.bf16.msra.mxu0 %v2642
    %2649 = vmatprep.subr.bf16.mxu0 0
    %2650 = vmatpush1.bf16.msra.mxu0 0
    %2651 = vmatprep.subr.bf16.mxu0 0
    %2652 = vmatpush1.bf16.msra.mxu0 0
    %2653 = vmatprep.subr.bf16.mxu0 0
    %2654 = vmatpush1.bf16.msra.mxu0 0
    %2655 = vmatprep.subr.bf16.mxu0 0
    %2656 = vmatpush1.bf16.msra.mxu0 0
    %2657 = vmatprep.subr.bf16.mxu0 0
    %2658 = vmatpush1.bf16.msra.mxu0 0
    %2659 = vmatprep.subr.bf16.mxu0 0
    %2660 = vmatpush1.bf16.msra.mxu0 0
    %2661 = vmatprep.subr.bf16.mxu0 0
    %2662 = vmatpush1.bf16.msra.mxu0 0
    %2663 = vmatprep.subr.bf16.mxu0 0
    %2664 = vmatpush1.bf16.msra.mxu0 0
    %2665 = vmatprep.subr.bf16.mxu0 0
    %2666 = vmatpush1.bf16.msra.mxu0 0
    %2667 = vmatprep.subr.bf16.mxu0 0
    %2668 = vmatpush1.bf16.msra.mxu0 0
    %2669 = vmatprep.subr.bf16.mxu0 0
    %2670 = vmatpush1.bf16.msra.mxu0 0
    %2671 = vmatprep.subr.bf16.mxu0 0
    %2672 = vmatpush1.bf16.msra.mxu0 0
    %2673 = vmatprep.subr.bf16.mxu0 0
    %2674 = vmatpush1.bf16.msra.mxu0 0
    %2675 = vmatprep.subr.bf16.mxu0 0
    %2676 = vmatpush1.bf16.msra.mxu0 0
    %2677 = vmatprep.mubr.bf16.mxu0 0
    %2678 = vmatmul.mubr.bf16.gmra.mrb[0].mxu0 %v1905
    %v2679 = vpop.f32.mrb[0].mxu0
    %v2680 = vadd.f32 %v2631, %v2679
    %v2681 = vpop.f32.mrb[0].mxu0
    %v2682 = vpop.f32.mrb[0].mxu0
    %v2683 = vadd.f32 %v2631, %v2682
    %v2684 = vpop.f32.mrb[0].mxu0
    %2685 = vdwg.mxu0
    %s2686 = scalar_lea.vmem %s5, 96
    %v2687 = vld [vmem:[%s2686] sm:$0xf]
    %v2688 = vld [vmem:[%s2686 + $0x4] sm:$0xf]
    %v2689 = vld [vmem:[%s2686 + $0x8] sm:$0xf]
    %v2690 = vld [vmem:[%s2686 + $0xc] sm:$0xf]
    %s2691 = scalar_lea.vmem %s8, 6
    %v2692 = vld [vmem:[%s2691] sm:$0x1]
    %v2694 = vlaneseq
    %v2695 = vshrl.u32 %v2694, 7
    %v2696 = vsub.s32 0, %v2695
    %v2697 = vrot.slane %v2692, %v2696
    %v2703 = vunpack.c.l.b16 %v2687
    %v2704 = vunpack.c.l.b16 %v2688
    %v2705 = vunpack.c.l.b16 %v2689
    %v2706 = vunpack.c.l.b16 %v2690
    %v2707 = vpack.c.b16 %v2704, %v2703
    %v2708 = vpack.c.b16 %v2706, %v2705
    %2711 = vmatprep.subr.bf16.mxu0 0
    %2712 = vmatpush1.bf16.msra.mxu0 %v2707
    %2713 = vmatprep.subr.bf16.mxu0 0
    %2714 = vmatpush1.bf16.msra.mxu0 %v2708
    %2715 = vmatprep.subr.bf16.mxu0 0
    %2716 = vmatpush1.bf16.msra.mxu0 0
    %2717 = vmatprep.subr.bf16.mxu0 0
    %2718 = vmatpush1.bf16.msra.mxu0 0
    %2719 = vmatprep.subr.bf16.mxu0 0
    %2720 = vmatpush1.bf16.msra.mxu0 0
    %2721 = vmatprep.subr.bf16.mxu0 0
    %2722 = vmatpush1.bf16.msra.mxu0 0
    %2723 = vmatprep.subr.bf16.mxu0 0
    %2724 = vmatpush1.bf16.msra.mxu0 0
    %2725 = vmatprep.subr.bf16.mxu0 0
    %2726 = vmatpush1.bf16.msra.mxu0 0
    %2727 = vmatprep.subr.bf16.mxu0 0
    %2728 = vmatpush1.bf16.msra.mxu0 0
    %2729 = vmatprep.subr.bf16.mxu0 0
    %2730 = vmatpush1.bf16.msra.mxu0 0
    %2731 = vmatprep.subr.bf16.mxu0 0
    %2732 = vmatpush1.bf16.msra.mxu0 0
    %2733 = vmatprep.subr.bf16.mxu0 0
    %2734 = vmatpush1.bf16.msra.mxu0 0
    %2735 = vmatprep.subr.bf16.mxu0 0
    %2736 = vmatpush1.bf16.msra.mxu0 0
    %2737 = vmatprep.subr.bf16.mxu0 0
    %2738 = vmatpush1.bf16.msra.mxu0 0
    %2739 = vmatprep.subr.bf16.mxu0 0
    %2740 = vmatpush1.bf16.msra.mxu0 0
    %2741 = vmatprep.subr.bf16.mxu0 0
    %2742 = vmatpush1.bf16.msra.mxu0 0
    %2743 = vmatprep.mubr.bf16.mxu0 0
    %2744 = vmatmul.mubr.bf16.gmra.mrb[0].mxu0 %v1905
    %v2745 = vpop.f32.mrb[0].mxu0
    %v2746 = vadd.f32 %v2697, %v2745
    %v2747 = vpop.f32.mrb[0].mxu0
    %v2748 = vpop.f32.mrb[0].mxu0
    %v2749 = vadd.f32 %v2697, %v2748
    %v2750 = vpop.f32.mrb[0].mxu0
    %2751 = vdwg.mxu0
    %s2752 = scalar_lea.vmem %s6, 96
    %v2753 = vld [vmem:[%s2752] sm:$0xf]
    %v2754 = vld [vmem:[%s2752 + $0x4] sm:$0xf]
    %v2755 = vld [vmem:[%s2752 + $0x8] sm:$0xf]
    %v2756 = vld [vmem:[%s2752 + $0xc] sm:$0xf]
    %s2757 = scalar_lea.vmem %s9, 6
    %v2758 = vld [vmem:[%s2757] sm:$0x1]
    %v2760 = vlaneseq
    %v2761 = vshrl.u32 %v2760, 7
    %v2762 = vsub.s32 0, %v2761
    %v2763 = vrot.slane %v2758, %v2762
    %v2769 = vunpack.c.l.b16 %v2753
    %v2770 = vunpack.c.l.b16 %v2754
    %v2771 = vunpack.c.l.b16 %v2755
    %v2772 = vunpack.c.l.b16 %v2756
    %v2773 = vpack.c.b16 %v2770, %v2769
    %v2774 = vpack.c.b16 %v2772, %v2771
    %2777 = vmatprep.subr.bf16.mxu0 0
    %2778 = vmatpush1.bf16.msra.mxu0 %v2773
    %2779 = vmatprep.subr.bf16.mxu0 0
    %2780 = vmatpush1.bf16.msra.mxu0 %v2774
    %2781 = vmatprep.subr.bf16.mxu0 0
    %2782 = vmatpush1.bf16.msra.mxu0 0
    %2783 = vmatprep.subr.bf16.mxu0 0
    %2784 = vmatpush1.bf16.msra.mxu0 0
    %2785 = vmatprep.subr.bf16.mxu0 0
    %2786 = vmatpush1.bf16.msra.mxu0 0
    %2787 = vmatprep.subr.bf16.mxu0 0
    %2788 = vmatpush1.bf16.msra.mxu0 0
    %2789 = vmatprep.subr.bf16.mxu0 0
    %2790 = vmatpush1.bf16.msra.mxu0 0
    %2791 = vmatprep.subr.bf16.mxu0 0
    %2792 = vmatpush1.bf16.msra.mxu0 0
    %2793 = vmatprep.subr.bf16.mxu0 0
    %2794 = vmatpush1.bf16.msra.mxu0 0
    %2795 = vmatprep.subr.bf16.mxu0 0
    %2796 = vmatpush1.bf16.msra.mxu0 0
    %2797 = vmatprep.subr.bf16.mxu0 0
    %2798 = vmatpush1.bf16.msra.mxu0 0
    %2799 = vmatprep.subr.bf16.mxu0 0
    %2800 = vmatpush1.bf16.msra.mxu0 0
    %2801 = vmatprep.subr.bf16.mxu0 0
    %2802 = vmatpush1.bf16.msra.mxu0 0
    %2803 = vmatprep.subr.bf16.mxu0 0
    %2804 = vmatpush1.bf16.msra.mxu0 0
    %2805 = vmatprep.subr.bf16.mxu0 0
    %2806 = vmatpush1.bf16.msra.mxu0 0
    %2807 = vmatprep.subr.bf16.mxu0 0
    %2808 = vmatpush1.bf16.msra.mxu0 0
    %2809 = vmatprep.mubr.bf16.mxu0 0
    %2810 = vmatmul.mubr.bf16.gmra.mrb[0].mxu0 %v1905
    %v2811 = vpop.f32.mrb[0].mxu0
    %v2812 = vadd.f32 %v2763, %v2811
    %v2813 = vpop.f32.mrb[0].mxu0
    %v2814 = vpop.f32.mrb[0].mxu0
    %v2815 = vadd.f32 %v2763, %v2814
    %v2816 = vpop.f32.mrb[0].mxu0
    %2817 = vdwg.mxu0
    %v2818 = vpack.c.bf16 %v2683, %v2680
    %v2819 = vpack.c.bf16 %v2749, %v2746
    %v2821 = vsel %vm324, %v2818, 0
    %v2824 = vsel %vm324, %v2819, 0
    %2826 = vmatprep.subr.bf16.mxu0 0
    %2827 = vmatpush1.bf16.xpose.msra.mxu0 %v2824
    %2828 = vmatprep.subr.bf16.mxu0 0
    %2829 = vmatpush1.bf16.xpose.msra.mxu0 0
    %2830 = vmatprep.subr.bf16.mxu0 0
    %2831 = vmatpush1.bf16.xpose.msra.mxu0 0
    %2832 = vmatprep.subr.bf16.mxu0 0
    %2833 = vmatpush1.bf16.xpose.msra.mxu0 0
    %2834 = vmatprep.subr.bf16.mxu0 0
    %2835 = vmatpush1.bf16.xpose.msra.mxu0 0
    %2836 = vmatprep.subr.bf16.mxu0 0
    %2837 = vmatpush1.bf16.xpose.msra.mxu0 0
    %2838 = vmatprep.subr.bf16.mxu0 0
    %2839 = vmatpush1.bf16.xpose.msra.mxu0 0
    %2840 = vmatprep.subr.bf16.mxu0 0
    %2841 = vmatpush1.bf16.xpose.msra.mxu0 0
    %2842 = vmatprep.subr.bf16.mxu0 0
    %2843 = vmatpush1.bf16.xpose.msra.mxu0 0
    %2844 = vmatprep.subr.bf16.mxu0 0
    %2845 = vmatpush1.bf16.xpose.msra.mxu0 0
    %2846 = vmatprep.subr.bf16.mxu0 0
    %2847 = vmatpush1.bf16.xpose.msra.mxu0 0
    %2848 = vmatprep.subr.bf16.mxu0 0
    %2849 = vmatpush1.bf16.xpose.msra.mxu0 0
    %2850 = vmatprep.subr.bf16.mxu0 0
    %2851 = vmatpush1.bf16.xpose.msra.mxu0 0
    %2852 = vmatprep.subr.bf16.mxu0 0
    %2853 = vmatpush1.bf16.xpose.msra.mxu0 0
    %2854 = vmatprep.subr.bf16.mxu0 0
    %2855 = vmatpush1.bf16.xpose.msra.mxu0 0
    %2856 = vmatprep.subr.bf16.mxu0 0
    %2857 = vmatpush1.bf16.xpose.msra.mxu0 0
    %2858 = vmatprep.mubr.bf16.mxu0 0
    %2859 = vmatmul.mubr.bf16.gmra.mrb[0].mxu0 %v2821
    %v2860 = vpop.f32.mrb[0].mxu0
    %v2861 = vadd.f32 0.0, %v2860
    %v2862 = vpop.f32.mrb[0].mxu0
    %v2863 = vpop.f32.mrb[0].mxu0
    %v2864 = vadd.f32 0.0, %v2863
    %v2865 = vpop.f32.mrb[0].mxu0
    %2866 = vdwg.mxu0
    %v2867 = vmul.f32 %v2861, 0.35355338
    %v2868 = vmul.f32 %v2864, 0.35355338
    %v2869 = vadd.f32 %v2867, %v76
    %v2870 = vadd.f32 %v2868, %v77
    %v2871 = vsel %vm376, %v2869, -inf
    %2872 = vmax.xlane.f32.xlu0 %v2871
    %v2873 = vpop.xlane.xlu0 %2872
    %v2874 = vsel %vm376, %v2870, -inf
    %2875 = vmax.xlane.f32.xlu0 %v2874
    %v2876 = vpop.xlane.xlu0 %2875
    %v2877 = vsub.f32 %v2869, %v2873
    %v2878 = vsub.f32 %v2870, %v2876
    %v2879 = vmul.f32 %v2877, 1.442695
    %v2880 = vpow.pop %v2879
    %v2881 = vmul.f32 %v2878, 1.442695
    %v2882 = vpow.pop %v2881
    %v2883 = vsel %vm376, %v2880, 0.0
    %2884 = vadd.xlane.f32.xlu0 %v2883
    %v2885 = vpop.xlane.xlu0 %2884
    %v2886 = vsel %vm376, %v2882, 0.0
    %2887 = vadd.xlane.f32.xlu0 %v2886
    %v2888 = vpop.xlane.xlu0 %2887
    %v2889 = vrcp.pop %v2885
    %v2890 = vmul.f32 %v2880, %v2889
    %v2891 = vrcp.pop %v2888
    %v2892 = vmul.f32 %v2882, %v2891
    %v2893 = vpack.c.bf16 %v2892, %v2890
    %v2894 = vpack.c.bf16 %v2815, %v2812
    %v2896 = vsel %vm376, %v2893, 0
    %2898 = vmatprep.subr.bf16.mxu0 0
    %2899 = vmatpush1.bf16.msra.mxu0 %v2894
    %2900 = vmatprep.subr.bf16.mxu0 0
    %2901 = vmatpush1.bf16.msra.mxu0 0
    %2902 = vmatprep.subr.bf16.mxu0 0
    %2903 = vmatpush1.bf16.msra.mxu0 0
    %2904 = vmatprep.subr.bf16.mxu0 0
    %2905 = vmatpush1.bf16.msra.mxu0 0
    %2906 = vmatprep.subr.bf16.mxu0 0
    %2907 = vmatpush1.bf16.msra.mxu0 0
    %2908 = vmatprep.subr.bf16.mxu0 0
    %2909 = vmatpush1.bf16.msra.mxu0 0
    %2910 = vmatprep.subr.bf16.mxu0 0
    %2911 = vmatpush1.bf16.msra.mxu0 0
    %2912 = vmatprep.subr.bf16.mxu0 0
    %2913 = vmatpush1.bf16.msra.mxu0 0
    %2914 = vmatprep.subr.bf16.mxu0 0
    %2915 = vmatpush1.bf16.msra.mxu0 0
    %2916 = vmatprep.subr.bf16.mxu0 0
    %2917 = vmatpush1.bf16.msra.mxu0 0
    %2918 = vmatprep.subr.bf16.mxu0 0
    %2919 = vmatpush1.bf16.msra.mxu0 0
    %2920 = vmatprep.subr.bf16.mxu0 0
    %2921 = vmatpush1.bf16.msra.mxu0 0
    %2922 = vmatprep.subr.bf16.mxu0 0
    %2923 = vmatpush1.bf16.msra.mxu0 0
    %2924 = vmatprep.subr.bf16.mxu0 0
    %2925 = vmatpush1.bf16.msra.mxu0 0
    %2926 = vmatprep.subr.bf16.mxu0 0
    %2927 = vmatpush1.bf16.msra.mxu0 0
    %2928 = vmatprep.subr.bf16.mxu0 0
    %2929 = vmatpush1.bf16.msra.mxu0 0
    %2930 = vmatprep.mubr.bf16.mxu0 0
    %2931 = vmatmul.mubr.bf16.gmra.mrb[0].mxu0 %v2896
    %v2932 = vpop.f32.mrb[0].mxu0
    %v2933 = vadd.f32 0.0, %v2932
    %v2934 = vpop.f32.mrb[0].mxu0
    %v2935 = vpop.f32.mrb[0].mxu0
    %v2936 = vadd.f32 0.0, %v2935
    %v2937 = vpop.f32.mrb[0].mxu0
    %2938 = vdwg.mxu0
    %v2939 = vpack.c.bf16 %v2936, %v2933
    %s2940 = scalar_lea.vmem %s10, 24
    %v2941 = vld [vmem:[%s2940] sm:$0xf]
    %v2943 = vsel %vm324, %v2939, 0
    %v2946 = vsel %vm772, %v2941, 0
    %2948 = vmatprep.subr.bf16.mxu0 0
    %2949 = vmatpush1.bf16.msra.mxu0 %v2946
    %2950 = vmatprep.subr.bf16.mxu0 0
    %2951 = vmatpush1.bf16.msra.mxu0 0
    %2952 = vmatprep.subr.bf16.mxu0 0
    %2953 = vmatpush1.bf16.msra.mxu0 0
    %2954 = vmatprep.subr.bf16.mxu0 0
    %2955 = vmatpush1.bf16.msra.mxu0 0
    %2956 = vmatprep.subr.bf16.mxu0 0
    %2957 = vmatpush1.bf16.msra.mxu0 0
    %2958 = vmatprep.subr.bf16.mxu0 0
    %2959 = vmatpush1.bf16.msra.mxu0 0
    %2960 = vmatprep.subr.bf16.mxu0 0
    %2961 = vmatpush1.bf16.msra.mxu0 0
    %2962 = vmatprep.subr.bf16.mxu0 0
    %2963 = vmatpush1.bf16.msra.mxu0 0
    %2964 = vmatprep.subr.bf16.mxu0 0
    %2965 = vmatpush1.bf16.msra.mxu0 0
    %2966 = vmatprep.subr.bf16.mxu0 0
    %2967 = vmatpush1.bf16.msra.mxu0 0
    %2968 = vmatprep.subr.bf16.mxu0 0
    %2969 = vmatpush1.bf16.msra.mxu0 0
    %2970 = vmatprep.subr.bf16.mxu0 0
    %2971 = vmatpush1.bf16.msra.mxu0 0
    %2972 = vmatprep.subr.bf16.mxu0 0
    %2973 = vmatpush1.bf16.msra.mxu0 0
    %2974 = vmatprep.subr.bf16.mxu0 0
    %2975 = vmatpush1.bf16.msra.mxu0 0
    %2976 = vmatprep.subr.bf16.mxu0 0
    %2977 = vmatpush1.bf16.msra.mxu0 0
    %2978 = vmatprep.subr.bf16.mxu0 0
    %2979 = vmatpush1.bf16.msra.mxu0 0
    %2980 = vmatprep.mubr.bf16.mxu0 0
    %2981 = vmatmul.mubr.bf16.gmra.mrb[0].mxu0 %v2943
    %v2982 = vpop.f32.mrb[0].mxu0
    %v2983 = vadd.f32 0.0, %v2982
    %v2984 = vpop.f32.mrb[0].mxu0
    %v2985 = vpop.f32.mrb[0].mxu0
    %v2986 = vadd.f32 0.0, %v2985
    %v2987 = vpop.f32.mrb[0].mxu0
    %2988 = vdwg.mxu0
    %v2989 = vadd.f32 %v2614, %v2983
    %v2990 = vadd.f32 %v2617, %v2986
    %s2991 = scalar_lea.vmem %s4, 112
    %v2992 = vld [vmem:[%s2991] sm:$0xf]
    %v2993 = vld [vmem:[%s2991 + $0x4] sm:$0xf]
    %v2994 = vld [vmem:[%s2991 + $0x8] sm:$0xf]
    %v2995 = vld [vmem:[%s2991 + $0xc] sm:$0xf]
    %s2996 = scalar_lea.vmem %s7, 7
    %v2997 = vld [vmem:[%s2996] sm:$0x1]
    %v2999 = vlaneseq
    %v3000 = vshrl.u32 %v2999, 7
    %v3001 = vsub.s32 0, %v3000
    %v3002 = vrot.slane %v2997, %v3001
    %v3008 = vunpack.c.l.b16 %v2992
    %v3009 = vunpack.c.l.b16 %v2993
    %v3010 = vunpack.c.l.b16 %v2994
    %v3011 = vunpack.c.l.b16 %v2995
    %v3012 = vpack.c.b16 %v3009, %v3008
    %v3013 = vpack.c.b16 %v3011, %v3010
    %3016 = vmatprep.subr.bf16.mxu0 0
    %3017 = vmatpush1.bf16.msra.mxu0 %v3012
    %3018 = vmatprep.subr.bf16.mxu0 0
    %3019 = vmatpush1.bf16.msra.mxu0 %v3013
    %3020 = vmatprep.subr.bf16.mxu0 0
    %3021 = vmatpush1.bf16.msra.mxu0 0
    %3022 = vmatprep.subr.bf16.mxu0 0
    %3023 = vmatpush1.bf16.msra.mxu0 0
    %3024 = vmatprep.subr.bf16.mxu0 0
    %3025 = vmatpush1.bf16.msra.mxu0 0
    %3026 = vmatprep.subr.bf16.mxu0 0
    %3027 = vmatpush1.bf16.msra.mxu0 0
    %3028 = vmatprep.subr.bf16.mxu0 0
    %3029 = vmatpush1.bf16.msra.mxu0 0
    %3030 = vmatprep.subr.bf16.mxu0 0
    %3031 = vmatpush1.bf16.msra.mxu0 0
    %3032 = vmatprep.subr.bf16.mxu0 0
    %3033 = vmatpush1.bf16.msra.mxu0 0
    %3034 = vmatprep.subr.bf16.mxu0 0
    %3035 = vmatpush1.bf16.msra.mxu0 0
    %3036 = vmatprep.subr.bf16.mxu0 0
    %3037 = vmatpush1.bf16.msra.mxu0 0
    %3038 = vmatprep.subr.bf16.mxu0 0
    %3039 = vmatpush1.bf16.msra.mxu0 0
    %3040 = vmatprep.subr.bf16.mxu0 0
    %3041 = vmatpush1.bf16.msra.mxu0 0
    %3042 = vmatprep.subr.bf16.mxu0 0
    %3043 = vmatpush1.bf16.msra.mxu0 0
    %3044 = vmatprep.subr.bf16.mxu0 0
    %3045 = vmatpush1.bf16.msra.mxu0 0
    %3046 = vmatprep.subr.bf16.mxu0 0
    %3047 = vmatpush1.bf16.msra.mxu0 0
    %3048 = vmatprep.mubr.bf16.mxu0 0
    %3049 = vmatmul.mubr.bf16.gmra.mrb[0].mxu0 %v1905
    %v3050 = vpop.f32.mrb[0].mxu0
    %v3051 = vadd.f32 %v3002, %v3050
    %v3052 = vpop.f32.mrb[0].mxu0
    %v3053 = vpop.f32.mrb[0].mxu0
    %v3054 = vadd.f32 %v3002, %v3053
    %v3055 = vpop.f32.mrb[0].mxu0
    %3056 = vdwg.mxu0
    %s3057 = scalar_lea.vmem %s5, 112
    %v3058 = vld [vmem:[%s3057] sm:$0xf]
    %v3059 = vld [vmem:[%s3057 + $0x4] sm:$0xf]
    %v3060 = vld [vmem:[%s3057 + $0x8] sm:$0xf]
    %v3061 = vld [vmem:[%s3057 + $0xc] sm:$0xf]
    %s3062 = scalar_lea.vmem %s8, 7
    %v3063 = vld [vmem:[%s3062] sm:$0x1]
    %v3065 = vlaneseq
    %v3066 = vshrl.u32 %v3065, 7
    %v3067 = vsub.s32 0, %v3066
    %v3068 = vrot.slane %v3063, %v3067
    %v3074 = vunpack.c.l.b16 %v3058
    %v3075 = vunpack.c.l.b16 %v3059
    %v3076 = vunpack.c.l.b16 %v3060
    %v3077 = vunpack.c.l.b16 %v3061
    %v3078 = vpack.c.b16 %v3075, %v3074
    %v3079 = vpack.c.b16 %v3077, %v3076
    %3082 = vmatprep.subr.bf16.mxu0 0
    %3083 = vmatpush1.bf16.msra.mxu0 %v3078
    %3084 = vmatprep.subr.bf16.mxu0 0
    %3085 = vmatpush1.bf16.msra.mxu0 %v3079
    %3086 = vmatprep.subr.bf16.mxu0 0
    %3087 = vmatpush1.bf16.msra.mxu0 0
    %3088 = vmatprep.subr.bf16.mxu0 0
    %3089 = vmatpush1.bf16.msra.mxu0 0
    %3090 = vmatprep.subr.bf16.mxu0 0
    %3091 = vmatpush1.bf16.msra.mxu0 0
    %3092 = vmatprep.subr.bf16.mxu0 0
    %3093 = vmatpush1.bf16.msra.mxu0 0
    %3094 = vmatprep.subr.bf16.mxu0 0
    %3095 = vmatpush1.bf16.msra.mxu0 0
    %3096 = vmatprep.subr.bf16.mxu0 0
    %3097 = vmatpush1.bf16.msra.mxu0 0
    %3098 = vmatprep.subr.bf16.mxu0 0
    %3099 = vmatpush1.bf16.msra.mxu0 0
    %3100 = vmatprep.subr.bf16.mxu0 0
    %3101 = vmatpush1.bf16.msra.mxu0 0
    %3102 = vmatprep.subr.bf16.mxu0 0
    %3103 = vmatpush1.bf16.msra.mxu0 0
    %3104 = vmatprep.subr.bf16.mxu0 0
    %3105 = vmatpush1.bf16.msra.mxu0 0
    %3106 = vmatprep.subr.bf16.mxu0 0
    %3107 = vmatpush1.bf16.msra.mxu0 0
    %3108 = vmatprep.subr.bf16.mxu0 0
    %3109 = vmatpush1.bf16.msra.mxu0 0
    %3110 = vmatprep.subr.bf16.mxu0 0
    %3111 = vmatpush1.bf16.msra.mxu0 0
    %3112 = vmatprep.subr.bf16.mxu0 0
    %3113 = vmatpush1.bf16.msra.mxu0 0
    %3114 = vmatprep.mubr.bf16.mxu0 0
    %3115 = vmatmul.mubr.bf16.gmra.mrb[0].mxu0 %v1905
    %v3116 = vpop.f32.mrb[0].mxu0
    %v3117 = vadd.f32 %v3068, %v3116
    %v3118 = vpop.f32.mrb[0].mxu0
    %v3119 = vpop.f32.mrb[0].mxu0
    %v3120 = vadd.f32 %v3068, %v3119
    %v3121 = vpop.f32.mrb[0].mxu0
    %3122 = vdwg.mxu0
    %s3123 = scalar_lea.vmem %s6, 112
    %v3124 = vld [vmem:[%s3123] sm:$0xf]
    %v3125 = vld [vmem:[%s3123 + $0x4] sm:$0xf]
    %v3126 = vld [vmem:[%s3123 + $0x8] sm:$0xf]
    %v3127 = vld [vmem:[%s3123 + $0xc] sm:$0xf]
    %s3128 = scalar_lea.vmem %s9, 7
    %v3129 = vld [vmem:[%s3128] sm:$0x1]
    %v3131 = vlaneseq
    %v3132 = vshrl.u32 %v3131, 7
    %v3133 = vsub.s32 0, %v3132
    %v3134 = vrot.slane %v3129, %v3133
    %v3140 = vunpack.c.l.b16 %v3124
    %v3141 = vunpack.c.l.b16 %v3125
    %v3142 = vunpack.c.l.b16 %v3126
    %v3143 = vunpack.c.l.b16 %v3127
    %v3144 = vpack.c.b16 %v3141, %v3140
    %v3145 = vpack.c.b16 %v3143, %v3142
    %3148 = vmatprep.subr.bf16.mxu0 0
    %3149 = vmatpush1.bf16.msra.mxu0 %v3144
    %3150 = vmatprep.subr.bf16.mxu0 0
    %3151 = vmatpush1.bf16.msra.mxu0 %v3145
    %3152 = vmatprep.subr.bf16.mxu0 0
    %3153 = vmatpush1.bf16.msra.mxu0 0
    %3154 = vmatprep.subr.bf16.mxu0 0
    %3155 = vmatpush1.bf16.msra.mxu0 0
    %3156 = vmatprep.subr.bf16.mxu0 0
    %3157 = vmatpush1.bf16.msra.mxu0 0
    %3158 = vmatprep.subr.bf16.mxu0 0
    %3159 = vmatpush1.bf16.msra.mxu0 0
    %3160 = vmatprep.subr.bf16.mxu0 0
    %3161 = vmatpush1.bf16.msra.mxu0 0
    %3162 = vmatprep.subr.bf16.mxu0 0
    %3163 = vmatpush1.bf16.msra.mxu0 0
    %3164 = vmatprep.subr.bf16.mxu0 0
    %3165 = vmatpush1.bf16.msra.mxu0 0
    %3166 = vmatprep.subr.bf16.mxu0 0
    %3167 = vmatpush1.bf16.msra.mxu0 0
    %3168 = vmatprep.subr.bf16.mxu0 0
    %3169 = vmatpush1.bf16.msra.mxu0 0
    %3170 = vmatprep.subr.bf16.mxu0 0
    %3171 = vmatpush1.bf16.msra.mxu0 0
    %3172 = vmatprep.subr.bf16.mxu0 0
    %3173 = vmatpush1.bf16.msra.mxu0 0
    %3174 = vmatprep.subr.bf16.mxu0 0
    %3175 = vmatpush1.bf16.msra.mxu0 0
    %3176 = vmatprep.subr.bf16.mxu0 0
    %3177 = vmatpush1.bf16.msra.mxu0 0
    %3178 = vmatprep.subr.bf16.mxu0 0
    %3179 = vmatpush1.bf16.msra.mxu0 0
    %3180 = vmatprep.mubr.bf16.mxu0 0
    %3181 = vmatmul.mubr.bf16.gmra.mrb[0].mxu0 %v1905
    %v3182 = vpop.f32.mrb[0].mxu0
    %v3183 = vadd.f32 %v3134, %v3182
    %v3184 = vpop.f32.mrb[0].mxu0
    %v3185 = vpop.f32.mrb[0].mxu0
    %v3186 = vadd.f32 %v3134, %v3185
    %v3187 = vpop.f32.mrb[0].mxu0
    %3188 = vdwg.mxu0
    %v3189 = vpack.c.bf16 %v3054, %v3051
    %v3190 = vpack.c.bf16 %v3120, %v3117
    %v3192 = vsel %vm324, %v3189, 0
    %v3195 = vsel %vm324, %v3190, 0
    %3197 = vmatprep.subr.bf16.mxu0 0
    %3198 = vmatpush1.bf16.xpose.msra.mxu0 %v3195
    %3199 = vmatprep.subr.bf16.mxu0 0
    %3200 = vmatpush1.bf16.xpose.msra.mxu0 0
    %3201 = vmatprep.subr.bf16.mxu0 0
    %3202 = vmatpush1.bf16.xpose.msra.mxu0 0
    %3203 = vmatprep.subr.bf16.mxu0 0
    %3204 = vmatpush1.bf16.xpose.msra.mxu0 0
    %3205 = vmatprep.subr.bf16.mxu0 0
    %3206 = vmatpush1.bf16.xpose.msra.mxu0 0
    %3207 = vmatprep.subr.bf16.mxu0 0
    %3208 = vmatpush1.bf16.xpose.msra.mxu0 0
    %3209 = vmatprep.subr.bf16.mxu0 0
    %3210 = vmatpush1.bf16.xpose.msra.mxu0 0
    %3211 = vmatprep.subr.bf16.mxu0 0
    %3212 = vmatpush1.bf16.xpose.msra.mxu0 0
    %3213 = vmatprep.subr.bf16.mxu0 0
    %3214 = vmatpush1.bf16.xpose.msra.mxu0 0
    %3215 = vmatprep.subr.bf16.mxu0 0
    %3216 = vmatpush1.bf16.xpose.msra.mxu0 0
    %3217 = vmatprep.subr.bf16.mxu0 0
    %3218 = vmatpush1.bf16.xpose.msra.mxu0 0
    %3219 = vmatprep.subr.bf16.mxu0 0
    %3220 = vmatpush1.bf16.xpose.msra.mxu0 0
    %3221 = vmatprep.subr.bf16.mxu0 0
    %3222 = vmatpush1.bf16.xpose.msra.mxu0 0
    %3223 = vmatprep.subr.bf16.mxu0 0
    %3224 = vmatpush1.bf16.xpose.msra.mxu0 0
    %3225 = vmatprep.subr.bf16.mxu0 0
    %3226 = vmatpush1.bf16.xpose.msra.mxu0 0
    %3227 = vmatprep.subr.bf16.mxu0 0
    %3228 = vmatpush1.bf16.xpose.msra.mxu0 0
    %3229 = vmatprep.mubr.bf16.mxu0 0
    %3230 = vmatmul.mubr.bf16.gmra.mrb[0].mxu0 %v3192
    %v3231 = vpop.f32.mrb[0].mxu0
    %v3232 = vadd.f32 0.0, %v3231
    %v3233 = vpop.f32.mrb[0].mxu0
    %v3234 = vpop.f32.mrb[0].mxu0
    %v3235 = vadd.f32 0.0, %v3234
    %v3236 = vpop.f32.mrb[0].mxu0
    %3237 = vdwg.mxu0
    %v3238 = vmul.f32 %v3232, 0.35355338
    %v3239 = vmul.f32 %v3235, 0.35355338
    %v3240 = vadd.f32 %v3238, %v76
    %v3241 = vadd.f32 %v3239, %v77
    %v3242 = vsel %vm376, %v3240, -inf
    %3243 = vmax.xlane.f32.xlu0 %v3242
    %v3244 = vpop.xlane.xlu0 %3243
    %v3245 = vsel %vm376, %v3241, -inf
    %3246 = vmax.xlane.f32.xlu0 %v3245
    %v3247 = vpop.xlane.xlu0 %3246
    %v3248 = vsub.f32 %v3240, %v3244
    %v3249 = vsub.f32 %v3241, %v3247
    %v3250 = vmul.f32 %v3248, 1.442695
    %v3251 = vpow.pop %v3250
    %v3252 = vmul.f32 %v3249, 1.442695
    %v3253 = vpow.pop %v3252
    %v3254 = vsel %vm376, %v3251, 0.0
    %3255 = vadd.xlane.f32.xlu0 %v3254
    %v3256 = vpop.xlane.xlu0 %3255
    %v3257 = vsel %vm376, %v3253, 0.0
    %3258 = vadd.xlane.f32.xlu0 %v3257
    %v3259 = vpop.xlane.xlu0 %3258
    %v3260 = vrcp.pop %v3256
    %v3261 = vmul.f32 %v3251, %v3260
    %v3262 = vrcp.pop %v3259
    %v3263 = vmul.f32 %v3253, %v3262
    %v3264 = vpack.c.bf16 %v3263, %v3261
    %v3265 = vpack.c.bf16 %v3186, %v3183
    %v3267 = vsel %vm376, %v3264, 0
    %3269 = vmatprep.subr.bf16.mxu0 0
    %3270 = vmatpush1.bf16.msra.mxu0 %v3265
    %3271 = vmatprep.subr.bf16.mxu0 0
    %3272 = vmatpush1.bf16.msra.mxu0 0
    %3273 = vmatprep.subr.bf16.mxu0 0
    %3274 = vmatpush1.bf16.msra.mxu0 0
    %3275 = vmatprep.subr.bf16.mxu0 0
    %3276 = vmatpush1.bf16.msra.mxu0 0
    %3277 = vmatprep.subr.bf16.mxu0 0
    %3278 = vmatpush1.bf16.msra.mxu0 0
    %3279 = vmatprep.subr.bf16.mxu0 0
    %3280 = vmatpush1.bf16.msra.mxu0 0
    %3281 = vmatprep.subr.bf16.mxu0 0
    %3282 = vmatpush1.bf16.msra.mxu0 0
    %3283 = vmatprep.subr.bf16.mxu0 0
    %3284 = vmatpush1.bf16.msra.mxu0 0
    %3285 = vmatprep.subr.bf16.mxu0 0
    %3286 = vmatpush1.bf16.msra.mxu0 0
    %3287 = vmatprep.subr.bf16.mxu0 0
    %3288 = vmatpush1.bf16.msra.mxu0 0
    %3289 = vmatprep.subr.bf16.mxu0 0
    %3290 = vmatpush1.bf16.msra.mxu0 0
    %3291 = vmatprep.subr.bf16.mxu0 0
    %3292 = vmatpush1.bf16.msra.mxu0 0
    %3293 = vmatprep.subr.bf16.mxu0 0
    %3294 = vmatpush1.bf16.msra.mxu0 0
    %3295 = vmatprep.subr.bf16.mxu0 0
    %3296 = vmatpush1.bf16.msra.mxu0 0
    %3297 = vmatprep.subr.bf16.mxu0 0
    %3298 = vmatpush1.bf16.msra.mxu0 0
    %3299 = vmatprep.subr.bf16.mxu0 0
    %3300 = vmatpush1.bf16.msra.mxu0 0
    %3301 = vmatprep.mubr.bf16.mxu0 0
    %3302 = vmatmul.mubr.bf16.gmra.mrb[0].mxu0 %v3267
    %v3303 = vpop.f32.mrb[0].mxu0
    %v3304 = vadd.f32 0.0, %v3303
    %v3305 = vpop.f32.mrb[0].mxu0
    %v3306 = vpop.f32.mrb[0].mxu0
    %v3307 = vadd.f32 0.0, %v3306
    %v3308 = vpop.f32.mrb[0].mxu0
    %3309 = vdwg.mxu0
    %v3310 = vpack.c.bf16 %v3307, %v3304
    %s3311 = scalar_lea.vmem %s10, 28
    %v3312 = vld [vmem:[%s3311] sm:$0xf]
    %v3314 = vsel %vm324, %v3310, 0
    %v3317 = vsel %vm772, %v3312, 0
    %3319 = vmatprep.subr.bf16.mxu0 0
    %3320 = vmatpush1.bf16.msra.mxu0 %v3317
    %3321 = vmatprep.subr.bf16.mxu0 0
    %3322 = vmatpush1.bf16.msra.mxu0 0
    %3323 = vmatprep.subr.bf16.mxu0 0
    %3324 = vmatpush1.bf16.msra.mxu0 0
    %3325 = vmatprep.subr.bf16.mxu0 0
    %3326 = vmatpush1.bf16.msra.mxu0 0
    %3327 = vmatprep.subr.bf16.mxu0 0
    %3328 = vmatpush1.bf16.msra.mxu0 0
    %3329 = vmatprep.subr.bf16.mxu0 0
    %3330 = vmatpush1.bf16.msra.mxu0 0
    %3331 = vmatprep.subr.bf16.mxu0 0
    %3332 = vmatpush1.bf16.msra.mxu0 0
    %3333 = vmatprep.subr.bf16.mxu0 0
    %3334 = vmatpush1.bf16.msra.mxu0 0
    %3335 = vmatprep.subr.bf16.mxu0 0
    %3336 = vmatpush1.bf16.msra.mxu0 0
    %3337 = vmatprep.subr.bf16.mxu0 0
    %3338 = vmatpush1.bf16.msra.mxu0 0
    %3339 = vmatprep.subr.bf16.mxu0 0
    %3340 = vmatpush1.bf16.msra.mxu0 0
    %3341 = vmatprep.subr.bf16.mxu0 0
    %3342 = vmatpush1.bf16.msra.mxu0 0
    %3343 = vmatprep.subr.bf16.mxu0 0
    %3344 = vmatpush1.bf16.msra.mxu0 0
    %3345 = vmatprep.subr.bf16.mxu0 0
    %3346 = vmatpush1.bf16.msra.mxu0 0
    %3347 = vmatprep.subr.bf16.mxu0 0
    %3348 = vmatpush1.bf16.msra.mxu0 0
    %3349 = vmatprep.subr.bf16.mxu0 0
    %3350 = vmatpush1.bf16.msra.mxu0 0
    %3351 = vmatprep.mubr.bf16.mxu0 0
    %3352 = vmatmul.mubr.bf16.gmra.mrb[0].mxu0 %v3314
    %v3353 = vpop.f32.mrb[0].mxu0
    %v3354 = vadd.f32 0.0, %v3353
    %v3355 = vpop.f32.mrb[0].mxu0
    %v3356 = vpop.f32.mrb[0].mxu0
    %v3357 = vadd.f32 0.0, %v3356
    %v3358 = vpop.f32.mrb[0].mxu0
    %3359 = vdwg.mxu0
    %v3360 = vadd.f32 %v2989, %v3354
    %v3361 = vadd.f32 %v2990, %v3357
    %s3362 = scalar_lea.vmem %s11, 1
    %v3363 = vld [vmem:[%s3362] sm:$0x1]
    %v3365 = vlaneseq
    %v3366 = vshrl.u32 %v3365, 7
    %v3367 = vsub.s32 0, %v3366
    %v3368 = vrot.slane %v3363, %v3367
    %v3370 = vadd.f32 %v3360, %v3368
    %v3371 = vadd.f32 %v3361, %v3368
    %v3372 = vadd.f32 %v3370, %v1876
    %v3373 = vadd.f32 %v3371, %v1877
    %s3374 = scalar_lea.vmem %s12, 1
    %v3375 = vld [vmem:[%s3374] sm:$0x1]
    %s3376 = scalar_lea.vmem %s13, 1
    %v3377 = vld [vmem:[%s3376] sm:$0x1]
    %v3378 = vsel %vm82, %v3372, 0.0
    %3379 = vadd.xlane.f32.xlu0 %v3378
    %v3380 = vpop.xlane.xlu0 %3379
    %v3381 = vsel %vm82, %v3373, 0.0
    %3382 = vadd.xlane.f32.xlu0 %v3381
    %v3383 = vpop.xlane.xlu0 %3382
    %v3384 = vmul.f32 %v3380, %v89
    %v3385 = vmul.f32 %v3383, %v89
    %v3386 = vsub.f32 %v3372, %v3384
    %v3387 = vsub.f32 %v3373, %v3385
    %v3388 = vmul.f32 %v3386, %v3386
    %v3389 = vmul.f32 %v3387, %v3387
    %v3390 = vsel %vm82, %v3388, 0.0
    %3391 = vadd.xlane.f32.xlu0 %v3390
    %v3392 = vpop.xlane.xlu0 %3391
    %v3393 = vsel %vm82, %v3389, 0.0
    %3394 = vadd.xlane.f32.xlu0 %v3393
    %v3395 = vpop.xlane.xlu0 %3394
    %v3396 = vmul.f32 %v3392, %v89
    %v3397 = vmul.f32 %v3395, %v89
    %v3398 = vadd.f32 %v3396, 1e-12
    %v3399 = vadd.f32 %v3397, 1e-12
    %v3400 = vrsqrt.pop %v3398
    %v3401 = vrsqrt.pop %v3399
    %v3402 = vmul.f32 %v3386, %v3400
    %v3403 = vmul.f32 %v3387, %v3401
    %v3405 = vlaneseq
    %v3406 = vshrl.u32 %v3405, 7
    %v3407 = vsub.s32 0, %v3406
    %v3408 = vrot.slane %v3375, %v3407
    %v3410 = vmul.f32 %v3402, %v3408
    %v3411 = vmul.f32 %v3403, %v3408
    %v3413 = vlaneseq
    %v3414 = vshrl.u32 %v3413, 7
    %v3415 = vsub.s32 0, %v3414
    %v3416 = vrot.slane %v3377, %v3415
    %v3418 = vadd.f32 %v3410, %v3416
    %v3419 = vadd.f32 %v3411, %v3416
    %v3420 = vpack.c.bf16 %v3419, %v3418
    %s3421 = scalar_lea.vmem %s14, 16
    %v3422 = vld [vmem:[%s3421] sm:$0xf]
    %v3423 = vld [vmem:[%s3421 + $0x4] sm:$0xf]
    %v3424 = vld [vmem:[%s3421 + $0x8] sm:$0xf]
    %v3425 = vld [vmem:[%s3421 + $0xc] sm:$0xf]
    %s3426 = scalar_lea.vmem %s15, 1
    %v3427 = vld [vmem:[%s3426] sm:$0x1]
    %v3429 = vlaneseq
    %v3430 = vshrl.u32 %v3429, 7
    %v3431 = vsub.s32 0, %v3430
    %v3432 = vrot.slane %v3427, %v3431
    %v3438 = vunpack.c.l.b16 %v3422
    %v3439 = vunpack.c.l.b16 %v3423
    %v3440 = vunpack.c.l.b16 %v3424
    %v3441 = vunpack.c.l.b16 %v3425
    %v3442 = vpack.c.b16 %v3439, %v3438
    %v3443 = vpack.c.b16 %v3441, %v3440
    %v3447 = vsel %vm82, %v3420, 0
    %3449 = vmatprep.subr.bf16.mxu0 0
    %3450 = vmatpush1.bf16.msra.mxu0 %v3442
    %3451 = vmatprep.subr.bf16.mxu0 0
    %3452 = vmatpush1.bf16.msra.mxu0 %v3443
    %3453 = vmatprep.subr.bf16.mxu0 0
    %3454 = vmatpush1.bf16.msra.mxu0 0
    %3455 = vmatprep.subr.bf16.mxu0 0
    %3456 = vmatpush1.bf16.msra.mxu0 0
    %3457 = vmatprep.subr.bf16.mxu0 0
    %3458 = vmatpush1.bf16.msra.mxu0 0
    %3459 = vmatprep.subr.bf16.mxu0 0
    %3460 = vmatpush1.bf16.msra.mxu0 0
    %3461 = vmatprep.subr.bf16.mxu0 0
    %3462 = vmatpush1.bf16.msra.mxu0 0
    %3463 = vmatprep.subr.bf16.mxu0 0
    %3464 = vmatpush1.bf16.msra.mxu0 0
    %3465 = vmatprep.subr.bf16.mxu0 0
    %3466 = vmatpush1.bf16.msra.mxu0 0
    %3467 = vmatprep.subr.bf16.mxu0 0
    %3468 = vmatpush1.bf16.msra.mxu0 0
    %3469 = vmatprep.subr.bf16.mxu0 0
    %3470 = vmatpush1.bf16.msra.mxu0 0
    %3471 = vmatprep.subr.bf16.mxu0 0
    %3472 = vmatpush1.bf16.msra.mxu0 0
    %3473 = vmatprep.subr.bf16.mxu0 0
    %3474 = vmatpush1.bf16.msra.mxu0 0
    %3475 = vmatprep.subr.bf16.mxu0 0
    %3476 = vmatpush1.bf16.msra.mxu0 0
    %3477 = vmatprep.subr.bf16.mxu0 0
    %3478 = vmatpush1.bf16.msra.mxu0 0
    %3479 = vmatprep.subr.bf16.mxu0 0
    %3480 = vmatpush1.bf16.msra.mxu0 0
    %3481 = vmatprep.mubr.bf16.mxu0 0
    %3482 = vmatmul.mubr.bf16.gmra.mrb[0].mxu0 %v3447
    %v3483 = vpop.f32.mrb[0].mxu0
    %v3484 = vadd.f32 %v3432, %v3483
    %v3485 = vpop.f32.mrb[0].mxu0
    %v3486 = vpop.f32.mrb[0].mxu0
    %v3487 = vadd.f32 %v3432, %v3486
    %v3488 = vpop.f32.mrb[0].mxu0
    %3489 = vdwg.mxu0
    %v3490 = vmul.f32 %v3484, %v3484
    %v3491 = vmul.f32 %v3487, %v3487
    %v3492 = vmul.f32 %v3484, %v3490
    %v3493 = vmul.f32 %v3487, %v3491
    %v3494 = vmul.f32 %v3492, 0.044715
    %v3495 = vmul.f32 %v3493, 0.044715
    %v3496 = vadd.f32 %v3484, %v3494
    %v3497 = vadd.f32 %v3487, %v3495
    %v3498 = vmul.f32 %v3496, 0.7978846
    %v3499 = vmul.f32 %v3497, 0.7978846
    %v3500 = vtanh.pop %v3498
    %v3501 = vtanh.pop %v3499
    %v3502 = vadd.f32 %v3500, 1.0
    %v3503 = vadd.f32 %v3501, 1.0
    %v3504 = vmul.f32 %v3502, 0.5
    %v3505 = vmul.f32 %v3503, 0.5
    %v3506 = vmul.f32 %v3484, %v3504
    %v3507 = vmul.f32 %v3487, %v3505
    %v3508 = vpack.c.bf16 %v3507, %v3506
    %s3509 = scalar_lea.vmem %s16, 32
    %v3510 = vld [vmem:[%s3509] sm:$0xf]
    %v3511 = vld [vmem:[%s3509 + $0x4] sm:$0xf]
    %v3512 = vld [vmem:[%s3509 + $0x8] sm:$0xf]
    %v3513 = vld [vmem:[%s3509 + $0xc] sm:$0xf]
    %v3514 = vld [vmem:[%s3509 + $0x10] sm:$0xf]
    %v3515 = vld [vmem:[%s3509 + $0x14] sm:$0xf]
    %v3516 = vld [vmem:[%s3509 + $0x18] sm:$0xf]
    %v3517 = vld [vmem:[%s3509 + $0x1c] sm:$0xf]
    %s3518 = scalar_lea.vmem %s17, 1
    %v3519 = vld [vmem:[%s3518] sm:$0x1]
    %v3521 = vlaneseq
    %v3522 = vshrl.u32 %v3521, 7
    %v3523 = vsub.s32 0, %v3522
    %v3524 = vrot.slane %v3519, %v3523
    %v3534 = vunpack.c.l.b16 %v3510
    %v3535 = vunpack.c.l.b16 %v3511
    %v3536 = vunpack.c.l.b16 %v3512
    %v3537 = vunpack.c.l.b16 %v3513
    %v3538 = vunpack.c.l.b16 %v3514
    %v3539 = vunpack.c.l.b16 %v3515
    %v3540 = vunpack.c.l.b16 %v3516
    %v3541 = vunpack.c.l.b16 %v3517
    %v3542 = vpack.c.b16 %v3535, %v3534
    %v3543 = vpack.c.b16 %v3537, %v3536
    %v3544 = vpack.c.b16 %v3539, %v3538
    %v3545 = vpack.c.b16 %v3541, %v3540
    %v3551 = vsel %vm1787, %v3508, 0
    %3553 = vmatprep.subr.bf16.mxu0 0
    %3554 = vmatpush1.bf16.msra.mxu0 %v3542
    %3555 = vmatprep.subr.bf16.mxu0 0
    %3556 = vmatpush1.bf16.msra.mxu0 %v3543
    %3557 = vmatprep.subr.bf16.mxu0 0
    %3558 = vmatpush1.bf16.msra.mxu0 %v3544
    %3559 = vmatprep.subr.bf16.mxu0 0
    %3560 = vmatpush1.bf16.msra.mxu0 %v3545
    %3561 = vmatprep.subr.bf16.mxu0 0
    %3562 = vmatpush1.bf16.msra.mxu0 0
    %3563 = vmatprep.subr.bf16.mxu0 0
    %3564 = vmatpush1.bf16.msra.mxu0 0
    %3565 = vmatprep.subr.bf16.mxu0 0
    %3566 = vmatpush1.bf16.msra.mxu0 0
    %3567 = vmatprep.subr.bf16.mxu0 0
    %3568 = vmatpush1.bf16.msra.mxu0 0
    %3569 = vmatprep.subr.bf16.mxu0 0
    %3570 = vmatpush1.bf16.msra.mxu0 0
    %3571 = vmatprep.subr.bf16.mxu0 0
    %3572 = vmatpush1.bf16.msra.mxu0 0
    %3573 = vmatprep.subr.bf16.mxu0 0
    %3574 = vmatpush1.bf16.msra.mxu0 0
    %3575 = vmatprep.subr.bf16.mxu0 0
    %3576 = vmatpush1.bf16.msra.mxu0 0
    %3577 = vmatprep.subr.bf16.mxu0 0
    %3578 = vmatpush1.bf16.msra.mxu0 0
    %3579 = vmatprep.subr.bf16.mxu0 0
    %3580 = vmatpush1.bf16.msra.mxu0 0
    %3581 = vmatprep.subr.bf16.mxu0 0
    %3582 = vmatpush1.bf16.msra.mxu0 0
    %3583 = vmatprep.subr.bf16.mxu0 0
    %3584 = vmatpush1.bf16.msra.mxu0 0
    %3585 = vmatprep.mubr.bf16.mxu0 0
    %3586 = vmatmul.mubr.bf16.gmra.mrb[0].mxu0 %v3551
    %v3587 = vpop.f32.mrb[0].mxu0
    %v3588 = vadd.f32 %v3524, %v3587
    %v3589 = vpop.f32.mrb[0].mxu0
    %v3590 = vpop.f32.mrb[0].mxu0
    %v3591 = vadd.f32 %v3524, %v3590
    %v3592 = vpop.f32.mrb[0].mxu0
    %3593 = vdwg.mxu0
    %v3594 = vadd.f32 %v3588, %v3418
    %v3595 = vadd.f32 %v3591, %v3419
    %s3596 = scalar_lea.vmem %s18, 1
    %v3597 = vld [vmem:[%s3596] sm:$0x1]
    %s3598 = scalar_lea.vmem %s19, 1
    %v3599 = vld [vmem:[%s3598] sm:$0x1]
    %v3600 = vsel %vm82, %v3594, 0.0
    %3601 = vadd.xlane.f32.xlu0 %v3600
    %v3602 = vpop.xlane.xlu0 %3601
    %v3603 = vsel %vm82, %v3595, 0.0
    %3604 = vadd.xlane.f32.xlu0 %v3603
    %v3605 = vpop.xlane.xlu0 %3604
    %v3606 = vmul.f32 %v3602, %v89
    %v3607 = vmul.f32 %v3605, %v89
    %v3608 = vsub.f32 %v3594, %v3606
    %v3609 = vsub.f32 %v3595, %v3607
    %v3610 = vmul.f32 %v3608, %v3608
    %v3611 = vmul.f32 %v3609, %v3609
    %v3612 = vsel %vm82, %v3610, 0.0
    %3613 = vadd.xlane.f32.xlu0 %v3612
    %v3614 = vpop.xlane.xlu0 %3613
    %v3615 = vsel %vm82, %v3611, 0.0
    %3616 = vadd.xlane.f32.xlu0 %v3615
    %v3617 = vpop.xlane.xlu0 %3616
    %v3618 = vmul.f32 %v3614, %v89
    %v3619 = vmul.f32 %v3617, %v89
    %v3620 = vadd.f32 %v3618, 1e-12
    %v3621 = vadd.f32 %v3619, 1e-12
    %v3622 = vrsqrt.pop %v3620
    %v3623 = vrsqrt.pop %v3621
    %v3624 = vmul.f32 %v3608, %v3622
    %v3625 = vmul.f32 %v3609, %v3623
    %v3627 = vlaneseq
    %v3628 = vshrl.u32 %v3627, 7
    %v3629 = vsub.s32 0, %v3628
    %v3630 = vrot.slane %v3597, %v3629
    %v3632 = vmul.f32 %v3624, %v3630
    %v3633 = vmul.f32 %v3625, %v3630
    %v3635 = vlaneseq
    %v3636 = vshrl.u32 %v3635, 7
    %v3637 = vsub.s32 0, %v3636
    %v3638 = vrot.slane %v3599, %v3637
    %v3640 = vadd.f32 %v3632, %v3638
    %v3641 = vadd.f32 %v3633, %v3638
    %3642 = vst.msk [vmem:[#allocation2] sm:$0xff] %vm82, %v3640
    %3643 = vst.msk [vmem:[#allocation2 + $0x8] sm:$0xff] %vm82, %v3641
    %v3645 = vrot.slane %v3641, 7
    %vm3647 = vcmask 1040384
    %v3648 = vsel %vm3647, %v3640, %v3645
    %v3649 = vpack.c.bf16 %v3648, %v3648
    %v3650 = vld [vmem:[%s20] sm:$0xf]
    %v3651 = vld [vmem:[%s20 + $0x4] sm:$0xf]
    %v3652 = vld [vmem:[%s20 + $0x8] sm:$0xf]
    %v3653 = vld [vmem:[%s20 + $0xc] sm:$0xf]
    %v3654 = vld [vmem:[%s21] sm:$0x1]
    %v3656 = vlaneseq
    %v3657 = vshrl.u32 %v3656, 7
    %v3658 = vsub.s32 0, %v3657
    %v3659 = vrot.slane %v3654, %v3658
    %v3665 = vunpack.c.l.b16 %v3650
    %v3666 = vunpack.c.l.b16 %v3651
    %v3667 = vunpack.c.l.b16 %v3652
    %v3668 = vunpack.c.l.b16 %v3653
    %v3669 = vpack.c.b16 %v3666, %v3665
    %v3670 = vpack.c.b16 %v3668, %v3667
    %v3674 = vsel %vm82, %v3649, 0
    %3676 = vmatprep.subr.bf16.mxu0 0
    %3677 = vmatpush1.bf16.msra.mxu0 %v3669
    %3678 = vmatprep.subr.bf16.mxu0 0
    %3679 = vmatpush1.bf16.msra.mxu0 %v3670
    %3680 = vmatprep.subr.bf16.mxu0 0
    %3681 = vmatpush1.bf16.msra.mxu0 0
    %3682 = vmatprep.subr.bf16.mxu0 0
    %3683 = vmatpush1.bf16.msra.mxu0 0
    %3684 = vmatprep.subr.bf16.mxu0 0
    %3685 = vmatpush1.bf16.msra.mxu0 0
    %3686 = vmatprep.subr.bf16.mxu0 0
    %3687 = vmatpush1.bf16.msra.mxu0 0
    %3688 = vmatprep.subr.bf16.mxu0 0
    %3689 = vmatpush1.bf16.msra.mxu0 0
    %3690 = vmatprep.subr.bf16.mxu0 0
    %3691 = vmatpush1.bf16.msra.mxu0 0
    %3692 = vmatprep.subr.bf16.mxu0 0
    %3693 = vmatpush1.bf16.msra.mxu0 0
    %3694 = vmatprep.subr.bf16.mxu0 0
    %3695 = vmatpush1.bf16.msra.mxu0 0
    %3696 = vmatprep.subr.bf16.mxu0 0
    %3697 = vmatpush1.bf16.msra.mxu0 0
    %3698 = vmatprep.subr.bf16.mxu0 0
    %3699 = vmatpush1.bf16.msra.mxu0 0
    %3700 = vmatprep.subr.bf16.mxu0 0
    %3701 = vmatpush1.bf16.msra.mxu0 0
    %3702 = vmatprep.subr.bf16.mxu0 0
    %3703 = vmatpush1.bf16.msra.mxu0 0
    %3704 = vmatprep.subr.bf16.mxu0 0
    %3705 = vmatpush1.bf16.msra.mxu0 0
    %3706 = vmatprep.subr.bf16.mxu0 0
    %3707 = vmatpush1.bf16.msra.mxu0 0
    %3708 = vmatprep.mubr.bf16.mxu0 0
    %3709 = vmatmul.mubr.bf16.gmra.mrb[0].mxu0 %v3674
    %v3710 = vpop.f32.mrb[0].mxu0
    %v3711 = vadd.f32 %v3659, %v3710
    %v3712 = vpop.f32.mrb[0].mxu0
    %v3713 = vpop.f32.mrb[0].mxu0
    %v3714 = vpop.f32.mrb[0].mxu0
    %3715 = vdwg.mxu0
    %3716 = vst [vmem:[#allocation4] sm:$0x3] %v3711
    // Predicated region
    $region90: #{newsnet_forward.1} parent=1 // pred_check
      _
    $region91: #{newsnet_forward.1} parent=1 // pred_check_branch
      %3718 = sbr.rel (0) target = $region93
    $region92: #{newsnet_forward.1} parent=1 // pred_region
      %s3720 = ssub.s32 256, 256
      %3721 = vsyncadd [#allocation3], %s3720
      %s3722 = sshll.u32 [#allocation2], 4
      %s3723 = int_to_ptr.vmem [resolvable:$true] %s3722
      %3728 = dma.vmem_to_hbm [thread:$0]  %s3723, 256, %s22, [#allocation3], 128, 128, 8
    $region93: #{newsnet_forward.1} parent=1 // pred_fallthru
      _
    // Predicated region
    $region94: #{newsnet_forward.1} parent=1 // pred_check
      _
    $region95: #{newsnet_forward.1} parent=1 // pred_check_branch
      %3730 = sbr.rel (0) target = $region97
    $region96: #{newsnet_forward.1} parent=1 // pred_region
      %s3732 = ssub.s32 32, 32
      %3733 = vsyncadd [#allocation5], %s3732
      %s3735 = sshll.u32 [#allocation4], 4
      %s3736 = int_to_ptr.vmem [resolvable:$true] %s3735
      %3738 = dma.vmem_to_hbm [thread:$0]  %s3736, 32, %s23, [#allocation5]
    $region97: #{newsnet_forward.1} parent=1 // pred_fallthru
      _
    // Predicated region
    $region98: #{newsnet_forward.1} parent=1 // pred_check
      _
    $region99: #{newsnet_forward.1} parent=1 // pred_check_branch
      %3740 = sbr.rel (0) target = $region101
    $region100: #{newsnet_forward.1} parent=1 // pred_region
      %3741 = dma.done [#allocation3], 256
    $region101: #{newsnet_forward.1} parent=1 // pred_fallthru
      _
    // Predicated region
    $region102: #{newsnet_forward.1} parent=1 // pred_check
      _
    $region103: #{newsnet_forward.1} parent=1 // pred_check_branch
      %3743 = sbr.rel (0) target = $region105
    $region104: #{newsnet_forward.1} parent=1 // pred_region
      %3744 = dma.done [#allocation5], 32
    $region105: #{newsnet_forward.1} parent=1 // pred_fallthru
      _
    %3745 = vsyncpa [#allocation3], 1
    %3746 = vsyncpa [#allocation5], 1

</llo_original>
